<compile_context>
chip_gen: v7x
topology: tpu7x:2x2x1
jax: 0.10.0
libtpu: 0.0.40
codegen_flags: <defaults>
</compile_context>

<pallas_src>
import functools

import jax
import jax.numpy as jnp
from jax import lax
from jax.experimental import pallas as pl
from jax.experimental.pallas import tpu as pltpu


# ---------------- problem sizes (small, consistent with the module) ----------------
BATCH = 2
NUM_OSC = 8      # N  (num_oscillators)
DIM = 32         # d  (oscillator dimensionality)
NUM_STEPS = 10   # Kuramoto update steps
EPS = 1e-12      # F.normalize default eps


def _l2_normalize_fast(v):
    # torch.nn.functional.normalize(p=2, dim=-1, eps=1e-12):
    #   v / max(||v||, eps) == v * rsqrt(max(||v||^2, eps^2))   (sqrt is monotone)
    ss = jnp.sum(v * v, axis=-1, keepdims=True)
    return v * lax.rsqrt(jnp.maximum(ss, EPS * EPS))


def akorn_kernel(x_ref, w_ref, omega_ref, h_ref, rw_ref, scalars_ref,
                 out_ref, xfinal_ref, *, batch, num_osc, num_steps):
    """Single invocation — whole batch resident in VMEM.

    x_ref:       (B*N, d)  initial oscillator states (batch flattened into rows)
    w_ref:       (N, N)    coupling matrix W (block-diag built in-kernel)
    omega_ref:   (d, d)    Omega = A - A.T
    h_ref:       (N, d)    per-oscillator bias (tiled over batch in-kernel)
    rw_ref:      (1, d)    readout weight row (nn.Linear(dim, 1).weight)
    scalars_ref: (2,) SMEM [eta, readout_bias]
    out_ref:     (1, B)    per-batch mean readout (wrapper reshapes to (B, 1))
    xfinal_ref:  (B*N, d)  final oscillator states (flat)
    """
    bn = batch * num_osc
    dim = omega_ref.shape[0]

    x = x_ref[...].astype(jnp.float32)          # (BN, d)
    w = w_ref[...].astype(jnp.float32)          # (N, N)
    om = omega_ref[...].astype(jnp.float32)     # (d, d)
    h = h_ref[...].astype(jnp.float32)          # (N, d)
    rw = rw_ref[...].astype(jnp.float32)        # (1, d)
    eta = scalars_ref[0]
    rb = scalars_ref[1]

    # ---------- loop-invariant values, built once inside the kernel ----------
    # Block-diagonal coupling kron(I_B, W) from the (N, N) W (tiny, lives in vregs).
    zeros_n = jnp.zeros((num_osc, num_osc), jnp.float32)
    wb = jnp.concatenate(
        [jnp.concatenate([w if j == i else zeros_n for j in range(batch)], axis=1)
         for i in range(batch)],
        axis=0)                                              # (BN, BN)
    hb = jnp.concatenate([h] * batch, axis=0)                # (BN, d) bias tiled over batch
    eta_b = jnp.full((bn, dim), eta, jnp.float32)            # hoisted scalar splat

    # initial normalization
    x = _l2_normalize_fast(x)

    def step(_, xc):
        # One fused MXU pass:
        #   [xc | Wb] @ [[Om], [xc]]  ==  xc @ Om  +  Wb @ xc   (natural + interaction)
        lhs = jnp.concatenate([xc, wb], axis=1)              # (BN, d + BN)  lane-concat
        rhs = jnp.concatenate([om, xc], axis=0)              # (d + BN, d)   sublane-stack
        drive = jnp.dot(lhs, rhs,
                        preferred_element_type=jnp.float32,
                        precision=lax.Precision.HIGHEST) + hb
        dotp = jnp.sum(xc * drive, axis=-1, keepdims=True)   # (BN, 1)
        xn = xc + eta_b * (drive - dotp * xc)
        return _l2_normalize_fast(xn)

    # static trip count -> fully unroll for LLO scheduler visibility
    x = lax.fori_loop(0, num_steps, step, x, unroll=True)

    # final states out (single flat store; wrapper reshape to (B, N, d) is free)
    xfinal_ref[...] = x.astype(xfinal_ref.dtype)

    # ---------- readout: VPU/XLU only (no lane-width-1 MXU matmuls) ----------
    weighted = x * rw                                        # (BN, d) broadcast multiply
    col = jnp.sum(weighted, axis=-1, keepdims=True)          # (BN, 1) lane reduce
    blocks = jnp.concatenate(
        [col[i * num_osc:(i + 1) * num_osc, :] for i in range(batch)], axis=1)  # (N, B)
    out_row = jnp.sum(blocks, axis=0, keepdims=True) * (1.0 / num_osc) + rb     # (1, B)
    out_ref[...] = out_row.astype(out_ref.dtype)


@jax.jit
def akorn_forward(x, W, A, h, eta, readout_w, readout_b):
    """x: (batch, N, d). Returns (out (batch, 1), x_final (batch, N, d))."""
    batch, n, d = x.shape

    # tiny parameter algebra — fused into the same XLA program as the kernel (jitted)
    omega = (A - A.T).astype(jnp.float32)                    # (d, d)
    rw = readout_w.astype(jnp.float32).reshape(1, d)         # (1, d)
    scalars = jnp.concatenate([
        jnp.reshape(eta, (1,)).astype(jnp.float32),
        jnp.reshape(readout_b, (1,)).astype(jnp.float32),
    ])                                                       # (2,) -> SMEM

    x_flat = x.reshape(batch * n, d)                         # free reshape

    kernel = functools.partial(akorn_kernel, batch=batch, num_osc=n,
                               num_steps=NUM_STEPS)
    vmem = lambda: pl.BlockSpec(memory_space=pltpu.MemorySpace.VMEM)
    smem = pl.BlockSpec(memory_space=pltpu.MemorySpace.SMEM)

    out_row, x_final_flat = pl.pallas_call(
        kernel,
        out_shape=(
            jax.ShapeDtypeStruct((1, batch), jnp.float32),
            jax.ShapeDtypeStruct((batch * n, d), x.dtype),
        ),
        in_specs=[vmem(), vmem(), vmem(), vmem(), vmem(), smem],
        out_specs=(vmem(), vmem()),
    )(x_flat, W, omega, h, rw, scalars)

    return out_row.reshape(batch, 1), x_final_flat.reshape(batch, n, d)


def akorn_reference(x, W, A, h, eta, readout_w, readout_b):
    """Pure-JAX reference mirroring the PyTorch forward, for verification."""
    hp = lax.Precision.HIGHEST

    def normalize(v):
        nrm = jnp.sqrt(jnp.sum(v * v, axis=-1, keepdims=True))
        return v / jnp.maximum(nrm, EPS)

    x = normalize(x)
    omega = A - A.T
    for _ in range(NUM_STEPS):
        interaction = jnp.einsum('ij,bjd->bid', W, x, precision=hp)
        natural = jnp.matmul(x, omega, precision=hp)
        drive = natural + interaction + h[None]
        dot = jnp.sum(x * drive, axis=-1, keepdims=True)
        drive_tan = drive - dot * x
        x = x + eta * drive_tan
        x = normalize(x)
    out = jnp.einsum('bnd,d->bn', x, readout_w[0], precision=hp) + readout_b[0]
    out = out.mean(axis=1, keepdims=True)
    return out, x


if __name__ == "__main__":
    key = jax.random.PRNGKey(0)
    k_x, k_W, k_A, k_h, k_rw, k_rb = jax.random.split(key, 6)

    # deterministic parameter init (shapes from AKOrNBlock.__init__)
    W = jax.random.normal(k_W, (NUM_OSC, NUM_OSC), jnp.float32) * 0.1
    A = jax.random.normal(k_A, (DIM, DIM), jnp.float32) * 0.1
    h = jax.random.normal(k_h, (NUM_OSC, DIM), jnp.float32) * 0.1
    eta = jnp.float32(0.1)
    readout_w = jax.random.normal(k_rw, (1, DIM), jnp.float32) * 0.1   # nn.Linear(dim,1).weight
    readout_b = jax.random.normal(k_rb, (1,), jnp.float32) * 0.1       # nn.Linear(dim,1).bias

    # input oscillator states
    x = jax.random.normal(k_x, (BATCH, NUM_OSC, DIM), jnp.float32)

    out, x_final = akorn_forward(x, W, A, h, eta, readout_w, readout_b)
    jax.block_until_ready((out, x_final))

    # silent correctness check against the pure-JAX reference
    out_ref, x_ref = akorn_reference(x, W, A, h, eta, readout_w, readout_b)
    assert out.shape == (BATCH, 1) and x_final.shape == (BATCH, NUM_OSC, DIM)
    assert jnp.allclose(out, out_ref, atol=2e-5, rtol=2e-5)
    assert jnp.allclose(x_final, x_ref, atol=2e-5, rtol=2e-5)

    print("KERNEL_OK")
</pallas_src>

<mosaic_0001>
module attributes {stable_mosaic.version = 11 : i64} {
  func.func @akorn_kernel(%arg0: memref<16x32xf32, #tpu.memory_space<vmem>>, %arg1: memref<8x8xf32, #tpu.memory_space<vmem>>, %arg2: memref<32x32xf32, #tpu.memory_space<vmem>>, %arg3: memref<8x32xf32, #tpu.memory_space<vmem>>, %arg4: memref<1x32xf32, #tpu.memory_space<vmem>>, %arg5: memref<2xf32, #tpu.memory_space<smem>>, %arg6: memref<1x2xf32, #tpu.memory_space<vmem>>, %arg7: memref<16x32xf32, #tpu.memory_space<vmem>>) attributes {dimension_semantics = [], scalar_prefetch = 0 : i64, scratch_operands = 0 : i64, tpu.core_type = #tpu.core_type<tc>} {
    %c0 = arith.constant 0 : index
    %c0_0 = arith.constant 0 : index
    %0 = vector.load %arg0[%c0, %c0_0] : memref<16x32xf32, #tpu.memory_space<vmem>>, vector<16x32xf32>
    %c0_1 = arith.constant 0 : index
    %c0_2 = arith.constant 0 : index
    %1 = vector.load %arg1[%c0_1, %c0_2] : memref<8x8xf32, #tpu.memory_space<vmem>>, vector<8x8xf32>
    %c0_3 = arith.constant 0 : index
    %c0_4 = arith.constant 0 : index
    %2 = vector.load %arg2[%c0_3, %c0_4] : memref<32x32xf32, #tpu.memory_space<vmem>>, vector<32x32xf32>
    %c0_5 = arith.constant 0 : index
    %c0_6 = arith.constant 0 : index
    %3 = vector.load %arg3[%c0_5, %c0_6] : memref<8x32xf32, #tpu.memory_space<vmem>>, vector<8x32xf32>
    %c0_7 = arith.constant 0 : index
    %c0_8 = arith.constant 0 : index
    %4 = vector.load %arg4[%c0_7, %c0_8] : memref<1x32xf32, #tpu.memory_space<vmem>>, vector<1x32xf32>
    %c0_9 = arith.constant 0 : index
    %5 = memref.load %arg5[%c0_9] : memref<2xf32, #tpu.memory_space<smem>>
    %c1 = arith.constant 1 : index
    %6 = memref.load %arg5[%c1] : memref<2xf32, #tpu.memory_space<smem>>
    %cst = arith.constant 0.000000e+00 : f32
    %7 = vector.broadcast %cst : f32 to vector<8x8xf32>
    %8 = tpu.concatenate %1, %7 in 1 : vector<8x8xf32>, vector<8x8xf32> -> vector<8x16xf32>
    %9 = tpu.concatenate %7, %1 in 1 : vector<8x8xf32>, vector<8x8xf32> -> vector<8x16xf32>
    %10 = tpu.concatenate %8, %9 in 0 : vector<8x16xf32>, vector<8x16xf32> -> vector<16x16xf32>
    %11 = tpu.concatenate %3, %3 in 0 : vector<8x32xf32>, vector<8x32xf32> -> vector<16x32xf32>
    %12 = vector.broadcast %5 : f32 to vector<16x32xf32>
    %13 = arith.mulf %0, %0 : vector<16x32xf32>
    %cst_10 = arith.constant dense<0.000000e+00> : vector<16xf32>
    %14 = vector.multi_reduction <add>, %13, %cst_10 [1] : vector<16x32xf32> to vector<16xf32>
    %15 = vector.shape_cast %14 : vector<16xf32> to vector<16x1xf32>
    %cst_11 = arith.constant 1.000000e-24 : f32
    %16 = vector.broadcast %cst_11 : f32 to vector<16x1xf32>
    %17 = arith.maximumf %15, %16 : vector<16x1xf32>
    %18 = math.rsqrt %17 : vector<16x1xf32>
    %19 = vector.broadcast %18 : vector<16x1xf32> to vector<16x32xf32>
    %20 = arith.mulf %0, %19 : vector<16x32xf32>
    %c0_i32 = arith.constant 0 : i32
    %21 = tpu.concatenate %20, %10 in 1 : vector<16x32xf32>, vector<16x16xf32> -> vector<16x48xf32>
    %22 = tpu.concatenate %2, %20 in 0 : vector<32x32xf32>, vector<16x32xf32> -> vector<48x32xf32>
    %cst_12 = arith.constant dense<0.000000e+00> : vector<16x32xf32>
    %23 = tpu.matmul %21, %22, %cst_12 {dimension_numbers = #tpu.dot_dimension_numbers<[1], [0], [0], [1], [0, 0, 1, 1], [], []>, precision = #tpu.contract_precision<fp32>} : vector<16x48xf32>, vector<48x32xf32>, vector<16x32xf32> -> vector<16x32xf32>
    %24 = arith.addf %23, %11 : vector<16x32xf32>
    %25 = arith.mulf %20, %24 : vector<16x32xf32>
    %cst_13 = arith.constant dense<0.000000e+00> : vector<16xf32>
    %26 = vector.multi_reduction <add>, %25, %cst_13 [1] : vector<16x32xf32> to vector<16xf32>
    %27 = vector.shape_cast %26 : vector<16xf32> to vector<16x1xf32>
    %28 = vector.broadcast %27 : vector<16x1xf32> to vector<16x32xf32>
    %29 = arith.mulf %28, %20 : vector<16x32xf32>
    %30 = arith.subf %24, %29 : vector<16x32xf32>
    %31 = arith.mulf %12, %30 : vector<16x32xf32>
    %32 = arith.addf %20, %31 : vector<16x32xf32>
    %33 = arith.mulf %32, %32 : vector<16x32xf32>
    %cst_14 = arith.constant dense<0.000000e+00> : vector<16xf32>
    %34 = vector.multi_reduction <add>, %33, %cst_14 [1] : vector<16x32xf32> to vector<16xf32>
    %35 = vector.shape_cast %34 : vector<16xf32> to vector<16x1xf32>
    %cst_15 = arith.constant 1.000000e-24 : f32
    %36 = vector.broadcast %cst_15 : f32 to vector<16x1xf32>
    %37 = arith.maximumf %35, %36 : vector<16x1xf32>
    %38 = math.rsqrt %37 : vector<16x1xf32>
    %39 = vector.broadcast %38 : vector<16x1xf32> to vector<16x32xf32>
    %40 = arith.mulf %32, %39 : vector<16x32xf32>
    %c1_i32 = arith.constant 1 : i32
    %41 = tpu.concatenate %40, %10 in 1 : vector<16x32xf32>, vector<16x16xf32> -> vector<16x48xf32>
    %42 = tpu.concatenate %2, %40 in 0 : vector<32x32xf32>, vector<16x32xf32> -> vector<48x32xf32>
    %cst_16 = arith.constant dense<0.000000e+00> : vector<16x32xf32>
    %43 = tpu.matmul %41, %42, %cst_16 {dimension_numbers = #tpu.dot_dimension_numbers<[1], [0], [0], [1], [0, 0, 1, 1], [], []>, precision = #tpu.contract_precision<fp32>} : vector<16x48xf32>, vector<48x32xf32>, vector<16x32xf32> -> vector<16x32xf32>
    %44 = arith.addf %43, %11 : vector<16x32xf32>
    %45 = arith.mulf %40, %44 : vector<16x32xf32>
    %cst_17 = arith.constant dense<0.000000e+00> : vector<16xf32>
    %46 = vector.multi_reduction <add>, %45, %cst_17 [1] : vector<16x32xf32> to vector<16xf32>
    %47 = vector.shape_cast %46 : vector<16xf32> to vector<16x1xf32>
    %48 = vector.broadcast %47 : vector<16x1xf32> to vector<16x32xf32>
    %49 = arith.mulf %48, %40 : vector<16x32xf32>
    %50 = arith.subf %44, %49 : vector<16x32xf32>
    %51 = arith.mulf %12, %50 : vector<16x32xf32>
    %52 = arith.addf %40, %51 : vector<16x32xf32>
    %53 = arith.mulf %52, %52 : vector<16x32xf32>
    %cst_18 = arith.constant dense<0.000000e+00> : vector<16xf32>
    %54 = vector.multi_reduction <add>, %53, %cst_18 [1] : vector<16x32xf32> to vector<16xf32>
    %55 = vector.shape_cast %54 : vector<16xf32> to vector<16x1xf32>
    %cst_19 = arith.constant 1.000000e-24 : f32
    %56 = vector.broadcast %cst_19 : f32 to vector<16x1xf32>
    %57 = arith.maximumf %55, %56 : vector<16x1xf32>
    %58 = math.rsqrt %57 : vector<16x1xf32>
    %59 = vector.broadcast %58 : vector<16x1xf32> to vector<16x32xf32>
    %60 = arith.mulf %52, %59 : vector<16x32xf32>
    %c2_i32 = arith.constant 2 : i32
    %61 = tpu.concatenate %60, %10 in 1 : vector<16x32xf32>, vector<16x16xf32> -> vector<16x48xf32>
    %62 = tpu.concatenate %2, %60 in 0 : vector<32x32xf32>, vector<16x32xf32> -> vector<48x32xf32>
    %cst_20 = arith.constant dense<0.000000e+00> : vector<16x32xf32>
    %63 = tpu.matmul %61, %62, %cst_20 {dimension_numbers = #tpu.dot_dimension_numbers<[1], [0], [0], [1], [0, 0, 1, 1], [], []>, precision = #tpu.contract_precision<fp32>} : vector<16x48xf32>, vector<48x32xf32>, vector<16x32xf32> -> vector<16x32xf32>
    %64 = arith.addf %63, %11 : vector<16x32xf32>
    %65 = arith.mulf %60, %64 : vector<16x32xf32>
    %cst_21 = arith.constant dense<0.000000e+00> : vector<16xf32>
    %66 = vector.multi_reduction <add>, %65, %cst_21 [1] : vector<16x32xf32> to vector<16xf32>
    %67 = vector.shape_cast %66 : vector<16xf32> to vector<16x1xf32>
    %68 = vector.broadcast %67 : vector<16x1xf32> to vector<16x32xf32>
    %69 = arith.mulf %68, %60 : vector<16x32xf32>
    %70 = arith.subf %64, %69 : vector<16x32xf32>
    %71 = arith.mulf %12, %70 : vector<16x32xf32>
    %72 = arith.addf %60, %71 : vector<16x32xf32>
    %73 = arith.mulf %72, %72 : vector<16x32xf32>
    %cst_22 = arith.constant dense<0.000000e+00> : vector<16xf32>
    %74 = vector.multi_reduction <add>, %73, %cst_22 [1] : vector<16x32xf32> to vector<16xf32>
    %75 = vector.shape_cast %74 : vector<16xf32> to vector<16x1xf32>
    %cst_23 = arith.constant 1.000000e-24 : f32
    %76 = vector.broadcast %cst_23 : f32 to vector<16x1xf32>
    %77 = arith.maximumf %75, %76 : vector<16x1xf32>
    %78 = math.rsqrt %77 : vector<16x1xf32>
    %79 = vector.broadcast %78 : vector<16x1xf32> to vector<16x32xf32>
    %80 = arith.mulf %72, %79 : vector<16x32xf32>
    %c3_i32 = arith.constant 3 : i32
    %81 = tpu.concatenate %80, %10 in 1 : vector<16x32xf32>, vector<16x16xf32> -> vector<16x48xf32>
    %82 = tpu.concatenate %2, %80 in 0 : vector<32x32xf32>, vector<16x32xf32> -> vector<48x32xf32>
    %cst_24 = arith.constant dense<0.000000e+00> : vector<16x32xf32>
    %83 = tpu.matmul %81, %82, %cst_24 {dimension_numbers = #tpu.dot_dimension_numbers<[1], [0], [0], [1], [0, 0, 1, 1], [], []>, precision = #tpu.contract_precision<fp32>} : vector<16x48xf32>, vector<48x32xf32>, vector<16x32xf32> -> vector<16x32xf32>
    %84 = arith.addf %83, %11 : vector<16x32xf32>
    %85 = arith.mulf %80, %84 : vector<16x32xf32>
    %cst_25 = arith.constant dense<0.000000e+00> : vector<16xf32>
    %86 = vector.multi_reduction <add>, %85, %cst_25 [1] : vector<16x32xf32> to vector<16xf32>
    %87 = vector.shape_cast %86 : vector<16xf32> to vector<16x1xf32>
    %88 = vector.broadcast %87 : vector<16x1xf32> to vector<16x32xf32>
    %89 = arith.mulf %88, %80 : vector<16x32xf32>
    %90 = arith.subf %84, %89 : vector<16x32xf32>
    %91 = arith.mulf %12, %90 : vector<16x32xf32>
    %92 = arith.addf %80, %91 : vector<16x32xf32>
    %93 = arith.mulf %92, %92 : vector<16x32xf32>
    %cst_26 = arith.constant dense<0.000000e+00> : vector<16xf32>
    %94 = vector.multi_reduction <add>, %93, %cst_26 [1] : vector<16x32xf32> to vector<16xf32>
    %95 = vector.shape_cast %94 : vector<16xf32> to vector<16x1xf32>
    %cst_27 = arith.constant 1.000000e-24 : f32
    %96 = vector.broadcast %cst_27 : f32 to vector<16x1xf32>
    %97 = arith.maximumf %95, %96 : vector<16x1xf32>
    %98 = math.rsqrt %97 : vector<16x1xf32>
    %99 = vector.broadcast %98 : vector<16x1xf32> to vector<16x32xf32>
    %100 = arith.mulf %92, %99 : vector<16x32xf32>
    %c4_i32 = arith.constant 4 : i32
    %101 = tpu.concatenate %100, %10 in 1 : vector<16x32xf32>, vector<16x16xf32> -> vector<16x48xf32>
    %102 = tpu.concatenate %2, %100 in 0 : vector<32x32xf32>, vector<16x32xf32> -> vector<48x32xf32>
    %cst_28 = arith.constant dense<0.000000e+00> : vector<16x32xf32>
    %103 = tpu.matmul %101, %102, %cst_28 {dimension_numbers = #tpu.dot_dimension_numbers<[1], [0], [0], [1], [0, 0, 1, 1], [], []>, precision = #tpu.contract_precision<fp32>} : vector<16x48xf32>, vector<48x32xf32>, vector<16x32xf32> -> vector<16x32xf32>
    %104 = arith.addf %103, %11 : vector<16x32xf32>
    %105 = arith.mulf %100, %104 : vector<16x32xf32>
    %cst_29 = arith.constant dense<0.000000e+00> : vector<16xf32>
    %106 = vector.multi_reduction <add>, %105, %cst_29 [1] : vector<16x32xf32> to vector<16xf32>
    %107 = vector.shape_cast %106 : vector<16xf32> to vector<16x1xf32>
    %108 = vector.broadcast %107 : vector<16x1xf32> to vector<16x32xf32>
    %109 = arith.mulf %108, %100 : vector<16x32xf32>
    %110 = arith.subf %104, %109 : vector<16x32xf32>
    %111 = arith.mulf %12, %110 : vector<16x32xf32>
    %112 = arith.addf %100, %111 : vector<16x32xf32>
    %113 = arith.mulf %112, %112 : vector<16x32xf32>
    %cst_30 = arith.constant dense<0.000000e+00> : vector<16xf32>
    %114 = vector.multi_reduction <add>, %113, %cst_30 [1] : vector<16x32xf32> to vector<16xf32>
    %115 = vector.shape_cast %114 : vector<16xf32> to vector<16x1xf32>
    %cst_31 = arith.constant 1.000000e-24 : f32
    %116 = vector.broadcast %cst_31 : f32 to vector<16x1xf32>
    %117 = arith.maximumf %115, %116 : vector<16x1xf32>
    %118 = math.rsqrt %117 : vector<16x1xf32>
    %119 = vector.broadcast %118 : vector<16x1xf32> to vector<16x32xf32>
    %120 = arith.mulf %112, %119 : vector<16x32xf32>
    %c5_i32 = arith.constant 5 : i32
    %121 = tpu.concatenate %120, %10 in 1 : vector<16x32xf32>, vector<16x16xf32> -> vector<16x48xf32>
    %122 = tpu.concatenate %2, %120 in 0 : vector<32x32xf32>, vector<16x32xf32> -> vector<48x32xf32>
    %cst_32 = arith.constant dense<0.000000e+00> : vector<16x32xf32>
    %123 = tpu.matmul %121, %122, %cst_32 {dimension_numbers = #tpu.dot_dimension_numbers<[1], [0], [0], [1], [0, 0, 1, 1], [], []>, precision = #tpu.contract_precision<fp32>} : vector<16x48xf32>, vector<48x32xf32>, vector<16x32xf32> -> vector<16x32xf32>
    %124 = arith.addf %123, %11 : vector<16x32xf32>
    %125 = arith.mulf %120, %124 : vector<16x32xf32>
    %cst_33 = arith.constant dense<0.000000e+00> : vector<16xf32>
    %126 = vector.multi_reduction <add>, %125, %cst_33 [1] : vector<16x32xf32> to vector<16xf32>
    %127 = vector.shape_cast %126 : vector<16xf32> to vector<16x1xf32>
    %128 = vector.broadcast %127 : vector<16x1xf32> to vector<16x32xf32>
    %129 = arith.mulf %128, %120 : vector<16x32xf32>
    %130 = arith.subf %124, %129 : vector<16x32xf32>
    %131 = arith.mulf %12, %130 : vector<16x32xf32>
    %132 = arith.addf %120, %131 : vector<16x32xf32>
    %133 = arith.mulf %132, %132 : vector<16x32xf32>
    %cst_34 = arith.constant dense<0.000000e+00> : vector<16xf32>
    %134 = vector.multi_reduction <add>, %133, %cst_34 [1] : vector<16x32xf32> to vector<16xf32>
    %135 = vector.shape_cast %134 : vector<16xf32> to vector<16x1xf32>
    %cst_35 = arith.constant 1.000000e-24 : f32
    %136 = vector.broadcast %cst_35 : f32 to vector<16x1xf32>
    %137 = arith.maximumf %135, %136 : vector<16x1xf32>
    %138 = math.rsqrt %137 : vector<16x1xf32>
    %139 = vector.broadcast %138 : vector<16x1xf32> to vector<16x32xf32>
    %140 = arith.mulf %132, %139 : vector<16x32xf32>
    %c6_i32 = arith.constant 6 : i32
    %141 = tpu.concatenate %140, %10 in 1 : vector<16x32xf32>, vector<16x16xf32> -> vector<16x48xf32>
    %142 = tpu.concatenate %2, %140 in 0 : vector<32x32xf32>, vector<16x32xf32> -> vector<48x32xf32>
    %cst_36 = arith.constant dense<0.000000e+00> : vector<16x32xf32>
    %143 = tpu.matmul %141, %142, %cst_36 {dimension_numbers = #tpu.dot_dimension_numbers<[1], [0], [0], [1], [0, 0, 1, 1], [], []>, precision = #tpu.contract_precision<fp32>} : vector<16x48xf32>, vector<48x32xf32>, vector<16x32xf32> -> vector<16x32xf32>
    %144 = arith.addf %143, %11 : vector<16x32xf32>
    %145 = arith.mulf %140, %144 : vector<16x32xf32>
    %cst_37 = arith.constant dense<0.000000e+00> : vector<16xf32>
    %146 = vector.multi_reduction <add>, %145, %cst_37 [1] : vector<16x32xf32> to vector<16xf32>
    %147 = vector.shape_cast %146 : vector<16xf32> to vector<16x1xf32>
    %148 = vector.broadcast %147 : vector<16x1xf32> to vector<16x32xf32>
    %149 = arith.mulf %148, %140 : vector<16x32xf32>
    %150 = arith.subf %144, %149 : vector<16x32xf32>
    %151 = arith.mulf %12, %150 : vector<16x32xf32>
    %152 = arith.addf %140, %151 : vector<16x32xf32>
    %153 = arith.mulf %152, %152 : vector<16x32xf32>
    %cst_38 = arith.constant dense<0.000000e+00> : vector<16xf32>
    %154 = vector.multi_reduction <add>, %153, %cst_38 [1] : vector<16x32xf32> to vector<16xf32>
    %155 = vector.shape_cast %154 : vector<16xf32> to vector<16x1xf32>
    %cst_39 = arith.constant 1.000000e-24 : f32
    %156 = vector.broadcast %cst_39 : f32 to vector<16x1xf32>
    %157 = arith.maximumf %155, %156 : vector<16x1xf32>
    %158 = math.rsqrt %157 : vector<16x1xf32>
    %159 = vector.broadcast %158 : vector<16x1xf32> to vector<16x32xf32>
    %160 = arith.mulf %152, %159 : vector<16x32xf32>
    %c7_i32 = arith.constant 7 : i32
    %161 = tpu.concatenate %160, %10 in 1 : vector<16x32xf32>, vector<16x16xf32> -> vector<16x48xf32>
    %162 = tpu.concatenate %2, %160 in 0 : vector<32x32xf32>, vector<16x32xf32> -> vector<48x32xf32>
    %cst_40 = arith.constant dense<0.000000e+00> : vector<16x32xf32>
    %163 = tpu.matmul %161, %162, %cst_40 {dimension_numbers = #tpu.dot_dimension_numbers<[1], [0], [0], [1], [0, 0, 1, 1], [], []>, precision = #tpu.contract_precision<fp32>} : vector<16x48xf32>, vector<48x32xf32>, vector<16x32xf32> -> vector<16x32xf32>
    %164 = arith.addf %163, %11 : vector<16x32xf32>
    %165 = arith.mulf %160, %164 : vector<16x32xf32>
    %cst_41 = arith.constant dense<0.000000e+00> : vector<16xf32>
    %166 = vector.multi_reduction <add>, %165, %cst_41 [1] : vector<16x32xf32> to vector<16xf32>
    %167 = vector.shape_cast %166 : vector<16xf32> to vector<16x1xf32>
    %168 = vector.broadcast %167 : vector<16x1xf32> to vector<16x32xf32>
    %169 = arith.mulf %168, %160 : vector<16x32xf32>
    %170 = arith.subf %164, %169 : vector<16x32xf32>
    %171 = arith.mulf %12, %170 : vector<16x32xf32>
    %172 = arith.addf %160, %171 : vector<16x32xf32>
    %173 = arith.mulf %172, %172 : vector<16x32xf32>
    %cst_42 = arith.constant dense<0.000000e+00> : vector<16xf32>
    %174 = vector.multi_reduction <add>, %173, %cst_42 [1] : vector<16x32xf32> to vector<16xf32>
    %175 = vector.shape_cast %174 : vector<16xf32> to vector<16x1xf32>
    %cst_43 = arith.constant 1.000000e-24 : f32
    %176 = vector.broadcast %cst_43 : f32 to vector<16x1xf32>
    %177 = arith.maximumf %175, %176 : vector<16x1xf32>
    %178 = math.rsqrt %177 : vector<16x1xf32>
    %179 = vector.broadcast %178 : vector<16x1xf32> to vector<16x32xf32>
    %180 = arith.mulf %172, %179 : vector<16x32xf32>
    %c8_i32 = arith.constant 8 : i32
    %181 = tpu.concatenate %180, %10 in 1 : vector<16x32xf32>, vector<16x16xf32> -> vector<16x48xf32>
    %182 = tpu.concatenate %2, %180 in 0 : vector<32x32xf32>, vector<16x32xf32> -> vector<48x32xf32>
    %cst_44 = arith.constant dense<0.000000e+00> : vector<16x32xf32>
    %183 = tpu.matmul %181, %182, %cst_44 {dimension_numbers = #tpu.dot_dimension_numbers<[1], [0], [0], [1], [0, 0, 1, 1], [], []>, precision = #tpu.contract_precision<fp32>} : vector<16x48xf32>, vector<48x32xf32>, vector<16x32xf32> -> vector<16x32xf32>
    %184 = arith.addf %183, %11 : vector<16x32xf32>
    %185 = arith.mulf %180, %184 : vector<16x32xf32>
    %cst_45 = arith.constant dense<0.000000e+00> : vector<16xf32>
    %186 = vector.multi_reduction <add>, %185, %cst_45 [1] : vector<16x32xf32> to vector<16xf32>
    %187 = vector.shape_cast %186 : vector<16xf32> to vector<16x1xf32>
    %188 = vector.broadcast %187 : vector<16x1xf32> to vector<16x32xf32>
    %189 = arith.mulf %188, %180 : vector<16x32xf32>
    %190 = arith.subf %184, %189 : vector<16x32xf32>
    %191 = arith.mulf %12, %190 : vector<16x32xf32>
    %192 = arith.addf %180, %191 : vector<16x32xf32>
    %193 = arith.mulf %192, %192 : vector<16x32xf32>
    %cst_46 = arith.constant dense<0.000000e+00> : vector<16xf32>
    %194 = vector.multi_reduction <add>, %193, %cst_46 [1] : vector<16x32xf32> to vector<16xf32>
    %195 = vector.shape_cast %194 : vector<16xf32> to vector<16x1xf32>
    %cst_47 = arith.constant 1.000000e-24 : f32
    %196 = vector.broadcast %cst_47 : f32 to vector<16x1xf32>
    %197 = arith.maximumf %195, %196 : vector<16x1xf32>
    %198 = math.rsqrt %197 : vector<16x1xf32>
    %199 = vector.broadcast %198 : vector<16x1xf32> to vector<16x32xf32>
    %200 = arith.mulf %192, %199 : vector<16x32xf32>
    %c9_i32 = arith.constant 9 : i32
    %201 = tpu.concatenate %200, %10 in 1 : vector<16x32xf32>, vector<16x16xf32> -> vector<16x48xf32>
    %202 = tpu.concatenate %2, %200 in 0 : vector<32x32xf32>, vector<16x32xf32> -> vector<48x32xf32>
    %cst_48 = arith.constant dense<0.000000e+00> : vector<16x32xf32>
    %203 = tpu.matmul %201, %202, %cst_48 {dimension_numbers = #tpu.dot_dimension_numbers<[1], [0], [0], [1], [0, 0, 1, 1], [], []>, precision = #tpu.contract_precision<fp32>} : vector<16x48xf32>, vector<48x32xf32>, vector<16x32xf32> -> vector<16x32xf32>
    %204 = arith.addf %203, %11 : vector<16x32xf32>
    %205 = arith.mulf %200, %204 : vector<16x32xf32>
    %cst_49 = arith.constant dense<0.000000e+00> : vector<16xf32>
    %206 = vector.multi_reduction <add>, %205, %cst_49 [1] : vector<16x32xf32> to vector<16xf32>
    %207 = vector.shape_cast %206 : vector<16xf32> to vector<16x1xf32>
    %208 = vector.broadcast %207 : vector<16x1xf32> to vector<16x32xf32>
    %209 = arith.mulf %208, %200 : vector<16x32xf32>
    %210 = arith.subf %204, %209 : vector<16x32xf32>
    %211 = arith.mulf %12, %210 : vector<16x32xf32>
    %212 = arith.addf %200, %211 : vector<16x32xf32>
    %213 = arith.mulf %212, %212 : vector<16x32xf32>
    %cst_50 = arith.constant dense<0.000000e+00> : vector<16xf32>
    %214 = vector.multi_reduction <add>, %213, %cst_50 [1] : vector<16x32xf32> to vector<16xf32>
    %215 = vector.shape_cast %214 : vector<16xf32> to vector<16x1xf32>
    %cst_51 = arith.constant 1.000000e-24 : f32
    %216 = vector.broadcast %cst_51 : f32 to vector<16x1xf32>
    %217 = arith.maximumf %215, %216 : vector<16x1xf32>
    %218 = math.rsqrt %217 : vector<16x1xf32>
    %219 = vector.broadcast %218 : vector<16x1xf32> to vector<16x32xf32>
    %220 = arith.mulf %212, %219 : vector<16x32xf32>
    %c0_52 = arith.constant 0 : index
    %c0_53 = arith.constant 0 : index
    %221 = vector.load %arg7[%c0_52, %c0_53] : memref<16x32xf32, #tpu.memory_space<vmem>>, vector<16x32xf32>
    tpu.vector_store %arg7[%c0_52, %c0_53], %220 {strides = array<i32>} : memref<16x32xf32, #tpu.memory_space<vmem>>, vector<16x32xf32>,
    %222 = vector.broadcast %4 : vector<1x32xf32> to vector<16x32xf32>
    %223 = arith.mulf %220, %222 : vector<16x32xf32>
    %cst_54 = arith.constant dense<0.000000e+00> : vector<16xf32>
    %224 = vector.multi_reduction <add>, %223, %cst_54 [1] : vector<16x32xf32> to vector<16xf32>
    %225 = vector.shape_cast %224 : vector<16xf32> to vector<16x1xf32>
    %226 = vector.extract_strided_slice %225 {offsets = [0, 0], sizes = [8, 1], strides = [1, 1]} : vector<16x1xf32> to vector<8x1xf32>
    %227 = vector.extract_strided_slice %225 {offsets = [8, 0], sizes = [8, 1], strides = [1, 1]} : vector<16x1xf32> to vector<8x1xf32>
    %228 = tpu.concatenate %226, %227 in 1 : vector<8x1xf32>, vector<8x1xf32> -> vector<8x2xf32>
    %cst_55 = arith.constant dense<0.000000e+00> : vector<2xf32>
    %229 = vector.multi_reduction <add>, %228, %cst_55 [0] : vector<8x2xf32> to vector<2xf32>
    %230 = vector.shape_cast %229 : vector<2xf32> to vector<1x2xf32>
    %cst_56 = arith.constant 1.250000e-01 : f32
    %231 = vector.broadcast %cst_56 : f32 to vector<1x2xf32>
    %232 = arith.mulf %230, %231 : vector<1x2xf32>
    %233 = vector.broadcast %6 : f32 to vector<1x2xf32>
    %234 = arith.addf %232, %233 : vector<1x2xf32>
    %c0_57 = arith.constant 0 : index
    %c0_58 = arith.constant 0 : index
    %235 = vector.load %arg6[%c0_57, %c0_58] : memref<1x2xf32, #tpu.memory_space<vmem>>, vector<1x2xf32>
    tpu.vector_store %arg6[%c0_57, %c0_58], %234 {strides = array<i32>} : memref<1x2xf32, #tpu.memory_space<vmem>>, vector<1x2xf32>,
    return
  }
}

</mosaic_0001>

<llo_original>
// kernel: akorn_forward.1
$region0: #{akorn_forward.1}
  #allocation0 [shape = 'u32[]', space=smem, size = 0x4, offset = 0x4, fixed_abs, tag = 'smem constant byte address 0x4 - core index']
  #allocation1 [shape = 'u32[144,128]{1,0:T(1,128)}', space=vmem, size = 0x12000, scoped, tag = 'internal scratch']
  %s0 = inlined_call_operand.vmem [shape: f32[16,32], index: 0, kind: input, shape index: {}]
  %s1 = inlined_call_operand.vmem [shape: f32[8,8], index: 1, kind: input, shape index: {}]
  %s2 = inlined_call_operand.vmem [shape: f32[32,32], index: 2, kind: input, shape index: {}]
  %s3 = inlined_call_operand.vmem [shape: f32[8,32], index: 3, kind: input, shape index: {}]
  %s4 = inlined_call_operand.vmem [shape: f32[1,32], index: 4, kind: input, shape index: {}]
  %s5 = inlined_call_operand.vmem [shape: f32[2], index: 5, kind: input, shape index: {}]
  %s6 = inlined_call_operand.hbm [shape: f32[1,2], index: 6, kind: output, shape index: {0}]
  %s7 = inlined_call_operand.hbm [shape: f32[16,32], index: 7, kind: output, shape index: {1}]
  %8 = xla_tuple %s6, %s7
  %s9 = sld [smem:[#allocation0]]
  $region46: #{akorn_forward.1} parent=0
    _
  %s11 = ssub.s32 1, %s9
  %s12 = scalar_select 0, %s11, %s9
  $region1: #{akorn_forward.1} parent=0
    #allocation2 [shape = 'u8[512]{0}', space=smem, size = 0x200, scoped, tag = 'input window, operand 5, single buffered']
    #allocation3 [shape = 's32[1]{0}', space=sflag, size = 0x4, scoped, tag = 'scoped memory for akorn_forward.1']
    #allocation4 [shape = 's32[1]{0}', space=sflag, size = 0x4, scoped, tag = 'scoped memory for akorn_forward.1']
    #allocation5 [shape = 'u8[512]{0}', space=vmem, size = 0x400, scoped, tag = 'output window, operand 0, single buffered']
    #allocation6 [shape = 'u8[8192]{0}', space=vmem, size = 0x2000, scoped, tag = 'output window, operand 1, single buffered']
    #allocation7 [shape = 's32[1]{0}', space=sflag, size = 0x4, scoped, tag = 'scoped memory for akorn_forward.1']
    %13 = vsyncpa [#allocation4], 0
    %14 = vsyncpa [#allocation3], 0
    %15 = vsyncpa [#allocation7], 0
    // Predicated region
    $region2: #{akorn_forward.1} parent=1 // pred_check
      _
    $region3: #{akorn_forward.1} parent=1 // pred_check_branch
      %17 = sbr.rel (0) target = $region5
    $region4: #{akorn_forward.1} parent=1 // pred_region
      _
    $region5: #{akorn_forward.1} parent=1 // pred_fallthru
      _
    // Predicated region
    $region6: #{akorn_forward.1} parent=1 // pred_check
      _
    $region7: #{akorn_forward.1} parent=1 // pred_check_branch
      %19 = sbr.rel (0) target = $region9
    $region8: #{akorn_forward.1} parent=1 // pred_region
      _
    $region9: #{akorn_forward.1} parent=1 // pred_fallthru
      _
    // Predicated region
    $region10: #{akorn_forward.1} parent=1 // pred_check
      _
    $region11: #{akorn_forward.1} parent=1 // pred_check_branch
      %21 = sbr.rel (0) target = $region13
    $region12: #{akorn_forward.1} parent=1 // pred_region
      _
    $region13: #{akorn_forward.1} parent=1 // pred_fallthru
      _
    // Predicated region
    $region14: #{akorn_forward.1} parent=1 // pred_check
      _
    $region15: #{akorn_forward.1} parent=1 // pred_check_branch
      %23 = sbr.rel (0) target = $region17
    $region16: #{akorn_forward.1} parent=1 // pred_region
      _
    $region17: #{akorn_forward.1} parent=1 // pred_fallthru
      _
    // Predicated region
    $region18: #{akorn_forward.1} parent=1 // pred_check
      _
    $region19: #{akorn_forward.1} parent=1 // pred_check_branch
      %25 = sbr.rel (0) target = $region21
    $region20: #{akorn_forward.1} parent=1 // pred_region
      _
    $region21: #{akorn_forward.1} parent=1 // pred_fallthru
      _
    // Predicated region
    $region22: #{akorn_forward.1} parent=1 // pred_check
      _
    $region23: #{akorn_forward.1} parent=1 // pred_check_branch
      %27 = sbr.rel (0) target = $region25
    $region24: #{akorn_forward.1} parent=1 // pred_region
      %s29 = ssub.s32 16, 16
      %30 = vsyncadd [#allocation4], %s29
      %s32 = sshll.u32 %s5, 4
      %s33 = int_to_ptr.vmem [resolvable:$true] %s32
      %35 = dma.vmem_to_smem %s33, 16, [#allocation2], [#allocation4]
    $region25: #{akorn_forward.1} parent=1 // pred_fallthru
      _
    // Predicated region
    $region26: #{akorn_forward.1} parent=1 // pred_check
      _
    $region27: #{akorn_forward.1} parent=1 // pred_check_branch
      %37 = sbr.rel (0) target = $region29
    $region28: #{akorn_forward.1} parent=1 // pred_region
      %38 = dma.done [#allocation4], 16
    $region29: #{akorn_forward.1} parent=1 // pred_fallthru
      _
    %39 = sfence
    %v40 = vld [vmem:[%s0] sm:$0xff]
    %v41 = vld [vmem:[%s0 + $0x8] sm:$0xff]
    %v42 = vld [vmem:[%s1] sm:$0xff]
    %v43 = vld [vmem:[%s2] sm:$0xff]
    %v44 = vld [vmem:[%s2 + $0x8] sm:$0xff]
    %v45 = vld [vmem:[%s2 + $0x10] sm:$0xff]
    %v46 = vld [vmem:[%s2 + $0x18] sm:$0xff]
    %v47 = vld [vmem:[%s3] sm:$0xff]
    %v48 = vld [vmem:[%s4] sm:$0x1]
    %s49 = sld [smem:[#allocation2]]
    %s50 = sld [smem:[#allocation2 + $0x1]]
    %vm51 = vcmask 64512
    %v52 = vsel %vm51, %v42, 0.0
    %54 = vrot.lane.b32.xlu0 %v42, 8
    %v55 = vpop.permute.xlu0 %54
    %v57 = vsel %vm51, 0.0, %v55
    %v58 = vstv %s49
    %v59 = vmul.f32 %v40, %v40
    %v60 = vmul.f32 %v41, %v41
    %vm61 = vcmask 261120
    %v62 = vsel %vm61, %v59, 0.0
    %63 = vadd.xlane.f32.xlu0 %v62
    %v64 = vpop.xlane.xlu0 %63
    %v65 = vsel %vm61, %v60, 0.0
    %66 = vadd.xlane.f32.xlu0 %v65
    %v67 = vpop.xlane.xlu0 %66
    %v68 = vmax.f32 %v64, 1e-24
    %v69 = vmax.f32 %v67, 1e-24
    %v70 = vrsqrt.pop %v68
    %v71 = vrsqrt.pop %v69
    %v72 = vmul.f32 %v40, %v70
    %v73 = vmul.f32 %v41, %v71
    %76 = vrot.lane.b32.xlu0 %v52, 32
    %v77 = vpop.permute.xlu0 %76
    %78 = vrot.lane.b32.xlu0 %v57, 32
    %v79 = vpop.permute.xlu0 %78
    %v82 = vsel %vm61, %v72, %v77
    %v83 = vsel %vm61, %v73, %v79
    %vm84 = vcmask 392192
    %v86 = vsel %vm84, %v82, 0
    %v89 = vsel %vm84, %v83, 0
    %91 = vmatprep.subr.mxu0 0.0
    %v92 = vand.u32 %v43, 4294901760
    %93 = vmatpush1.msra.mxu0 %v92
    %94 = vmatprep.subr.mxu0 0.0
    %v95 = vand.u32 %v44, 4294901760
    %96 = vmatpush1.msra.mxu0 %v95
    %97 = vmatprep.subr.mxu0 0.0
    %v98 = vand.u32 %v45, 4294901760
    %99 = vmatpush1.msra.mxu0 %v98
    %100 = vmatprep.subr.mxu0 0.0
    %v101 = vand.u32 %v46, 4294901760
    %102 = vmatpush1.msra.mxu0 %v101
    %103 = vmatprep.subr.mxu0 0.0
    %v104 = vand.u32 %v72, 4294901760
    %105 = vmatpush1.msra.mxu0 %v104
    %106 = vmatprep.subr.mxu0 0.0
    %v107 = vand.u32 %v73, 4294901760
    %108 = vmatpush1.msra.mxu0 %v107
    %109 = vmatprep.subr.mxu0 0.0
    %110 = vmatpush1.msra.mxu0 0.0
    %111 = vmatprep.subr.mxu0 0.0
    %112 = vmatpush1.msra.mxu0 0.0
    %113 = vmatprep.subr.mxu0 0.0
    %114 = vmatpush1.msra.mxu0 0.0
    %115 = vmatprep.subr.mxu0 0.0
    %116 = vmatpush1.msra.mxu0 0.0
    %117 = vmatprep.subr.mxu0 0.0
    %118 = vmatpush1.msra.mxu0 0.0
    %119 = vmatprep.subr.mxu0 0.0
    %120 = vmatpush1.msra.mxu0 0.0
    %121 = vmatprep.subr.mxu0 0.0
    %122 = vmatpush1.msra.mxu0 0.0
    %123 = vmatprep.subr.mxu0 0.0
    %124 = vmatpush1.msra.mxu0 0.0
    %125 = vmatprep.subr.mxu0 0.0
    %126 = vmatpush1.msra.mxu0 0.0
    %127 = vmatprep.subr.mxu0 0.0
    %128 = vmatpush1.msra.mxu0 0.0
    %129 = vmatprep.subr.mxu0 0.0
    %130 = vmatpush1.msra.mxu0 0.0
    %131 = vmatprep.subr.mxu0 0.0
    %132 = vmatpush1.msra.mxu0 0.0
    %133 = vmatprep.subr.mxu0 0.0
    %134 = vmatpush1.msra.mxu0 0.0
    %135 = vmatprep.subr.mxu0 0.0
    %136 = vmatpush1.msra.mxu0 0.0
    %137 = vmatprep.subr.mxu0 0.0
    %138 = vmatpush1.msra.mxu0 0.0
    %139 = vmatprep.subr.mxu0 0.0
    %140 = vmatpush1.msra.mxu0 0.0
    %141 = vmatprep.subr.mxu0 0.0
    %142 = vmatpush1.msra.mxu0 0.0
    %143 = vmatprep.subr.mxu0 0.0
    %144 = vmatpush1.msra.mxu0 0.0
    %145 = vmatprep.subr.mxu0 0.0
    %146 = vmatpush1.msra.mxu0 0.0
    %147 = vmatprep.subr.mxu0 0.0
    %148 = vmatpush1.msra.mxu0 0.0
    %149 = vmatprep.subr.mxu0 0.0
    %150 = vmatpush1.msra.mxu0 0.0
    %151 = vmatprep.subr.mxu0 0.0
    %152 = vmatpush1.msra.mxu0 0.0
    %153 = vmatprep.subr.mxu0 0.0
    %154 = vmatpush1.msra.mxu0 0.0
    %155 = vmatprep.subr.mxu0 0.0
    %156 = vmatpush1.msra.mxu0 0.0
    %157 = vmatprep.subr.mxu0 0.0
    %158 = vmatpush1.msra.mxu0 0.0
    %159 = vmatprep.subr.mxu0 0.0
    %160 = vmatpush1.msra.mxu0 0.0
    %161 = vmatprep.mubr.f32.mxu0 0.0
    %v162 = vand.u32 %v86, 4294901760
    %v163 = vsub.f32 %v86, %v162
    %v164 = vand.u32 %v163, 4294901760
    %v165 = vsub.f32 %v163, %v164
    %v166 = vand.u32 %v165, 4294901760
    %167 = vmatmul.mubr.f32.gmra.mrb[0].mxu0 %v166
    %v168 = vpop.f32.mrb[0].mxu0
    %v169 = vadd.f32 %v47, %v168
    %v170 = vpop.f32.mrb[0].mxu0
    %171 = vmatprep.mubr.f32.mxu0 0.0
    %v172 = vand.u32 %v89, 4294901760
    %v173 = vsub.f32 %v89, %v172
    %v174 = vand.u32 %v173, 4294901760
    %v175 = vsub.f32 %v173, %v174
    %v176 = vand.u32 %v175, 4294901760
    %177 = vmatmul.mubr.f32.gmra.mrb[0].mxu0 %v176
    %v178 = vpop.f32.mrb[0].mxu0
    %v179 = vadd.f32 %v47, %v178
    %v180 = vpop.f32.mrb[0].mxu0
    %181 = vdwg.mxu0
    %182 = vmatprep.subr.mxu0 0.0
    %v183 = vand.u32 %v43, 4294901760
    %v184 = vsub.f32 %v43, %v183
    %v185 = vand.u32 %v184, 4294901760
    %v186 = vsub.f32 %v184, %v185
    %v187 = vand.u32 %v186, 4294901760
    %188 = vmatpush1.msra.mxu0 %v187
    %189 = vmatprep.subr.mxu0 0.0
    %v190 = vand.u32 %v44, 4294901760
    %v191 = vsub.f32 %v44, %v190
    %v192 = vand.u32 %v191, 4294901760
    %v193 = vsub.f32 %v191, %v192
    %v194 = vand.u32 %v193, 4294901760
    %195 = vmatpush1.msra.mxu0 %v194
    %196 = vmatprep.subr.mxu0 0.0
    %v197 = vand.u32 %v45, 4294901760
    %v198 = vsub.f32 %v45, %v197
    %v199 = vand.u32 %v198, 4294901760
    %v200 = vsub.f32 %v198, %v199
    %v201 = vand.u32 %v200, 4294901760
    %202 = vmatpush1.msra.mxu0 %v201
    %203 = vmatprep.subr.mxu0 0.0
    %v204 = vand.u32 %v46, 4294901760
    %v205 = vsub.f32 %v46, %v204
    %v206 = vand.u32 %v205, 4294901760
    %v207 = vsub.f32 %v205, %v206
    %v208 = vand.u32 %v207, 4294901760
    %209 = vmatpush1.msra.mxu0 %v208
    %210 = vmatprep.subr.mxu0 0.0
    %v211 = vand.u32 %v72, 4294901760
    %v212 = vsub.f32 %v72, %v211
    %v213 = vand.u32 %v212, 4294901760
    %v214 = vsub.f32 %v212, %v213
    %v215 = vand.u32 %v214, 4294901760
    %216 = vmatpush1.msra.mxu0 %v215
    %217 = vmatprep.subr.mxu0 0.0
    %v218 = vand.u32 %v73, 4294901760
    %v219 = vsub.f32 %v73, %v218
    %v220 = vand.u32 %v219, 4294901760
    %v221 = vsub.f32 %v219, %v220
    %v222 = vand.u32 %v221, 4294901760
    %223 = vmatpush1.msra.mxu0 %v222
    %224 = vmatprep.subr.mxu0 0.0
    %225 = vmatpush1.msra.mxu0 0.0
    %226 = vmatprep.subr.mxu0 0.0
    %227 = vmatpush1.msra.mxu0 0.0
    %228 = vmatprep.subr.mxu0 0.0
    %229 = vmatpush1.msra.mxu0 0.0
    %230 = vmatprep.subr.mxu0 0.0
    %231 = vmatpush1.msra.mxu0 0.0
    %232 = vmatprep.subr.mxu0 0.0
    %233 = vmatpush1.msra.mxu0 0.0
    %234 = vmatprep.subr.mxu0 0.0
    %235 = vmatpush1.msra.mxu0 0.0
    %236 = vmatprep.subr.mxu0 0.0
    %237 = vmatpush1.msra.mxu0 0.0
    %238 = vmatprep.subr.mxu0 0.0
    %239 = vmatpush1.msra.mxu0 0.0
    %240 = vmatprep.subr.mxu0 0.0
    %241 = vmatpush1.msra.mxu0 0.0
    %242 = vmatprep.subr.mxu0 0.0
    %243 = vmatpush1.msra.mxu0 0.0
    %244 = vmatprep.subr.mxu0 0.0
    %245 = vmatpush1.msra.mxu0 0.0
    %246 = vmatprep.subr.mxu0 0.0
    %247 = vmatpush1.msra.mxu0 0.0
    %248 = vmatprep.subr.mxu0 0.0
    %249 = vmatpush1.msra.mxu0 0.0
    %250 = vmatprep.subr.mxu0 0.0
    %251 = vmatpush1.msra.mxu0 0.0
    %252 = vmatprep.subr.mxu0 0.0
    %253 = vmatpush1.msra.mxu0 0.0
    %254 = vmatprep.subr.mxu0 0.0
    %255 = vmatpush1.msra.mxu0 0.0
    %256 = vmatprep.subr.mxu0 0.0
    %257 = vmatpush1.msra.mxu0 0.0
    %258 = vmatprep.subr.mxu0 0.0
    %259 = vmatpush1.msra.mxu0 0.0
    %260 = vmatprep.subr.mxu0 0.0
    %261 = vmatpush1.msra.mxu0 0.0
    %262 = vmatprep.subr.mxu0 0.0
    %263 = vmatpush1.msra.mxu0 0.0
    %264 = vmatprep.subr.mxu0 0.0
    %265 = vmatpush1.msra.mxu0 0.0
    %266 = vmatprep.subr.mxu0 0.0
    %267 = vmatpush1.msra.mxu0 0.0
    %268 = vmatprep.subr.mxu0 0.0
    %269 = vmatpush1.msra.mxu0 0.0
    %270 = vmatprep.subr.mxu0 0.0
    %271 = vmatpush1.msra.mxu0 0.0
    %272 = vmatprep.subr.mxu0 0.0
    %273 = vmatpush1.msra.mxu0 0.0
    %274 = vmatprep.subr.mxu0 0.0
    %275 = vmatpush1.msra.mxu0 0.0
    %276 = vmatprep.mubr.f32.mxu0 0.0
    %v277 = vand.u32 %v86, 4294901760
    %278 = vmatmul.mubr.f32.gmra.mrb[0].mxu0 %v277
    %v279 = vpop.f32.mrb[0].mxu0
    %v280 = vadd.f32 %v169, %v279
    %v281 = vpop.f32.mrb[0].mxu0
    %282 = vmatprep.mubr.f32.mxu0 0.0
    %v283 = vand.u32 %v89, 4294901760
    %284 = vmatmul.mubr.f32.gmra.mrb[0].mxu0 %v283
    %v285 = vpop.f32.mrb[0].mxu0
    %v286 = vadd.f32 %v179, %v285
    %v287 = vpop.f32.mrb[0].mxu0
    %288 = vdwg.mxu0
    %289 = vmatprep.subr.mxu0 0.0
    %v290 = vand.u32 %v43, 4294901760
    %v291 = vsub.f32 %v43, %v290
    %292 = vmatpush1.msra.mxu0 %v291
    %293 = vmatprep.subr.mxu0 0.0
    %v294 = vand.u32 %v44, 4294901760
    %v295 = vsub.f32 %v44, %v294
    %296 = vmatpush1.msra.mxu0 %v295
    %297 = vmatprep.subr.mxu0 0.0
    %v298 = vand.u32 %v45, 4294901760
    %v299 = vsub.f32 %v45, %v298
    %300 = vmatpush1.msra.mxu0 %v299
    %301 = vmatprep.subr.mxu0 0.0
    %v302 = vand.u32 %v46, 4294901760
    %v303 = vsub.f32 %v46, %v302
    %304 = vmatpush1.msra.mxu0 %v303
    %305 = vmatprep.subr.mxu0 0.0
    %v306 = vand.u32 %v72, 4294901760
    %v307 = vsub.f32 %v72, %v306
    %308 = vmatpush1.msra.mxu0 %v307
    %309 = vmatprep.subr.mxu0 0.0
    %v310 = vand.u32 %v73, 4294901760
    %v311 = vsub.f32 %v73, %v310
    %312 = vmatpush1.msra.mxu0 %v311
    %313 = vmatprep.subr.mxu0 0.0
    %314 = vmatpush1.msra.mxu0 0.0
    %315 = vmatprep.subr.mxu0 0.0
    %316 = vmatpush1.msra.mxu0 0.0
    %317 = vmatprep.subr.mxu0 0.0
    %318 = vmatpush1.msra.mxu0 0.0
    %319 = vmatprep.subr.mxu0 0.0
    %320 = vmatpush1.msra.mxu0 0.0
    %321 = vmatprep.subr.mxu0 0.0
    %322 = vmatpush1.msra.mxu0 0.0
    %323 = vmatprep.subr.mxu0 0.0
    %324 = vmatpush1.msra.mxu0 0.0
    %325 = vmatprep.subr.mxu0 0.0
    %326 = vmatpush1.msra.mxu0 0.0
    %327 = vmatprep.subr.mxu0 0.0
    %328 = vmatpush1.msra.mxu0 0.0
    %329 = vmatprep.subr.mxu0 0.0
    %330 = vmatpush1.msra.mxu0 0.0
    %331 = vmatprep.subr.mxu0 0.0
    %332 = vmatpush1.msra.mxu0 0.0
    %333 = vmatprep.subr.mxu0 0.0
    %334 = vmatpush1.msra.mxu0 0.0
    %335 = vmatprep.subr.mxu0 0.0
    %336 = vmatpush1.msra.mxu0 0.0
    %337 = vmatprep.subr.mxu0 0.0
    %338 = vmatpush1.msra.mxu0 0.0
    %339 = vmatprep.subr.mxu0 0.0
    %340 = vmatpush1.msra.mxu0 0.0
    %341 = vmatprep.subr.mxu0 0.0
    %342 = vmatpush1.msra.mxu0 0.0
    %343 = vmatprep.subr.mxu0 0.0
    %344 = vmatpush1.msra.mxu0 0.0
    %345 = vmatprep.subr.mxu0 0.0
    %346 = vmatpush1.msra.mxu0 0.0
    %347 = vmatprep.subr.mxu0 0.0
    %348 = vmatpush1.msra.mxu0 0.0
    %349 = vmatprep.subr.mxu0 0.0
    %350 = vmatpush1.msra.mxu0 0.0
    %351 = vmatprep.subr.mxu0 0.0
    %352 = vmatpush1.msra.mxu0 0.0
    %353 = vmatprep.subr.mxu0 0.0
    %354 = vmatpush1.msra.mxu0 0.0
    %355 = vmatprep.subr.mxu0 0.0
    %356 = vmatpush1.msra.mxu0 0.0
    %357 = vmatprep.subr.mxu0 0.0
    %358 = vmatpush1.msra.mxu0 0.0
    %359 = vmatprep.subr.mxu0 0.0
    %360 = vmatpush1.msra.mxu0 0.0
    %361 = vmatprep.subr.mxu0 0.0
    %362 = vmatpush1.msra.mxu0 0.0
    %363 = vmatprep.subr.mxu0 0.0
    %364 = vmatpush1.msra.mxu0 0.0
    %365 = vmatprep.mubr.f32.mxu0 0.0
    %v366 = vand.u32 %v86, 4294901760
    %v367 = vsub.f32 %v86, %v366
    %368 = vmatmul.mubr.f32.gmra.mrb[0].mxu0 %v367
    %v369 = vpop.f32.mrb[0].mxu0
    %v370 = vadd.f32 %v280, %v369
    %v371 = vpop.f32.mrb[0].mxu0
    %372 = vmatprep.mubr.f32.mxu0 0.0
    %v373 = vand.u32 %v89, 4294901760
    %v374 = vsub.f32 %v89, %v373
    %375 = vmatmul.mubr.f32.gmra.mrb[0].mxu0 %v374
    %v376 = vpop.f32.mrb[0].mxu0
    %v377 = vadd.f32 %v286, %v376
    %v378 = vpop.f32.mrb[0].mxu0
    %379 = vdwg.mxu0
    %380 = vmatprep.subr.mxu0 0.0
    %v381 = vand.u32 %v43, 4294901760
    %382 = vmatpush1.msra.mxu0 %v381
    %383 = vmatprep.subr.mxu0 0.0
    %v384 = vand.u32 %v44, 4294901760
    %385 = vmatpush1.msra.mxu0 %v384
    %386 = vmatprep.subr.mxu0 0.0
    %v387 = vand.u32 %v45, 4294901760
    %388 = vmatpush1.msra.mxu0 %v387
    %389 = vmatprep.subr.mxu0 0.0
    %v390 = vand.u32 %v46, 4294901760
    %391 = vmatpush1.msra.mxu0 %v390
    %392 = vmatprep.subr.mxu0 0.0
    %v393 = vand.u32 %v72, 4294901760
    %394 = vmatpush1.msra.mxu0 %v393
    %395 = vmatprep.subr.mxu0 0.0
    %v396 = vand.u32 %v73, 4294901760
    %397 = vmatpush1.msra.mxu0 %v396
    %398 = vmatprep.subr.mxu0 0.0
    %399 = vmatpush1.msra.mxu0 0.0
    %400 = vmatprep.subr.mxu0 0.0
    %401 = vmatpush1.msra.mxu0 0.0
    %402 = vmatprep.subr.mxu0 0.0
    %403 = vmatpush1.msra.mxu0 0.0
    %404 = vmatprep.subr.mxu0 0.0
    %405 = vmatpush1.msra.mxu0 0.0
    %406 = vmatprep.subr.mxu0 0.0
    %407 = vmatpush1.msra.mxu0 0.0
    %408 = vmatprep.subr.mxu0 0.0
    %409 = vmatpush1.msra.mxu0 0.0
    %410 = vmatprep.subr.mxu0 0.0
    %411 = vmatpush1.msra.mxu0 0.0
    %412 = vmatprep.subr.mxu0 0.0
    %413 = vmatpush1.msra.mxu0 0.0
    %414 = vmatprep.subr.mxu0 0.0
    %415 = vmatpush1.msra.mxu0 0.0
    %416 = vmatprep.subr.mxu0 0.0
    %417 = vmatpush1.msra.mxu0 0.0
    %418 = vmatprep.subr.mxu0 0.0
    %419 = vmatpush1.msra.mxu0 0.0
    %420 = vmatprep.subr.mxu0 0.0
    %421 = vmatpush1.msra.mxu0 0.0
    %422 = vmatprep.subr.mxu0 0.0
    %423 = vmatpush1.msra.mxu0 0.0
    %424 = vmatprep.subr.mxu0 0.0
    %425 = vmatpush1.msra.mxu0 0.0
    %426 = vmatprep.subr.mxu0 0.0
    %427 = vmatpush1.msra.mxu0 0.0
    %428 = vmatprep.subr.mxu0 0.0
    %429 = vmatpush1.msra.mxu0 0.0
    %430 = vmatprep.subr.mxu0 0.0
    %431 = vmatpush1.msra.mxu0 0.0
    %432 = vmatprep.subr.mxu0 0.0
    %433 = vmatpush1.msra.mxu0 0.0
    %434 = vmatprep.subr.mxu0 0.0
    %435 = vmatpush1.msra.mxu0 0.0
    %436 = vmatprep.subr.mxu0 0.0
    %437 = vmatpush1.msra.mxu0 0.0
    %438 = vmatprep.subr.mxu0 0.0
    %439 = vmatpush1.msra.mxu0 0.0
    %440 = vmatprep.subr.mxu0 0.0
    %441 = vmatpush1.msra.mxu0 0.0
    %442 = vmatprep.subr.mxu0 0.0
    %443 = vmatpush1.msra.mxu0 0.0
    %444 = vmatprep.subr.mxu0 0.0
    %445 = vmatpush1.msra.mxu0 0.0
    %446 = vmatprep.subr.mxu0 0.0
    %447 = vmatpush1.msra.mxu0 0.0
    %448 = vmatprep.subr.mxu0 0.0
    %449 = vmatpush1.msra.mxu0 0.0
    %450 = vmatprep.mubr.f32.mxu0 0.0
    %v451 = vand.u32 %v86, 4294901760
    %v452 = vsub.f32 %v86, %v451
    %v453 = vand.u32 %v452, 4294901760
    %454 = vmatmul.mubr.f32.gmra.mrb[0].mxu0 %v453
    %v455 = vpop.f32.mrb[0].mxu0
    %v456 = vadd.f32 %v370, %v455
    %v457 = vpop.f32.mrb[0].mxu0
    %458 = vmatprep.mubr.f32.mxu0 0.0
    %v459 = vand.u32 %v89, 4294901760
    %v460 = vsub.f32 %v89, %v459
    %v461 = vand.u32 %v460, 4294901760
    %462 = vmatmul.mubr.f32.gmra.mrb[0].mxu0 %v461
    %v463 = vpop.f32.mrb[0].mxu0
    %v464 = vadd.f32 %v377, %v463
    %v465 = vpop.f32.mrb[0].mxu0
    %466 = vdwg.mxu0
    %467 = vmatprep.subr.mxu0 0.0
    %v468 = vand.u32 %v43, 4294901760
    %v469 = vsub.f32 %v43, %v468
    %v470 = vand.u32 %v469, 4294901760
    %471 = vmatpush1.msra.mxu0 %v470
    %472 = vmatprep.subr.mxu0 0.0
    %v473 = vand.u32 %v44, 4294901760
    %v474 = vsub.f32 %v44, %v473
    %v475 = vand.u32 %v474, 4294901760
    %476 = vmatpush1.msra.mxu0 %v475
    %477 = vmatprep.subr.mxu0 0.0
    %v478 = vand.u32 %v45, 4294901760
    %v479 = vsub.f32 %v45, %v478
    %v480 = vand.u32 %v479, 4294901760
    %481 = vmatpush1.msra.mxu0 %v480
    %482 = vmatprep.subr.mxu0 0.0
    %v483 = vand.u32 %v46, 4294901760
    %v484 = vsub.f32 %v46, %v483
    %v485 = vand.u32 %v484, 4294901760
    %486 = vmatpush1.msra.mxu0 %v485
    %487 = vmatprep.subr.mxu0 0.0
    %v488 = vand.u32 %v72, 4294901760
    %v489 = vsub.f32 %v72, %v488
    %v490 = vand.u32 %v489, 4294901760
    %491 = vmatpush1.msra.mxu0 %v490
    %492 = vmatprep.subr.mxu0 0.0
    %v493 = vand.u32 %v73, 4294901760
    %v494 = vsub.f32 %v73, %v493
    %v495 = vand.u32 %v494, 4294901760
    %496 = vmatpush1.msra.mxu0 %v495
    %497 = vmatprep.subr.mxu0 0.0
    %498 = vmatpush1.msra.mxu0 0.0
    %499 = vmatprep.subr.mxu0 0.0
    %500 = vmatpush1.msra.mxu0 0.0
    %501 = vmatprep.subr.mxu0 0.0
    %502 = vmatpush1.msra.mxu0 0.0
    %503 = vmatprep.subr.mxu0 0.0
    %504 = vmatpush1.msra.mxu0 0.0
    %505 = vmatprep.subr.mxu0 0.0
    %506 = vmatpush1.msra.mxu0 0.0
    %507 = vmatprep.subr.mxu0 0.0
    %508 = vmatpush1.msra.mxu0 0.0
    %509 = vmatprep.subr.mxu0 0.0
    %510 = vmatpush1.msra.mxu0 0.0
    %511 = vmatprep.subr.mxu0 0.0
    %512 = vmatpush1.msra.mxu0 0.0
    %513 = vmatprep.subr.mxu0 0.0
    %514 = vmatpush1.msra.mxu0 0.0
    %515 = vmatprep.subr.mxu0 0.0
    %516 = vmatpush1.msra.mxu0 0.0
    %517 = vmatprep.subr.mxu0 0.0
    %518 = vmatpush1.msra.mxu0 0.0
    %519 = vmatprep.subr.mxu0 0.0
    %520 = vmatpush1.msra.mxu0 0.0
    %521 = vmatprep.subr.mxu0 0.0
    %522 = vmatpush1.msra.mxu0 0.0
    %523 = vmatprep.subr.mxu0 0.0
    %524 = vmatpush1.msra.mxu0 0.0
    %525 = vmatprep.subr.mxu0 0.0
    %526 = vmatpush1.msra.mxu0 0.0
    %527 = vmatprep.subr.mxu0 0.0
    %528 = vmatpush1.msra.mxu0 0.0
    %529 = vmatprep.subr.mxu0 0.0
    %530 = vmatpush1.msra.mxu0 0.0
    %531 = vmatprep.subr.mxu0 0.0
    %532 = vmatpush1.msra.mxu0 0.0
    %533 = vmatprep.subr.mxu0 0.0
    %534 = vmatpush1.msra.mxu0 0.0
    %535 = vmatprep.subr.mxu0 0.0
    %536 = vmatpush1.msra.mxu0 0.0
    %537 = vmatprep.subr.mxu0 0.0
    %538 = vmatpush1.msra.mxu0 0.0
    %539 = vmatprep.subr.mxu0 0.0
    %540 = vmatpush1.msra.mxu0 0.0
    %541 = vmatprep.subr.mxu0 0.0
    %542 = vmatpush1.msra.mxu0 0.0
    %543 = vmatprep.subr.mxu0 0.0
    %544 = vmatpush1.msra.mxu0 0.0
    %545 = vmatprep.subr.mxu0 0.0
    %546 = vmatpush1.msra.mxu0 0.0
    %547 = vmatprep.subr.mxu0 0.0
    %548 = vmatpush1.msra.mxu0 0.0
    %549 = vmatprep.mubr.f32.mxu0 0.0
    %v550 = vand.u32 %v86, 4294901760
    %551 = vmatmul.mubr.f32.gmra.mrb[0].mxu0 %v550
    %v552 = vpop.f32.mrb[0].mxu0
    %v553 = vadd.f32 %v456, %v552
    %v554 = vpop.f32.mrb[0].mxu0
    %555 = vmatprep.mubr.f32.mxu0 0.0
    %v556 = vand.u32 %v89, 4294901760
    %557 = vmatmul.mubr.f32.gmra.mrb[0].mxu0 %v556
    %v558 = vpop.f32.mrb[0].mxu0
    %v559 = vadd.f32 %v464, %v558
    %v560 = vpop.f32.mrb[0].mxu0
    %561 = vdwg.mxu0
    %562 = vmatprep.subr.mxu0 0.0
    %v563 = vand.u32 %v43, 4294901760
    %564 = vmatpush1.msra.mxu0 %v563
    %565 = vmatprep.subr.mxu0 0.0
    %v566 = vand.u32 %v44, 4294901760
    %567 = vmatpush1.msra.mxu0 %v566
    %568 = vmatprep.subr.mxu0 0.0
    %v569 = vand.u32 %v45, 4294901760
    %570 = vmatpush1.msra.mxu0 %v569
    %571 = vmatprep.subr.mxu0 0.0
    %v572 = vand.u32 %v46, 4294901760
    %573 = vmatpush1.msra.mxu0 %v572
    %574 = vmatprep.subr.mxu0 0.0
    %v575 = vand.u32 %v72, 4294901760
    %576 = vmatpush1.msra.mxu0 %v575
    %577 = vmatprep.subr.mxu0 0.0
    %v578 = vand.u32 %v73, 4294901760
    %579 = vmatpush1.msra.mxu0 %v578
    %580 = vmatprep.subr.mxu0 0.0
    %581 = vmatpush1.msra.mxu0 0.0
    %582 = vmatprep.subr.mxu0 0.0
    %583 = vmatpush1.msra.mxu0 0.0
    %584 = vmatprep.subr.mxu0 0.0
    %585 = vmatpush1.msra.mxu0 0.0
    %586 = vmatprep.subr.mxu0 0.0
    %587 = vmatpush1.msra.mxu0 0.0
    %588 = vmatprep.subr.mxu0 0.0
    %589 = vmatpush1.msra.mxu0 0.0
    %590 = vmatprep.subr.mxu0 0.0
    %591 = vmatpush1.msra.mxu0 0.0
    %592 = vmatprep.subr.mxu0 0.0
    %593 = vmatpush1.msra.mxu0 0.0
    %594 = vmatprep.subr.mxu0 0.0
    %595 = vmatpush1.msra.mxu0 0.0
    %596 = vmatprep.subr.mxu0 0.0
    %597 = vmatpush1.msra.mxu0 0.0
    %598 = vmatprep.subr.mxu0 0.0
    %599 = vmatpush1.msra.mxu0 0.0
    %600 = vmatprep.subr.mxu0 0.0
    %601 = vmatpush1.msra.mxu0 0.0
    %602 = vmatprep.subr.mxu0 0.0
    %603 = vmatpush1.msra.mxu0 0.0
    %604 = vmatprep.subr.mxu0 0.0
    %605 = vmatpush1.msra.mxu0 0.0
    %606 = vmatprep.subr.mxu0 0.0
    %607 = vmatpush1.msra.mxu0 0.0
    %608 = vmatprep.subr.mxu0 0.0
    %609 = vmatpush1.msra.mxu0 0.0
    %610 = vmatprep.subr.mxu0 0.0
    %611 = vmatpush1.msra.mxu0 0.0
    %612 = vmatprep.subr.mxu0 0.0
    %613 = vmatpush1.msra.mxu0 0.0
    %614 = vmatprep.subr.mxu0 0.0
    %615 = vmatpush1.msra.mxu0 0.0
    %616 = vmatprep.subr.mxu0 0.0
    %617 = vmatpush1.msra.mxu0 0.0
    %618 = vmatprep.subr.mxu0 0.0
    %619 = vmatpush1.msra.mxu0 0.0
    %620 = vmatprep.subr.mxu0 0.0
    %621 = vmatpush1.msra.mxu0 0.0
    %622 = vmatprep.subr.mxu0 0.0
    %623 = vmatpush1.msra.mxu0 0.0
    %624 = vmatprep.subr.mxu0 0.0
    %625 = vmatpush1.msra.mxu0 0.0
    %626 = vmatprep.subr.mxu0 0.0
    %627 = vmatpush1.msra.mxu0 0.0
    %628 = vmatprep.subr.mxu0 0.0
    %629 = vmatpush1.msra.mxu0 0.0
    %630 = vmatprep.subr.mxu0 0.0
    %631 = vmatpush1.msra.mxu0 0.0
    %632 = vmatprep.mubr.f32.mxu0 0.0
    %v633 = vand.u32 %v86, 4294901760
    %634 = vmatmul.mubr.f32.gmra.mrb[0].mxu0 %v633
    %v635 = vpop.f32.mrb[0].mxu0
    %v636 = vadd.f32 %v553, %v635
    %v637 = vpop.f32.mrb[0].mxu0
    %638 = vmatprep.mubr.f32.mxu0 0.0
    %v639 = vand.u32 %v89, 4294901760
    %640 = vmatmul.mubr.f32.gmra.mrb[0].mxu0 %v639
    %v641 = vpop.f32.mrb[0].mxu0
    %v642 = vadd.f32 %v559, %v641
    %v643 = vpop.f32.mrb[0].mxu0
    %644 = vdwg.mxu0
    %v645 = vmul.f32 %v72, %v636
    %v646 = vmul.f32 %v73, %v642
    %v647 = vsel %vm61, %v645, 0.0
    %648 = vadd.xlane.f32.xlu0 %v647
    %v649 = vpop.xlane.xlu0 %648
    %v650 = vsel %vm61, %v646, 0.0
    %651 = vadd.xlane.f32.xlu0 %v650
    %v652 = vpop.xlane.xlu0 %651
    %v653 = vmul.f32 %v649, %v72
    %v654 = vmul.f32 %v652, %v73
    %v655 = vsub.f32 %v636, %v653
    %v656 = vsub.f32 %v642, %v654
    %v657 = vmul.f32 %v58, %v655
    %v658 = vmul.f32 %v58, %v656
    %v659 = vadd.f32 %v72, %v657
    %v660 = vadd.f32 %v73, %v658
    %v661 = vmul.f32 %v659, %v659
    %v662 = vmul.f32 %v660, %v660
    %v663 = vsel %vm61, %v661, 0.0
    %664 = vadd.xlane.f32.xlu0 %v663
    %v665 = vpop.xlane.xlu0 %664
    %v666 = vsel %vm61, %v662, 0.0
    %667 = vadd.xlane.f32.xlu0 %v666
    %v668 = vpop.xlane.xlu0 %667
    %v669 = vmax.f32 %v665, 1e-24
    %v670 = vmax.f32 %v668, 1e-24
    %v671 = vrsqrt.pop %v669
    %v672 = vrsqrt.pop %v670
    %v673 = vmul.f32 %v659, %v671
    %v674 = vmul.f32 %v660, %v672
    %v675 = vsel %vm61, %v673, %v77
    %v676 = vsel %vm61, %v674, %v79
    %v678 = vsel %vm84, %v675, 0
    %v681 = vsel %vm84, %v676, 0
    %683 = vmatprep.subr.mxu0 0.0
    %v684 = vand.u32 %v43, 4294901760
    %685 = vmatpush1.msra.mxu0 %v684
    %686 = vmatprep.subr.mxu0 0.0
    %v687 = vand.u32 %v44, 4294901760
    %688 = vmatpush1.msra.mxu0 %v687
    %689 = vmatprep.subr.mxu0 0.0
    %v690 = vand.u32 %v45, 4294901760
    %691 = vmatpush1.msra.mxu0 %v690
    %692 = vmatprep.subr.mxu0 0.0
    %v693 = vand.u32 %v46, 4294901760
    %694 = vmatpush1.msra.mxu0 %v693
    %695 = vmatprep.subr.mxu0 0.0
    %v696 = vand.u32 %v673, 4294901760
    %697 = vmatpush1.msra.mxu0 %v696
    %698 = vmatprep.subr.mxu0 0.0
    %v699 = vand.u32 %v674, 4294901760
    %700 = vmatpush1.msra.mxu0 %v699
    %701 = vmatprep.subr.mxu0 0.0
    %702 = vmatpush1.msra.mxu0 0.0
    %703 = vmatprep.subr.mxu0 0.0
    %704 = vmatpush1.msra.mxu0 0.0
    %705 = vmatprep.subr.mxu0 0.0
    %706 = vmatpush1.msra.mxu0 0.0
    %707 = vmatprep.subr.mxu0 0.0
    %708 = vmatpush1.msra.mxu0 0.0
    %709 = vmatprep.subr.mxu0 0.0
    %710 = vmatpush1.msra.mxu0 0.0
    %711 = vmatprep.subr.mxu0 0.0
    %712 = vmatpush1.msra.mxu0 0.0
    %713 = vmatprep.subr.mxu0 0.0
    %714 = vmatpush1.msra.mxu0 0.0
    %715 = vmatprep.subr.mxu0 0.0
    %716 = vmatpush1.msra.mxu0 0.0
    %717 = vmatprep.subr.mxu0 0.0
    %718 = vmatpush1.msra.mxu0 0.0
    %719 = vmatprep.subr.mxu0 0.0
    %720 = vmatpush1.msra.mxu0 0.0
    %721 = vmatprep.subr.mxu0 0.0
    %722 = vmatpush1.msra.mxu0 0.0
    %723 = vmatprep.subr.mxu0 0.0
    %724 = vmatpush1.msra.mxu0 0.0
    %725 = vmatprep.subr.mxu0 0.0
    %726 = vmatpush1.msra.mxu0 0.0
    %727 = vmatprep.subr.mxu0 0.0
    %728 = vmatpush1.msra.mxu0 0.0
    %729 = vmatprep.subr.mxu0 0.0
    %730 = vmatpush1.msra.mxu0 0.0
    %731 = vmatprep.subr.mxu0 0.0
    %732 = vmatpush1.msra.mxu0 0.0
    %733 = vmatprep.subr.mxu0 0.0
    %734 = vmatpush1.msra.mxu0 0.0
    %735 = vmatprep.subr.mxu0 0.0
    %736 = vmatpush1.msra.mxu0 0.0
    %737 = vmatprep.subr.mxu0 0.0
    %738 = vmatpush1.msra.mxu0 0.0
    %739 = vmatprep.subr.mxu0 0.0
    %740 = vmatpush1.msra.mxu0 0.0
    %741 = vmatprep.subr.mxu0 0.0
    %742 = vmatpush1.msra.mxu0 0.0
    %743 = vmatprep.subr.mxu0 0.0
    %744 = vmatpush1.msra.mxu0 0.0
    %745 = vmatprep.subr.mxu0 0.0
    %746 = vmatpush1.msra.mxu0 0.0
    %747 = vmatprep.subr.mxu0 0.0
    %748 = vmatpush1.msra.mxu0 0.0
    %749 = vmatprep.subr.mxu0 0.0
    %750 = vmatpush1.msra.mxu0 0.0
    %751 = vmatprep.subr.mxu0 0.0
    %752 = vmatpush1.msra.mxu0 0.0
    %753 = vmatprep.mubr.f32.mxu0 0.0
    %v754 = vand.u32 %v678, 4294901760
    %v755 = vsub.f32 %v678, %v754
    %v756 = vand.u32 %v755, 4294901760
    %v757 = vsub.f32 %v755, %v756
    %v758 = vand.u32 %v757, 4294901760
    %759 = vmatmul.mubr.f32.gmra.mrb[0].mxu0 %v758
    %v760 = vpop.f32.mrb[0].mxu0
    %v761 = vadd.f32 %v47, %v760
    %v762 = vpop.f32.mrb[0].mxu0
    %763 = vmatprep.mubr.f32.mxu0 0.0
    %v764 = vand.u32 %v681, 4294901760
    %v765 = vsub.f32 %v681, %v764
    %v766 = vand.u32 %v765, 4294901760
    %v767 = vsub.f32 %v765, %v766
    %v768 = vand.u32 %v767, 4294901760
    %769 = vmatmul.mubr.f32.gmra.mrb[0].mxu0 %v768
    %v770 = vpop.f32.mrb[0].mxu0
    %v771 = vadd.f32 %v47, %v770
    %v772 = vpop.f32.mrb[0].mxu0
    %773 = vdwg.mxu0
    %774 = vmatprep.subr.mxu0 0.0
    %v775 = vand.u32 %v43, 4294901760
    %v776 = vsub.f32 %v43, %v775
    %v777 = vand.u32 %v776, 4294901760
    %v778 = vsub.f32 %v776, %v777
    %v779 = vand.u32 %v778, 4294901760
    %780 = vmatpush1.msra.mxu0 %v779
    %781 = vmatprep.subr.mxu0 0.0
    %v782 = vand.u32 %v44, 4294901760
    %v783 = vsub.f32 %v44, %v782
    %v784 = vand.u32 %v783, 4294901760
    %v785 = vsub.f32 %v783, %v784
    %v786 = vand.u32 %v785, 4294901760
    %787 = vmatpush1.msra.mxu0 %v786
    %788 = vmatprep.subr.mxu0 0.0
    %v789 = vand.u32 %v45, 4294901760
    %v790 = vsub.f32 %v45, %v789
    %v791 = vand.u32 %v790, 4294901760
    %v792 = vsub.f32 %v790, %v791
    %v793 = vand.u32 %v792, 4294901760
    %794 = vmatpush1.msra.mxu0 %v793
    %795 = vmatprep.subr.mxu0 0.0
    %v796 = vand.u32 %v46, 4294901760
    %v797 = vsub.f32 %v46, %v796
    %v798 = vand.u32 %v797, 4294901760
    %v799 = vsub.f32 %v797, %v798
    %v800 = vand.u32 %v799, 4294901760
    %801 = vmatpush1.msra.mxu0 %v800
    %802 = vmatprep.subr.mxu0 0.0
    %v803 = vand.u32 %v673, 4294901760
    %v804 = vsub.f32 %v673, %v803
    %v805 = vand.u32 %v804, 4294901760
    %v806 = vsub.f32 %v804, %v805
    %v807 = vand.u32 %v806, 4294901760
    %808 = vmatpush1.msra.mxu0 %v807
    %809 = vmatprep.subr.mxu0 0.0
    %v810 = vand.u32 %v674, 4294901760
    %v811 = vsub.f32 %v674, %v810
    %v812 = vand.u32 %v811, 4294901760
    %v813 = vsub.f32 %v811, %v812
    %v814 = vand.u32 %v813, 4294901760
    %815 = vmatpush1.msra.mxu0 %v814
    %816 = vmatprep.subr.mxu0 0.0
    %817 = vmatpush1.msra.mxu0 0.0
    %818 = vmatprep.subr.mxu0 0.0
    %819 = vmatpush1.msra.mxu0 0.0
    %820 = vmatprep.subr.mxu0 0.0
    %821 = vmatpush1.msra.mxu0 0.0
    %822 = vmatprep.subr.mxu0 0.0
    %823 = vmatpush1.msra.mxu0 0.0
    %824 = vmatprep.subr.mxu0 0.0
    %825 = vmatpush1.msra.mxu0 0.0
    %826 = vmatprep.subr.mxu0 0.0
    %827 = vmatpush1.msra.mxu0 0.0
    %828 = vmatprep.subr.mxu0 0.0
    %829 = vmatpush1.msra.mxu0 0.0
    %830 = vmatprep.subr.mxu0 0.0
    %831 = vmatpush1.msra.mxu0 0.0
    %832 = vmatprep.subr.mxu0 0.0
    %833 = vmatpush1.msra.mxu0 0.0
    %834 = vmatprep.subr.mxu0 0.0
    %835 = vmatpush1.msra.mxu0 0.0
    %836 = vmatprep.subr.mxu0 0.0
    %837 = vmatpush1.msra.mxu0 0.0
    %838 = vmatprep.subr.mxu0 0.0
    %839 = vmatpush1.msra.mxu0 0.0
    %840 = vmatprep.subr.mxu0 0.0
    %841 = vmatpush1.msra.mxu0 0.0
    %842 = vmatprep.subr.mxu0 0.0
    %843 = vmatpush1.msra.mxu0 0.0
    %844 = vmatprep.subr.mxu0 0.0
    %845 = vmatpush1.msra.mxu0 0.0
    %846 = vmatprep.subr.mxu0 0.0
    %847 = vmatpush1.msra.mxu0 0.0
    %848 = vmatprep.subr.mxu0 0.0
    %849 = vmatpush1.msra.mxu0 0.0
    %850 = vmatprep.subr.mxu0 0.0
    %851 = vmatpush1.msra.mxu0 0.0
    %852 = vmatprep.subr.mxu0 0.0
    %853 = vmatpush1.msra.mxu0 0.0
    %854 = vmatprep.subr.mxu0 0.0
    %855 = vmatpush1.msra.mxu0 0.0
    %856 = vmatprep.subr.mxu0 0.0
    %857 = vmatpush1.msra.mxu0 0.0
    %858 = vmatprep.subr.mxu0 0.0
    %859 = vmatpush1.msra.mxu0 0.0
    %860 = vmatprep.subr.mxu0 0.0
    %861 = vmatpush1.msra.mxu0 0.0
    %862 = vmatprep.subr.mxu0 0.0
    %863 = vmatpush1.msra.mxu0 0.0
    %864 = vmatprep.subr.mxu0 0.0
    %865 = vmatpush1.msra.mxu0 0.0
    %866 = vmatprep.subr.mxu0 0.0
    %867 = vmatpush1.msra.mxu0 0.0
    %868 = vmatprep.mubr.f32.mxu0 0.0
    %v869 = vand.u32 %v678, 4294901760
    %870 = vmatmul.mubr.f32.gmra.mrb[0].mxu0 %v869
    %v871 = vpop.f32.mrb[0].mxu0
    %v872 = vadd.f32 %v761, %v871
    %v873 = vpop.f32.mrb[0].mxu0
    %874 = vmatprep.mubr.f32.mxu0 0.0
    %v875 = vand.u32 %v681, 4294901760
    %876 = vmatmul.mubr.f32.gmra.mrb[0].mxu0 %v875
    %v877 = vpop.f32.mrb[0].mxu0
    %v878 = vadd.f32 %v771, %v877
    %v879 = vpop.f32.mrb[0].mxu0
    %880 = vdwg.mxu0
    %881 = vmatprep.subr.mxu0 0.0
    %v882 = vand.u32 %v43, 4294901760
    %v883 = vsub.f32 %v43, %v882
    %884 = vmatpush1.msra.mxu0 %v883
    %885 = vmatprep.subr.mxu0 0.0
    %v886 = vand.u32 %v44, 4294901760
    %v887 = vsub.f32 %v44, %v886
    %888 = vmatpush1.msra.mxu0 %v887
    %889 = vmatprep.subr.mxu0 0.0
    %v890 = vand.u32 %v45, 4294901760
    %v891 = vsub.f32 %v45, %v890
    %892 = vmatpush1.msra.mxu0 %v891
    %893 = vmatprep.subr.mxu0 0.0
    %v894 = vand.u32 %v46, 4294901760
    %v895 = vsub.f32 %v46, %v894
    %896 = vmatpush1.msra.mxu0 %v895
    %897 = vmatprep.subr.mxu0 0.0
    %v898 = vand.u32 %v673, 4294901760
    %v899 = vsub.f32 %v673, %v898
    %900 = vmatpush1.msra.mxu0 %v899
    %901 = vmatprep.subr.mxu0 0.0
    %v902 = vand.u32 %v674, 4294901760
    %v903 = vsub.f32 %v674, %v902
    %904 = vmatpush1.msra.mxu0 %v903
    %905 = vmatprep.subr.mxu0 0.0
    %906 = vmatpush1.msra.mxu0 0.0
    %907 = vmatprep.subr.mxu0 0.0
    %908 = vmatpush1.msra.mxu0 0.0
    %909 = vmatprep.subr.mxu0 0.0
    %910 = vmatpush1.msra.mxu0 0.0
    %911 = vmatprep.subr.mxu0 0.0
    %912 = vmatpush1.msra.mxu0 0.0
    %913 = vmatprep.subr.mxu0 0.0
    %914 = vmatpush1.msra.mxu0 0.0
    %915 = vmatprep.subr.mxu0 0.0
    %916 = vmatpush1.msra.mxu0 0.0
    %917 = vmatprep.subr.mxu0 0.0
    %918 = vmatpush1.msra.mxu0 0.0
    %919 = vmatprep.subr.mxu0 0.0
    %920 = vmatpush1.msra.mxu0 0.0
    %921 = vmatprep.subr.mxu0 0.0
    %922 = vmatpush1.msra.mxu0 0.0
    %923 = vmatprep.subr.mxu0 0.0
    %924 = vmatpush1.msra.mxu0 0.0
    %925 = vmatprep.subr.mxu0 0.0
    %926 = vmatpush1.msra.mxu0 0.0
    %927 = vmatprep.subr.mxu0 0.0
    %928 = vmatpush1.msra.mxu0 0.0
    %929 = vmatprep.subr.mxu0 0.0
    %930 = vmatpush1.msra.mxu0 0.0
    %931 = vmatprep.subr.mxu0 0.0
    %932 = vmatpush1.msra.mxu0 0.0
    %933 = vmatprep.subr.mxu0 0.0
    %934 = vmatpush1.msra.mxu0 0.0
    %935 = vmatprep.subr.mxu0 0.0
    %936 = vmatpush1.msra.mxu0 0.0
    %937 = vmatprep.subr.mxu0 0.0
    %938 = vmatpush1.msra.mxu0 0.0
    %939 = vmatprep.subr.mxu0 0.0
    %940 = vmatpush1.msra.mxu0 0.0
    %941 = vmatprep.subr.mxu0 0.0
    %942 = vmatpush1.msra.mxu0 0.0
    %943 = vmatprep.subr.mxu0 0.0
    %944 = vmatpush1.msra.mxu0 0.0
    %945 = vmatprep.subr.mxu0 0.0
    %946 = vmatpush1.msra.mxu0 0.0
    %947 = vmatprep.subr.mxu0 0.0
    %948 = vmatpush1.msra.mxu0 0.0
    %949 = vmatprep.subr.mxu0 0.0
    %950 = vmatpush1.msra.mxu0 0.0
    %951 = vmatprep.subr.mxu0 0.0
    %952 = vmatpush1.msra.mxu0 0.0
    %953 = vmatprep.subr.mxu0 0.0
    %954 = vmatpush1.msra.mxu0 0.0
    %955 = vmatprep.subr.mxu0 0.0
    %956 = vmatpush1.msra.mxu0 0.0
    %957 = vmatprep.mubr.f32.mxu0 0.0
    %v958 = vand.u32 %v678, 4294901760
    %v959 = vsub.f32 %v678, %v958
    %960 = vmatmul.mubr.f32.gmra.mrb[0].mxu0 %v959
    %v961 = vpop.f32.mrb[0].mxu0
    %v962 = vadd.f32 %v872, %v961
    %v963 = vpop.f32.mrb[0].mxu0
    %964 = vmatprep.mubr.f32.mxu0 0.0
    %v965 = vand.u32 %v681, 4294901760
    %v966 = vsub.f32 %v681, %v965
    %967 = vmatmul.mubr.f32.gmra.mrb[0].mxu0 %v966
    %v968 = vpop.f32.mrb[0].mxu0
    %v969 = vadd.f32 %v878, %v968
    %v970 = vpop.f32.mrb[0].mxu0
    %971 = vdwg.mxu0
    %972 = vmatprep.subr.mxu0 0.0
    %v973 = vand.u32 %v43, 4294901760
    %974 = vmatpush1.msra.mxu0 %v973
    %975 = vmatprep.subr.mxu0 0.0
    %v976 = vand.u32 %v44, 4294901760
    %977 = vmatpush1.msra.mxu0 %v976
    %978 = vmatprep.subr.mxu0 0.0
    %v979 = vand.u32 %v45, 4294901760
    %980 = vmatpush1.msra.mxu0 %v979
    %981 = vmatprep.subr.mxu0 0.0
    %v982 = vand.u32 %v46, 4294901760
    %983 = vmatpush1.msra.mxu0 %v982
    %984 = vmatprep.subr.mxu0 0.0
    %v985 = vand.u32 %v673, 4294901760
    %986 = vmatpush1.msra.mxu0 %v985
    %987 = vmatprep.subr.mxu0 0.0
    %v988 = vand.u32 %v674, 4294901760
    %989 = vmatpush1.msra.mxu0 %v988
    %990 = vmatprep.subr.mxu0 0.0
    %991 = vmatpush1.msra.mxu0 0.0
    %992 = vmatprep.subr.mxu0 0.0
    %993 = vmatpush1.msra.mxu0 0.0
    %994 = vmatprep.subr.mxu0 0.0
    %995 = vmatpush1.msra.mxu0 0.0
    %996 = vmatprep.subr.mxu0 0.0
    %997 = vmatpush1.msra.mxu0 0.0
    %998 = vmatprep.subr.mxu0 0.0
    %999 = vmatpush1.msra.mxu0 0.0
    %1000 = vmatprep.subr.mxu0 0.0
    %1001 = vmatpush1.msra.mxu0 0.0
    %1002 = vmatprep.subr.mxu0 0.0
    %1003 = vmatpush1.msra.mxu0 0.0
    %1004 = vmatprep.subr.mxu0 0.0
    %1005 = vmatpush1.msra.mxu0 0.0
    %1006 = vmatprep.subr.mxu0 0.0
    %1007 = vmatpush1.msra.mxu0 0.0
    %1008 = vmatprep.subr.mxu0 0.0
    %1009 = vmatpush1.msra.mxu0 0.0
    %1010 = vmatprep.subr.mxu0 0.0
    %1011 = vmatpush1.msra.mxu0 0.0
    %1012 = vmatprep.subr.mxu0 0.0
    %1013 = vmatpush1.msra.mxu0 0.0
    %1014 = vmatprep.subr.mxu0 0.0
    %1015 = vmatpush1.msra.mxu0 0.0
    %1016 = vmatprep.subr.mxu0 0.0
    %1017 = vmatpush1.msra.mxu0 0.0
    %1018 = vmatprep.subr.mxu0 0.0
    %1019 = vmatpush1.msra.mxu0 0.0
    %1020 = vmatprep.subr.mxu0 0.0
    %1021 = vmatpush1.msra.mxu0 0.0
    %1022 = vmatprep.subr.mxu0 0.0
    %1023 = vmatpush1.msra.mxu0 0.0
    %1024 = vmatprep.subr.mxu0 0.0
    %1025 = vmatpush1.msra.mxu0 0.0
    %1026 = vmatprep.subr.mxu0 0.0
    %1027 = vmatpush1.msra.mxu0 0.0
    %1028 = vmatprep.subr.mxu0 0.0
    %1029 = vmatpush1.msra.mxu0 0.0
    %1030 = vmatprep.subr.mxu0 0.0
    %1031 = vmatpush1.msra.mxu0 0.0
    %1032 = vmatprep.subr.mxu0 0.0
    %1033 = vmatpush1.msra.mxu0 0.0
    %1034 = vmatprep.subr.mxu0 0.0
    %1035 = vmatpush1.msra.mxu0 0.0
    %1036 = vmatprep.subr.mxu0 0.0
    %1037 = vmatpush1.msra.mxu0 0.0
    %1038 = vmatprep.subr.mxu0 0.0
    %1039 = vmatpush1.msra.mxu0 0.0
    %1040 = vmatprep.subr.mxu0 0.0
    %1041 = vmatpush1.msra.mxu0 0.0
    %1042 = vmatprep.mubr.f32.mxu0 0.0
    %v1043 = vand.u32 %v678, 4294901760
    %v1044 = vsub.f32 %v678, %v1043
    %v1045 = vand.u32 %v1044, 4294901760
    %1046 = vmatmul.mubr.f32.gmra.mrb[0].mxu0 %v1045
    %v1047 = vpop.f32.mrb[0].mxu0
    %v1048 = vadd.f32 %v962, %v1047
    %v1049 = vpop.f32.mrb[0].mxu0
    %1050 = vmatprep.mubr.f32.mxu0 0.0
    %v1051 = vand.u32 %v681, 4294901760
    %v1052 = vsub.f32 %v681, %v1051
    %v1053 = vand.u32 %v1052, 4294901760
    %1054 = vmatmul.mubr.f32.gmra.mrb[0].mxu0 %v1053
    %v1055 = vpop.f32.mrb[0].mxu0
    %v1056 = vadd.f32 %v969, %v1055
    %v1057 = vpop.f32.mrb[0].mxu0
    %1058 = vdwg.mxu0
    %1059 = vmatprep.subr.mxu0 0.0
    %v1060 = vand.u32 %v43, 4294901760
    %v1061 = vsub.f32 %v43, %v1060
    %v1062 = vand.u32 %v1061, 4294901760
    %1063 = vmatpush1.msra.mxu0 %v1062
    %1064 = vmatprep.subr.mxu0 0.0
    %v1065 = vand.u32 %v44, 4294901760
    %v1066 = vsub.f32 %v44, %v1065
    %v1067 = vand.u32 %v1066, 4294901760
    %1068 = vmatpush1.msra.mxu0 %v1067
    %1069 = vmatprep.subr.mxu0 0.0
    %v1070 = vand.u32 %v45, 4294901760
    %v1071 = vsub.f32 %v45, %v1070
    %v1072 = vand.u32 %v1071, 4294901760
    %1073 = vmatpush1.msra.mxu0 %v1072
    %1074 = vmatprep.subr.mxu0 0.0
    %v1075 = vand.u32 %v46, 4294901760
    %v1076 = vsub.f32 %v46, %v1075
    %v1077 = vand.u32 %v1076, 4294901760
    %1078 = vmatpush1.msra.mxu0 %v1077
    %1079 = vmatprep.subr.mxu0 0.0
    %v1080 = vand.u32 %v673, 4294901760
    %v1081 = vsub.f32 %v673, %v1080
    %v1082 = vand.u32 %v1081, 4294901760
    %1083 = vmatpush1.msra.mxu0 %v1082
    %1084 = vmatprep.subr.mxu0 0.0
    %v1085 = vand.u32 %v674, 4294901760
    %v1086 = vsub.f32 %v674, %v1085
    %v1087 = vand.u32 %v1086, 4294901760
    %1088 = vmatpush1.msra.mxu0 %v1087
    %1089 = vmatprep.subr.mxu0 0.0
    %1090 = vmatpush1.msra.mxu0 0.0
    %1091 = vmatprep.subr.mxu0 0.0
    %1092 = vmatpush1.msra.mxu0 0.0
    %1093 = vmatprep.subr.mxu0 0.0
    %1094 = vmatpush1.msra.mxu0 0.0
    %1095 = vmatprep.subr.mxu0 0.0
    %1096 = vmatpush1.msra.mxu0 0.0
    %1097 = vmatprep.subr.mxu0 0.0
    %1098 = vmatpush1.msra.mxu0 0.0
    %1099 = vmatprep.subr.mxu0 0.0
    %1100 = vmatpush1.msra.mxu0 0.0
    %1101 = vmatprep.subr.mxu0 0.0
    %1102 = vmatpush1.msra.mxu0 0.0
    %1103 = vmatprep.subr.mxu0 0.0
    %1104 = vmatpush1.msra.mxu0 0.0
    %1105 = vmatprep.subr.mxu0 0.0
    %1106 = vmatpush1.msra.mxu0 0.0
    %1107 = vmatprep.subr.mxu0 0.0
    %1108 = vmatpush1.msra.mxu0 0.0
    %1109 = vmatprep.subr.mxu0 0.0
    %1110 = vmatpush1.msra.mxu0 0.0
    %1111 = vmatprep.subr.mxu0 0.0
    %1112 = vmatpush1.msra.mxu0 0.0
    %1113 = vmatprep.subr.mxu0 0.0
    %1114 = vmatpush1.msra.mxu0 0.0
    %1115 = vmatprep.subr.mxu0 0.0
    %1116 = vmatpush1.msra.mxu0 0.0
    %1117 = vmatprep.subr.mxu0 0.0
    %1118 = vmatpush1.msra.mxu0 0.0
    %1119 = vmatprep.subr.mxu0 0.0
    %1120 = vmatpush1.msra.mxu0 0.0
    %1121 = vmatprep.subr.mxu0 0.0
    %1122 = vmatpush1.msra.mxu0 0.0
    %1123 = vmatprep.subr.mxu0 0.0
    %1124 = vmatpush1.msra.mxu0 0.0
    %1125 = vmatprep.subr.mxu0 0.0
    %1126 = vmatpush1.msra.mxu0 0.0
    %1127 = vmatprep.subr.mxu0 0.0
    %1128 = vmatpush1.msra.mxu0 0.0
    %1129 = vmatprep.subr.mxu0 0.0
    %1130 = vmatpush1.msra.mxu0 0.0
    %1131 = vmatprep.subr.mxu0 0.0
    %1132 = vmatpush1.msra.mxu0 0.0
    %1133 = vmatprep.subr.mxu0 0.0
    %1134 = vmatpush1.msra.mxu0 0.0
    %1135 = vmatprep.subr.mxu0 0.0
    %1136 = vmatpush1.msra.mxu0 0.0
    %1137 = vmatprep.subr.mxu0 0.0
    %1138 = vmatpush1.msra.mxu0 0.0
    %1139 = vmatprep.subr.mxu0 0.0
    %1140 = vmatpush1.msra.mxu0 0.0
    %1141 = vmatprep.mubr.f32.mxu0 0.0
    %v1142 = vand.u32 %v678, 4294901760
    %1143 = vmatmul.mubr.f32.gmra.mrb[0].mxu0 %v1142
    %v1144 = vpop.f32.mrb[0].mxu0
    %v1145 = vadd.f32 %v1048, %v1144
    %v1146 = vpop.f32.mrb[0].mxu0
    %1147 = vmatprep.mubr.f32.mxu0 0.0
    %v1148 = vand.u32 %v681, 4294901760
    %1149 = vmatmul.mubr.f32.gmra.mrb[0].mxu0 %v1148
    %v1150 = vpop.f32.mrb[0].mxu0
    %v1151 = vadd.f32 %v1056, %v1150
    %v1152 = vpop.f32.mrb[0].mxu0
    %1153 = vdwg.mxu0
    %1154 = vmatprep.subr.mxu0 0.0
    %v1155 = vand.u32 %v43, 4294901760
    %1156 = vmatpush1.msra.mxu0 %v1155
    %1157 = vmatprep.subr.mxu0 0.0
    %v1158 = vand.u32 %v44, 4294901760
    %1159 = vmatpush1.msra.mxu0 %v1158
    %1160 = vmatprep.subr.mxu0 0.0
    %v1161 = vand.u32 %v45, 4294901760
    %1162 = vmatpush1.msra.mxu0 %v1161
    %1163 = vmatprep.subr.mxu0 0.0
    %v1164 = vand.u32 %v46, 4294901760
    %1165 = vmatpush1.msra.mxu0 %v1164
    %1166 = vmatprep.subr.mxu0 0.0
    %v1167 = vand.u32 %v673, 4294901760
    %1168 = vmatpush1.msra.mxu0 %v1167
    %1169 = vmatprep.subr.mxu0 0.0
    %v1170 = vand.u32 %v674, 4294901760
    %1171 = vmatpush1.msra.mxu0 %v1170
    %1172 = vmatprep.subr.mxu0 0.0
    %1173 = vmatpush1.msra.mxu0 0.0
    %1174 = vmatprep.subr.mxu0 0.0
    %1175 = vmatpush1.msra.mxu0 0.0
    %1176 = vmatprep.subr.mxu0 0.0
    %1177 = vmatpush1.msra.mxu0 0.0
    %1178 = vmatprep.subr.mxu0 0.0
    %1179 = vmatpush1.msra.mxu0 0.0
    %1180 = vmatprep.subr.mxu0 0.0
    %1181 = vmatpush1.msra.mxu0 0.0
    %1182 = vmatprep.subr.mxu0 0.0
    %1183 = vmatpush1.msra.mxu0 0.0
    %1184 = vmatprep.subr.mxu0 0.0
    %1185 = vmatpush1.msra.mxu0 0.0
    %1186 = vmatprep.subr.mxu0 0.0
    %1187 = vmatpush1.msra.mxu0 0.0
    %1188 = vmatprep.subr.mxu0 0.0
    %1189 = vmatpush1.msra.mxu0 0.0
    %1190 = vmatprep.subr.mxu0 0.0
    %1191 = vmatpush1.msra.mxu0 0.0
    %1192 = vmatprep.subr.mxu0 0.0
    %1193 = vmatpush1.msra.mxu0 0.0
    %1194 = vmatprep.subr.mxu0 0.0
    %1195 = vmatpush1.msra.mxu0 0.0
    %1196 = vmatprep.subr.mxu0 0.0
    %1197 = vmatpush1.msra.mxu0 0.0
    %1198 = vmatprep.subr.mxu0 0.0
    %1199 = vmatpush1.msra.mxu0 0.0
    %1200 = vmatprep.subr.mxu0 0.0
    %1201 = vmatpush1.msra.mxu0 0.0
    %1202 = vmatprep.subr.mxu0 0.0
    %1203 = vmatpush1.msra.mxu0 0.0
    %1204 = vmatprep.subr.mxu0 0.0
    %1205 = vmatpush1.msra.mxu0 0.0
    %1206 = vmatprep.subr.mxu0 0.0
    %1207 = vmatpush1.msra.mxu0 0.0
    %1208 = vmatprep.subr.mxu0 0.0
    %1209 = vmatpush1.msra.mxu0 0.0
    %1210 = vmatprep.subr.mxu0 0.0
    %1211 = vmatpush1.msra.mxu0 0.0
    %1212 = vmatprep.subr.mxu0 0.0
    %1213 = vmatpush1.msra.mxu0 0.0
    %1214 = vmatprep.subr.mxu0 0.0
    %1215 = vmatpush1.msra.mxu0 0.0
    %1216 = vmatprep.subr.mxu0 0.0
    %1217 = vmatpush1.msra.mxu0 0.0
    %1218 = vmatprep.subr.mxu0 0.0
    %1219 = vmatpush1.msra.mxu0 0.0
    %1220 = vmatprep.subr.mxu0 0.0
    %1221 = vmatpush1.msra.mxu0 0.0
    %1222 = vmatprep.subr.mxu0 0.0
    %1223 = vmatpush1.msra.mxu0 0.0
    %1224 = vmatprep.mubr.f32.mxu0 0.0
    %v1225 = vand.u32 %v678, 4294901760
    %1226 = vmatmul.mubr.f32.gmra.mrb[0].mxu0 %v1225
    %v1227 = vpop.f32.mrb[0].mxu0
    %v1228 = vadd.f32 %v1145, %v1227
    %v1229 = vpop.f32.mrb[0].mxu0
    %1230 = vmatprep.mubr.f32.mxu0 0.0
    %v1231 = vand.u32 %v681, 4294901760
    %1232 = vmatmul.mubr.f32.gmra.mrb[0].mxu0 %v1231
    %v1233 = vpop.f32.mrb[0].mxu0
    %v1234 = vadd.f32 %v1151, %v1233
    %v1235 = vpop.f32.mrb[0].mxu0
    %1236 = vdwg.mxu0
    %v1237 = vmul.f32 %v673, %v1228
    %v1238 = vmul.f32 %v674, %v1234
    %v1239 = vsel %vm61, %v1237, 0.0
    %1240 = vadd.xlane.f32.xlu0 %v1239
    %v1241 = vpop.xlane.xlu0 %1240
    %v1242 = vsel %vm61, %v1238, 0.0
    %1243 = vadd.xlane.f32.xlu0 %v1242
    %v1244 = vpop.xlane.xlu0 %1243
    %v1245 = vmul.f32 %v1241, %v673
    %v1246 = vmul.f32 %v1244, %v674
    %v1247 = vsub.f32 %v1228, %v1245
    %v1248 = vsub.f32 %v1234, %v1246
    %v1249 = vmul.f32 %v58, %v1247
    %v1250 = vmul.f32 %v58, %v1248
    %v1251 = vadd.f32 %v673, %v1249
    %v1252 = vadd.f32 %v674, %v1250
    %v1253 = vmul.f32 %v1251, %v1251
    %v1254 = vmul.f32 %v1252, %v1252
    %v1255 = vsel %vm61, %v1253, 0.0
    %1256 = vadd.xlane.f32.xlu0 %v1255
    %v1257 = vpop.xlane.xlu0 %1256
    %v1258 = vsel %vm61, %v1254, 0.0
    %1259 = vadd.xlane.f32.xlu0 %v1258
    %v1260 = vpop.xlane.xlu0 %1259
    %v1261 = vmax.f32 %v1257, 1e-24
    %v1262 = vmax.f32 %v1260, 1e-24
    %v1263 = vrsqrt.pop %v1261
    %v1264 = vrsqrt.pop %v1262
    %v1265 = vmul.f32 %v1251, %v1263
    %v1266 = vmul.f32 %v1252, %v1264
    %v1267 = vsel %vm61, %v1265, %v77
    %v1268 = vsel %vm61, %v1266, %v79
    %v1270 = vsel %vm84, %v1267, 0
    %v1273 = vsel %vm84, %v1268, 0
    %1275 = vmatprep.subr.mxu0 0.0
    %v1276 = vand.u32 %v43, 4294901760
    %1277 = vmatpush1.msra.mxu0 %v1276
    %1278 = vmatprep.subr.mxu0 0.0
    %v1279 = vand.u32 %v44, 4294901760
    %1280 = vmatpush1.msra.mxu0 %v1279
    %1281 = vmatprep.subr.mxu0 0.0
    %v1282 = vand.u32 %v45, 4294901760
    %1283 = vmatpush1.msra.mxu0 %v1282
    %1284 = vmatprep.subr.mxu0 0.0
    %v1285 = vand.u32 %v46, 4294901760
    %1286 = vmatpush1.msra.mxu0 %v1285
    %1287 = vmatprep.subr.mxu0 0.0
    %v1288 = vand.u32 %v1265, 4294901760
    %1289 = vmatpush1.msra.mxu0 %v1288
    %1290 = vmatprep.subr.mxu0 0.0
    %v1291 = vand.u32 %v1266, 4294901760
    %1292 = vmatpush1.msra.mxu0 %v1291
    %1293 = vmatprep.subr.mxu0 0.0
    %1294 = vmatpush1.msra.mxu0 0.0
    %1295 = vmatprep.subr.mxu0 0.0
    %1296 = vmatpush1.msra.mxu0 0.0
    %1297 = vmatprep.subr.mxu0 0.0
    %1298 = vmatpush1.msra.mxu0 0.0
    %1299 = vmatprep.subr.mxu0 0.0
    %1300 = vmatpush1.msra.mxu0 0.0
    %1301 = vmatprep.subr.mxu0 0.0
    %1302 = vmatpush1.msra.mxu0 0.0
    %1303 = vmatprep.subr.mxu0 0.0
    %1304 = vmatpush1.msra.mxu0 0.0
    %1305 = vmatprep.subr.mxu0 0.0
    %1306 = vmatpush1.msra.mxu0 0.0
    %1307 = vmatprep.subr.mxu0 0.0
    %1308 = vmatpush1.msra.mxu0 0.0
    %1309 = vmatprep.subr.mxu0 0.0
    %1310 = vmatpush1.msra.mxu0 0.0
    %1311 = vmatprep.subr.mxu0 0.0
    %1312 = vmatpush1.msra.mxu0 0.0
    %1313 = vmatprep.subr.mxu0 0.0
    %1314 = vmatpush1.msra.mxu0 0.0
    %1315 = vmatprep.subr.mxu0 0.0
    %1316 = vmatpush1.msra.mxu0 0.0
    %1317 = vmatprep.subr.mxu0 0.0
    %1318 = vmatpush1.msra.mxu0 0.0
    %1319 = vmatprep.subr.mxu0 0.0
    %1320 = vmatpush1.msra.mxu0 0.0
    %1321 = vmatprep.subr.mxu0 0.0
    %1322 = vmatpush1.msra.mxu0 0.0
    %1323 = vmatprep.subr.mxu0 0.0
    %1324 = vmatpush1.msra.mxu0 0.0
    %1325 = vmatprep.subr.mxu0 0.0
    %1326 = vmatpush1.msra.mxu0 0.0
    %1327 = vmatprep.subr.mxu0 0.0
    %1328 = vmatpush1.msra.mxu0 0.0
    %1329 = vmatprep.subr.mxu0 0.0
    %1330 = vmatpush1.msra.mxu0 0.0
    %1331 = vmatprep.subr.mxu0 0.0
    %1332 = vmatpush1.msra.mxu0 0.0
    %1333 = vmatprep.subr.mxu0 0.0
    %1334 = vmatpush1.msra.mxu0 0.0
    %1335 = vmatprep.subr.mxu0 0.0
    %1336 = vmatpush1.msra.mxu0 0.0
    %1337 = vmatprep.subr.mxu0 0.0
    %1338 = vmatpush1.msra.mxu0 0.0
    %1339 = vmatprep.subr.mxu0 0.0
    %1340 = vmatpush1.msra.mxu0 0.0
    %1341 = vmatprep.subr.mxu0 0.0
    %1342 = vmatpush1.msra.mxu0 0.0
    %1343 = vmatprep.subr.mxu0 0.0
    %1344 = vmatpush1.msra.mxu0 0.0
    %1345 = vmatprep.mubr.f32.mxu0 0.0
    %v1346 = vand.u32 %v1270, 4294901760
    %v1347 = vsub.f32 %v1270, %v1346
    %v1348 = vand.u32 %v1347, 4294901760
    %v1349 = vsub.f32 %v1347, %v1348
    %v1350 = vand.u32 %v1349, 4294901760
    %1351 = vmatmul.mubr.f32.gmra.mrb[0].mxu0 %v1350
    %v1352 = vpop.f32.mrb[0].mxu0
    %v1353 = vadd.f32 %v47, %v1352
    %v1354 = vpop.f32.mrb[0].mxu0
    %1355 = vmatprep.mubr.f32.mxu0 0.0
    %v1356 = vand.u32 %v1273, 4294901760
    %v1357 = vsub.f32 %v1273, %v1356
    %v1358 = vand.u32 %v1357, 4294901760
    %v1359 = vsub.f32 %v1357, %v1358
    %v1360 = vand.u32 %v1359, 4294901760
    %1361 = vmatmul.mubr.f32.gmra.mrb[0].mxu0 %v1360
    %v1362 = vpop.f32.mrb[0].mxu0
    %v1363 = vadd.f32 %v47, %v1362
    %v1364 = vpop.f32.mrb[0].mxu0
    %1365 = vdwg.mxu0
    %1366 = vmatprep.subr.mxu0 0.0
    %v1367 = vand.u32 %v43, 4294901760
    %v1368 = vsub.f32 %v43, %v1367
    %v1369 = vand.u32 %v1368, 4294901760
    %v1370 = vsub.f32 %v1368, %v1369
    %v1371 = vand.u32 %v1370, 4294901760
    %1372 = vmatpush1.msra.mxu0 %v1371
    %1373 = vmatprep.subr.mxu0 0.0
    %v1374 = vand.u32 %v44, 4294901760
    %v1375 = vsub.f32 %v44, %v1374
    %v1376 = vand.u32 %v1375, 4294901760
    %v1377 = vsub.f32 %v1375, %v1376
    %v1378 = vand.u32 %v1377, 4294901760
    %1379 = vmatpush1.msra.mxu0 %v1378
    %1380 = vmatprep.subr.mxu0 0.0
    %v1381 = vand.u32 %v45, 4294901760
    %v1382 = vsub.f32 %v45, %v1381
    %v1383 = vand.u32 %v1382, 4294901760
    %v1384 = vsub.f32 %v1382, %v1383
    %v1385 = vand.u32 %v1384, 4294901760
    %1386 = vmatpush1.msra.mxu0 %v1385
    %1387 = vmatprep.subr.mxu0 0.0
    %v1388 = vand.u32 %v46, 4294901760
    %v1389 = vsub.f32 %v46, %v1388
    %v1390 = vand.u32 %v1389, 4294901760
    %v1391 = vsub.f32 %v1389, %v1390
    %v1392 = vand.u32 %v1391, 4294901760
    %1393 = vmatpush1.msra.mxu0 %v1392
    %1394 = vmatprep.subr.mxu0 0.0
    %v1395 = vand.u32 %v1265, 4294901760
    %v1396 = vsub.f32 %v1265, %v1395
    %v1397 = vand.u32 %v1396, 4294901760
    %v1398 = vsub.f32 %v1396, %v1397
    %v1399 = vand.u32 %v1398, 4294901760
    %1400 = vmatpush1.msra.mxu0 %v1399
    %1401 = vmatprep.subr.mxu0 0.0
    %v1402 = vand.u32 %v1266, 4294901760
    %v1403 = vsub.f32 %v1266, %v1402
    %v1404 = vand.u32 %v1403, 4294901760
    %v1405 = vsub.f32 %v1403, %v1404
    %v1406 = vand.u32 %v1405, 4294901760
    %1407 = vmatpush1.msra.mxu0 %v1406
    %1408 = vmatprep.subr.mxu0 0.0
    %1409 = vmatpush1.msra.mxu0 0.0
    %1410 = vmatprep.subr.mxu0 0.0
    %1411 = vmatpush1.msra.mxu0 0.0
    %1412 = vmatprep.subr.mxu0 0.0
    %1413 = vmatpush1.msra.mxu0 0.0
    %1414 = vmatprep.subr.mxu0 0.0
    %1415 = vmatpush1.msra.mxu0 0.0
    %1416 = vmatprep.subr.mxu0 0.0
    %1417 = vmatpush1.msra.mxu0 0.0
    %1418 = vmatprep.subr.mxu0 0.0
    %1419 = vmatpush1.msra.mxu0 0.0
    %1420 = vmatprep.subr.mxu0 0.0
    %1421 = vmatpush1.msra.mxu0 0.0
    %1422 = vmatprep.subr.mxu0 0.0
    %1423 = vmatpush1.msra.mxu0 0.0
    %1424 = vmatprep.subr.mxu0 0.0
    %1425 = vmatpush1.msra.mxu0 0.0
    %1426 = vmatprep.subr.mxu0 0.0
    %1427 = vmatpush1.msra.mxu0 0.0
    %1428 = vmatprep.subr.mxu0 0.0
    %1429 = vmatpush1.msra.mxu0 0.0
    %1430 = vmatprep.subr.mxu0 0.0
    %1431 = vmatpush1.msra.mxu0 0.0
    %1432 = vmatprep.subr.mxu0 0.0
    %1433 = vmatpush1.msra.mxu0 0.0
    %1434 = vmatprep.subr.mxu0 0.0
    %1435 = vmatpush1.msra.mxu0 0.0
    %1436 = vmatprep.subr.mxu0 0.0
    %1437 = vmatpush1.msra.mxu0 0.0
    %1438 = vmatprep.subr.mxu0 0.0
    %1439 = vmatpush1.msra.mxu0 0.0
    %1440 = vmatprep.subr.mxu0 0.0
    %1441 = vmatpush1.msra.mxu0 0.0
    %1442 = vmatprep.subr.mxu0 0.0
    %1443 = vmatpush1.msra.mxu0 0.0
    %1444 = vmatprep.subr.mxu0 0.0
    %1445 = vmatpush1.msra.mxu0 0.0
    %1446 = vmatprep.subr.mxu0 0.0
    %1447 = vmatpush1.msra.mxu0 0.0
    %1448 = vmatprep.subr.mxu0 0.0
    %1449 = vmatpush1.msra.mxu0 0.0
    %1450 = vmatprep.subr.mxu0 0.0
    %1451 = vmatpush1.msra.mxu0 0.0
    %1452 = vmatprep.subr.mxu0 0.0
    %1453 = vmatpush1.msra.mxu0 0.0
    %1454 = vmatprep.subr.mxu0 0.0
    %1455 = vmatpush1.msra.mxu0 0.0
    %1456 = vmatprep.subr.mxu0 0.0
    %1457 = vmatpush1.msra.mxu0 0.0
    %1458 = vmatprep.subr.mxu0 0.0
    %1459 = vmatpush1.msra.mxu0 0.0
    %1460 = vmatprep.mubr.f32.mxu0 0.0
    %v1461 = vand.u32 %v1270, 4294901760
    %1462 = vmatmul.mubr.f32.gmra.mrb[0].mxu0 %v1461
    %v1463 = vpop.f32.mrb[0].mxu0
    %v1464 = vadd.f32 %v1353, %v1463
    %v1465 = vpop.f32.mrb[0].mxu0
    %1466 = vmatprep.mubr.f32.mxu0 0.0
    %v1467 = vand.u32 %v1273, 4294901760
    %1468 = vmatmul.mubr.f32.gmra.mrb[0].mxu0 %v1467
    %v1469 = vpop.f32.mrb[0].mxu0
    %v1470 = vadd.f32 %v1363, %v1469
    %v1471 = vpop.f32.mrb[0].mxu0
    %1472 = vdwg.mxu0
    %1473 = vmatprep.subr.mxu0 0.0
    %v1474 = vand.u32 %v43, 4294901760
    %v1475 = vsub.f32 %v43, %v1474
    %1476 = vmatpush1.msra.mxu0 %v1475
    %1477 = vmatprep.subr.mxu0 0.0
    %v1478 = vand.u32 %v44, 4294901760
    %v1479 = vsub.f32 %v44, %v1478
    %1480 = vmatpush1.msra.mxu0 %v1479
    %1481 = vmatprep.subr.mxu0 0.0
    %v1482 = vand.u32 %v45, 4294901760
    %v1483 = vsub.f32 %v45, %v1482
    %1484 = vmatpush1.msra.mxu0 %v1483
    %1485 = vmatprep.subr.mxu0 0.0
    %v1486 = vand.u32 %v46, 4294901760
    %v1487 = vsub.f32 %v46, %v1486
    %1488 = vmatpush1.msra.mxu0 %v1487
    %1489 = vmatprep.subr.mxu0 0.0
    %v1490 = vand.u32 %v1265, 4294901760
    %v1491 = vsub.f32 %v1265, %v1490
    %1492 = vmatpush1.msra.mxu0 %v1491
    %1493 = vmatprep.subr.mxu0 0.0
    %v1494 = vand.u32 %v1266, 4294901760
    %v1495 = vsub.f32 %v1266, %v1494
    %1496 = vmatpush1.msra.mxu0 %v1495
    %1497 = vmatprep.subr.mxu0 0.0
    %1498 = vmatpush1.msra.mxu0 0.0
    %1499 = vmatprep.subr.mxu0 0.0
    %1500 = vmatpush1.msra.mxu0 0.0
    %1501 = vmatprep.subr.mxu0 0.0
    %1502 = vmatpush1.msra.mxu0 0.0
    %1503 = vmatprep.subr.mxu0 0.0
    %1504 = vmatpush1.msra.mxu0 0.0
    %1505 = vmatprep.subr.mxu0 0.0
    %1506 = vmatpush1.msra.mxu0 0.0
    %1507 = vmatprep.subr.mxu0 0.0
    %1508 = vmatpush1.msra.mxu0 0.0
    %1509 = vmatprep.subr.mxu0 0.0
    %1510 = vmatpush1.msra.mxu0 0.0
    %1511 = vmatprep.subr.mxu0 0.0
    %1512 = vmatpush1.msra.mxu0 0.0
    %1513 = vmatprep.subr.mxu0 0.0
    %1514 = vmatpush1.msra.mxu0 0.0
    %1515 = vmatprep.subr.mxu0 0.0
    %1516 = vmatpush1.msra.mxu0 0.0
    %1517 = vmatprep.subr.mxu0 0.0
    %1518 = vmatpush1.msra.mxu0 0.0
    %1519 = vmatprep.subr.mxu0 0.0
    %1520 = vmatpush1.msra.mxu0 0.0
    %1521 = vmatprep.subr.mxu0 0.0
    %1522 = vmatpush1.msra.mxu0 0.0
    %1523 = vmatprep.subr.mxu0 0.0
    %1524 = vmatpush1.msra.mxu0 0.0
    %1525 = vmatprep.subr.mxu0 0.0
    %1526 = vmatpush1.msra.mxu0 0.0
    %1527 = vmatprep.subr.mxu0 0.0
    %1528 = vmatpush1.msra.mxu0 0.0
    %1529 = vmatprep.subr.mxu0 0.0
    %1530 = vmatpush1.msra.mxu0 0.0
    %1531 = vmatprep.subr.mxu0 0.0
    %1532 = vmatpush1.msra.mxu0 0.0
    %1533 = vmatprep.subr.mxu0 0.0
    %1534 = vmatpush1.msra.mxu0 0.0
    %1535 = vmatprep.subr.mxu0 0.0
    %1536 = vmatpush1.msra.mxu0 0.0
    %1537 = vmatprep.subr.mxu0 0.0
    %1538 = vmatpush1.msra.mxu0 0.0
    %1539 = vmatprep.subr.mxu0 0.0
    %1540 = vmatpush1.msra.mxu0 0.0
    %1541 = vmatprep.subr.mxu0 0.0
    %1542 = vmatpush1.msra.mxu0 0.0
    %1543 = vmatprep.subr.mxu0 0.0
    %1544 = vmatpush1.msra.mxu0 0.0
    %1545 = vmatprep.subr.mxu0 0.0
    %1546 = vmatpush1.msra.mxu0 0.0
    %1547 = vmatprep.subr.mxu0 0.0
    %1548 = vmatpush1.msra.mxu0 0.0
    %1549 = vmatprep.mubr.f32.mxu0 0.0
    %v1550 = vand.u32 %v1270, 4294901760
    %v1551 = vsub.f32 %v1270, %v1550
    %1552 = vmatmul.mubr.f32.gmra.mrb[0].mxu0 %v1551
    %v1553 = vpop.f32.mrb[0].mxu0
    %v1554 = vadd.f32 %v1464, %v1553
    %v1555 = vpop.f32.mrb[0].mxu0
    %1556 = vmatprep.mubr.f32.mxu0 0.0
    %v1557 = vand.u32 %v1273, 4294901760
    %v1558 = vsub.f32 %v1273, %v1557
    %1559 = vmatmul.mubr.f32.gmra.mrb[0].mxu0 %v1558
    %v1560 = vpop.f32.mrb[0].mxu0
    %v1561 = vadd.f32 %v1470, %v1560
    %v1562 = vpop.f32.mrb[0].mxu0
    %1563 = vdwg.mxu0
    %1564 = vmatprep.subr.mxu0 0.0
    %v1565 = vand.u32 %v43, 4294901760
    %1566 = vmatpush1.msra.mxu0 %v1565
    %1567 = vmatprep.subr.mxu0 0.0
    %v1568 = vand.u32 %v44, 4294901760
    %1569 = vmatpush1.msra.mxu0 %v1568
    %1570 = vmatprep.subr.mxu0 0.0
    %v1571 = vand.u32 %v45, 4294901760
    %1572 = vmatpush1.msra.mxu0 %v1571
    %1573 = vmatprep.subr.mxu0 0.0
    %v1574 = vand.u32 %v46, 4294901760
    %1575 = vmatpush1.msra.mxu0 %v1574
    %1576 = vmatprep.subr.mxu0 0.0
    %v1577 = vand.u32 %v1265, 4294901760
    %1578 = vmatpush1.msra.mxu0 %v1577
    %1579 = vmatprep.subr.mxu0 0.0
    %v1580 = vand.u32 %v1266, 4294901760
    %1581 = vmatpush1.msra.mxu0 %v1580
    %1582 = vmatprep.subr.mxu0 0.0
    %1583 = vmatpush1.msra.mxu0 0.0
    %1584 = vmatprep.subr.mxu0 0.0
    %1585 = vmatpush1.msra.mxu0 0.0
    %1586 = vmatprep.subr.mxu0 0.0
    %1587 = vmatpush1.msra.mxu0 0.0
    %1588 = vmatprep.subr.mxu0 0.0
    %1589 = vmatpush1.msra.mxu0 0.0
    %1590 = vmatprep.subr.mxu0 0.0
    %1591 = vmatpush1.msra.mxu0 0.0
    %1592 = vmatprep.subr.mxu0 0.0
    %1593 = vmatpush1.msra.mxu0 0.0
    %1594 = vmatprep.subr.mxu0 0.0
    %1595 = vmatpush1.msra.mxu0 0.0
    %1596 = vmatprep.subr.mxu0 0.0
    %1597 = vmatpush1.msra.mxu0 0.0
    %1598 = vmatprep.subr.mxu0 0.0
    %1599 = vmatpush1.msra.mxu0 0.0
    %1600 = vmatprep.subr.mxu0 0.0
    %1601 = vmatpush1.msra.mxu0 0.0
    %1602 = vmatprep.subr.mxu0 0.0
    %1603 = vmatpush1.msra.mxu0 0.0
    %1604 = vmatprep.subr.mxu0 0.0
    %1605 = vmatpush1.msra.mxu0 0.0
    %1606 = vmatprep.subr.mxu0 0.0
    %1607 = vmatpush1.msra.mxu0 0.0
    %1608 = vmatprep.subr.mxu0 0.0
    %1609 = vmatpush1.msra.mxu0 0.0
    %1610 = vmatprep.subr.mxu0 0.0
    %1611 = vmatpush1.msra.mxu0 0.0
    %1612 = vmatprep.subr.mxu0 0.0
    %1613 = vmatpush1.msra.mxu0 0.0
    %1614 = vmatprep.subr.mxu0 0.0
    %1615 = vmatpush1.msra.mxu0 0.0
    %1616 = vmatprep.subr.mxu0 0.0
    %1617 = vmatpush1.msra.mxu0 0.0
    %1618 = vmatprep.subr.mxu0 0.0
    %1619 = vmatpush1.msra.mxu0 0.0
    %1620 = vmatprep.subr.mxu0 0.0
    %1621 = vmatpush1.msra.mxu0 0.0
    %1622 = vmatprep.subr.mxu0 0.0
    %1623 = vmatpush1.msra.mxu0 0.0
    %1624 = vmatprep.subr.mxu0 0.0
    %1625 = vmatpush1.msra.mxu0 0.0
    %1626 = vmatprep.subr.mxu0 0.0
    %1627 = vmatpush1.msra.mxu0 0.0
    %1628 = vmatprep.subr.mxu0 0.0
    %1629 = vmatpush1.msra.mxu0 0.0
    %1630 = vmatprep.subr.mxu0 0.0
    %1631 = vmatpush1.msra.mxu0 0.0
    %1632 = vmatprep.subr.mxu0 0.0
    %1633 = vmatpush1.msra.mxu0 0.0
    %1634 = vmatprep.mubr.f32.mxu0 0.0
    %v1635 = vand.u32 %v1270, 4294901760
    %v1636 = vsub.f32 %v1270, %v1635
    %v1637 = vand.u32 %v1636, 4294901760
    %1638 = vmatmul.mubr.f32.gmra.mrb[0].mxu0 %v1637
    %v1639 = vpop.f32.mrb[0].mxu0
    %v1640 = vadd.f32 %v1554, %v1639
    %v1641 = vpop.f32.mrb[0].mxu0
    %1642 = vmatprep.mubr.f32.mxu0 0.0
    %v1643 = vand.u32 %v1273, 4294901760
    %v1644 = vsub.f32 %v1273, %v1643
    %v1645 = vand.u32 %v1644, 4294901760
    %1646 = vmatmul.mubr.f32.gmra.mrb[0].mxu0 %v1645
    %v1647 = vpop.f32.mrb[0].mxu0
    %v1648 = vadd.f32 %v1561, %v1647
    %v1649 = vpop.f32.mrb[0].mxu0
    %1650 = vdwg.mxu0
    %1651 = vmatprep.subr.mxu0 0.0
    %v1652 = vand.u32 %v43, 4294901760
    %v1653 = vsub.f32 %v43, %v1652
    %v1654 = vand.u32 %v1653, 4294901760
    %1655 = vmatpush1.msra.mxu0 %v1654
    %1656 = vmatprep.subr.mxu0 0.0
    %v1657 = vand.u32 %v44, 4294901760
    %v1658 = vsub.f32 %v44, %v1657
    %v1659 = vand.u32 %v1658, 4294901760
    %1660 = vmatpush1.msra.mxu0 %v1659
    %1661 = vmatprep.subr.mxu0 0.0
    %v1662 = vand.u32 %v45, 4294901760
    %v1663 = vsub.f32 %v45, %v1662
    %v1664 = vand.u32 %v1663, 4294901760
    %1665 = vmatpush1.msra.mxu0 %v1664
    %1666 = vmatprep.subr.mxu0 0.0
    %v1667 = vand.u32 %v46, 4294901760
    %v1668 = vsub.f32 %v46, %v1667
    %v1669 = vand.u32 %v1668, 4294901760
    %1670 = vmatpush1.msra.mxu0 %v1669
    %1671 = vmatprep.subr.mxu0 0.0
    %v1672 = vand.u32 %v1265, 4294901760
    %v1673 = vsub.f32 %v1265, %v1672
    %v1674 = vand.u32 %v1673, 4294901760
    %1675 = vmatpush1.msra.mxu0 %v1674
    %1676 = vmatprep.subr.mxu0 0.0
    %v1677 = vand.u32 %v1266, 4294901760
    %v1678 = vsub.f32 %v1266, %v1677
    %v1679 = vand.u32 %v1678, 4294901760
    %1680 = vmatpush1.msra.mxu0 %v1679
    %1681 = vmatprep.subr.mxu0 0.0
    %1682 = vmatpush1.msra.mxu0 0.0
    %1683 = vmatprep.subr.mxu0 0.0
    %1684 = vmatpush1.msra.mxu0 0.0
    %1685 = vmatprep.subr.mxu0 0.0
    %1686 = vmatpush1.msra.mxu0 0.0
    %1687 = vmatprep.subr.mxu0 0.0
    %1688 = vmatpush1.msra.mxu0 0.0
    %1689 = vmatprep.subr.mxu0 0.0
    %1690 = vmatpush1.msra.mxu0 0.0
    %1691 = vmatprep.subr.mxu0 0.0
    %1692 = vmatpush1.msra.mxu0 0.0
    %1693 = vmatprep.subr.mxu0 0.0
    %1694 = vmatpush1.msra.mxu0 0.0
    %1695 = vmatprep.subr.mxu0 0.0
    %1696 = vmatpush1.msra.mxu0 0.0
    %1697 = vmatprep.subr.mxu0 0.0
    %1698 = vmatpush1.msra.mxu0 0.0
    %1699 = vmatprep.subr.mxu0 0.0
    %1700 = vmatpush1.msra.mxu0 0.0
    %1701 = vmatprep.subr.mxu0 0.0
    %1702 = vmatpush1.msra.mxu0 0.0
    %1703 = vmatprep.subr.mxu0 0.0
    %1704 = vmatpush1.msra.mxu0 0.0
    %1705 = vmatprep.subr.mxu0 0.0
    %1706 = vmatpush1.msra.mxu0 0.0
    %1707 = vmatprep.subr.mxu0 0.0
    %1708 = vmatpush1.msra.mxu0 0.0
    %1709 = vmatprep.subr.mxu0 0.0
    %1710 = vmatpush1.msra.mxu0 0.0
    %1711 = vmatprep.subr.mxu0 0.0
    %1712 = vmatpush1.msra.mxu0 0.0
    %1713 = vmatprep.subr.mxu0 0.0
    %1714 = vmatpush1.msra.mxu0 0.0
    %1715 = vmatprep.subr.mxu0 0.0
    %1716 = vmatpush1.msra.mxu0 0.0
    %1717 = vmatprep.subr.mxu0 0.0
    %1718 = vmatpush1.msra.mxu0 0.0
    %1719 = vmatprep.subr.mxu0 0.0
    %1720 = vmatpush1.msra.mxu0 0.0
    %1721 = vmatprep.subr.mxu0 0.0
    %1722 = vmatpush1.msra.mxu0 0.0
    %1723 = vmatprep.subr.mxu0 0.0
    %1724 = vmatpush1.msra.mxu0 0.0
    %1725 = vmatprep.subr.mxu0 0.0
    %1726 = vmatpush1.msra.mxu0 0.0
    %1727 = vmatprep.subr.mxu0 0.0
    %1728 = vmatpush1.msra.mxu0 0.0
    %1729 = vmatprep.subr.mxu0 0.0
    %1730 = vmatpush1.msra.mxu0 0.0
    %1731 = vmatprep.subr.mxu0 0.0
    %1732 = vmatpush1.msra.mxu0 0.0
    %1733 = vmatprep.mubr.f32.mxu0 0.0
    %v1734 = vand.u32 %v1270, 4294901760
    %1735 = vmatmul.mubr.f32.gmra.mrb[0].mxu0 %v1734
    %v1736 = vpop.f32.mrb[0].mxu0
    %v1737 = vadd.f32 %v1640, %v1736
    %v1738 = vpop.f32.mrb[0].mxu0
    %1739 = vmatprep.mubr.f32.mxu0 0.0
    %v1740 = vand.u32 %v1273, 4294901760
    %1741 = vmatmul.mubr.f32.gmra.mrb[0].mxu0 %v1740
    %v1742 = vpop.f32.mrb[0].mxu0
    %v1743 = vadd.f32 %v1648, %v1742
    %v1744 = vpop.f32.mrb[0].mxu0
    %1745 = vdwg.mxu0
    %1746 = vmatprep.subr.mxu0 0.0
    %v1747 = vand.u32 %v43, 4294901760
    %1748 = vmatpush1.msra.mxu0 %v1747
    %1749 = vmatprep.subr.mxu0 0.0
    %v1750 = vand.u32 %v44, 4294901760
    %1751 = vmatpush1.msra.mxu0 %v1750
    %1752 = vmatprep.subr.mxu0 0.0
    %v1753 = vand.u32 %v45, 4294901760
    %1754 = vmatpush1.msra.mxu0 %v1753
    %1755 = vmatprep.subr.mxu0 0.0
    %v1756 = vand.u32 %v46, 4294901760
    %1757 = vmatpush1.msra.mxu0 %v1756
    %1758 = vmatprep.subr.mxu0 0.0
    %v1759 = vand.u32 %v1265, 4294901760
    %1760 = vmatpush1.msra.mxu0 %v1759
    %1761 = vmatprep.subr.mxu0 0.0
    %v1762 = vand.u32 %v1266, 4294901760
    %1763 = vmatpush1.msra.mxu0 %v1762
    %1764 = vmatprep.subr.mxu0 0.0
    %1765 = vmatpush1.msra.mxu0 0.0
    %1766 = vmatprep.subr.mxu0 0.0
    %1767 = vmatpush1.msra.mxu0 0.0
    %1768 = vmatprep.subr.mxu0 0.0
    %1769 = vmatpush1.msra.mxu0 0.0
    %1770 = vmatprep.subr.mxu0 0.0
    %1771 = vmatpush1.msra.mxu0 0.0
    %1772 = vmatprep.subr.mxu0 0.0
    %1773 = vmatpush1.msra.mxu0 0.0
    %1774 = vmatprep.subr.mxu0 0.0
    %1775 = vmatpush1.msra.mxu0 0.0
    %1776 = vmatprep.subr.mxu0 0.0
    %1777 = vmatpush1.msra.mxu0 0.0
    %1778 = vmatprep.subr.mxu0 0.0
    %1779 = vmatpush1.msra.mxu0 0.0
    %1780 = vmatprep.subr.mxu0 0.0
    %1781 = vmatpush1.msra.mxu0 0.0
    %1782 = vmatprep.subr.mxu0 0.0
    %1783 = vmatpush1.msra.mxu0 0.0
    %1784 = vmatprep.subr.mxu0 0.0
    %1785 = vmatpush1.msra.mxu0 0.0
    %1786 = vmatprep.subr.mxu0 0.0
    %1787 = vmatpush1.msra.mxu0 0.0
    %1788 = vmatprep.subr.mxu0 0.0
    %1789 = vmatpush1.msra.mxu0 0.0
    %1790 = vmatprep.subr.mxu0 0.0
    %1791 = vmatpush1.msra.mxu0 0.0
    %1792 = vmatprep.subr.mxu0 0.0
    %1793 = vmatpush1.msra.mxu0 0.0
    %1794 = vmatprep.subr.mxu0 0.0
    %1795 = vmatpush1.msra.mxu0 0.0
    %1796 = vmatprep.subr.mxu0 0.0
    %1797 = vmatpush1.msra.mxu0 0.0
    %1798 = vmatprep.subr.mxu0 0.0
    %1799 = vmatpush1.msra.mxu0 0.0
    %1800 = vmatprep.subr.mxu0 0.0
    %1801 = vmatpush1.msra.mxu0 0.0
    %1802 = vmatprep.subr.mxu0 0.0
    %1803 = vmatpush1.msra.mxu0 0.0
    %1804 = vmatprep.subr.mxu0 0.0
    %1805 = vmatpush1.msra.mxu0 0.0
    %1806 = vmatprep.subr.mxu0 0.0
    %1807 = vmatpush1.msra.mxu0 0.0
    %1808 = vmatprep.subr.mxu0 0.0
    %1809 = vmatpush1.msra.mxu0 0.0
    %1810 = vmatprep.subr.mxu0 0.0
    %1811 = vmatpush1.msra.mxu0 0.0
    %1812 = vmatprep.subr.mxu0 0.0
    %1813 = vmatpush1.msra.mxu0 0.0
    %1814 = vmatprep.subr.mxu0 0.0
    %1815 = vmatpush1.msra.mxu0 0.0
    %1816 = vmatprep.mubr.f32.mxu0 0.0
    %v1817 = vand.u32 %v1270, 4294901760
    %1818 = vmatmul.mubr.f32.gmra.mrb[0].mxu0 %v1817
    %v1819 = vpop.f32.mrb[0].mxu0
    %v1820 = vadd.f32 %v1737, %v1819
    %v1821 = vpop.f32.mrb[0].mxu0
    %1822 = vmatprep.mubr.f32.mxu0 0.0
    %v1823 = vand.u32 %v1273, 4294901760
    %1824 = vmatmul.mubr.f32.gmra.mrb[0].mxu0 %v1823
    %v1825 = vpop.f32.mrb[0].mxu0
    %v1826 = vadd.f32 %v1743, %v1825
    %v1827 = vpop.f32.mrb[0].mxu0
    %1828 = vdwg.mxu0
    %v1829 = vmul.f32 %v1265, %v1820
    %v1830 = vmul.f32 %v1266, %v1826
    %v1831 = vsel %vm61, %v1829, 0.0
    %1832 = vadd.xlane.f32.xlu0 %v1831
    %v1833 = vpop.xlane.xlu0 %1832
    %v1834 = vsel %vm61, %v1830, 0.0
    %1835 = vadd.xlane.f32.xlu0 %v1834
    %v1836 = vpop.xlane.xlu0 %1835
    %v1837 = vmul.f32 %v1833, %v1265
    %v1838 = vmul.f32 %v1836, %v1266
    %v1839 = vsub.f32 %v1820, %v1837
    %v1840 = vsub.f32 %v1826, %v1838
    %v1841 = vmul.f32 %v58, %v1839
    %v1842 = vmul.f32 %v58, %v1840
    %v1843 = vadd.f32 %v1265, %v1841
    %v1844 = vadd.f32 %v1266, %v1842
    %v1845 = vmul.f32 %v1843, %v1843
    %v1846 = vmul.f32 %v1844, %v1844
    %v1847 = vsel %vm61, %v1845, 0.0
    %1848 = vadd.xlane.f32.xlu0 %v1847
    %v1849 = vpop.xlane.xlu0 %1848
    %v1850 = vsel %vm61, %v1846, 0.0
    %1851 = vadd.xlane.f32.xlu0 %v1850
    %v1852 = vpop.xlane.xlu0 %1851
    %v1853 = vmax.f32 %v1849, 1e-24
    %v1854 = vmax.f32 %v1852, 1e-24
    %v1855 = vrsqrt.pop %v1853
    %v1856 = vrsqrt.pop %v1854
    %v1857 = vmul.f32 %v1843, %v1855
    %v1858 = vmul.f32 %v1844, %v1856
    %v1859 = vsel %vm61, %v1857, %v77
    %v1860 = vsel %vm61, %v1858, %v79
    %v1862 = vsel %vm84, %v1859, 0
    %v1865 = vsel %vm84, %v1860, 0
    %1867 = vmatprep.subr.mxu0 0.0
    %v1868 = vand.u32 %v43, 4294901760
    %1869 = vmatpush1.msra.mxu0 %v1868
    %1870 = vmatprep.subr.mxu0 0.0
    %v1871 = vand.u32 %v44, 4294901760
    %1872 = vmatpush1.msra.mxu0 %v1871
    %1873 = vmatprep.subr.mxu0 0.0
    %v1874 = vand.u32 %v45, 4294901760
    %1875 = vmatpush1.msra.mxu0 %v1874
    %1876 = vmatprep.subr.mxu0 0.0
    %v1877 = vand.u32 %v46, 4294901760
    %1878 = vmatpush1.msra.mxu0 %v1877
    %1879 = vmatprep.subr.mxu0 0.0
    %v1880 = vand.u32 %v1857, 4294901760
    %1881 = vmatpush1.msra.mxu0 %v1880
    %1882 = vmatprep.subr.mxu0 0.0
    %v1883 = vand.u32 %v1858, 4294901760
    %1884 = vmatpush1.msra.mxu0 %v1883
    %1885 = vmatprep.subr.mxu0 0.0
    %1886 = vmatpush1.msra.mxu0 0.0
    %1887 = vmatprep.subr.mxu0 0.0
    %1888 = vmatpush1.msra.mxu0 0.0
    %1889 = vmatprep.subr.mxu0 0.0
    %1890 = vmatpush1.msra.mxu0 0.0
    %1891 = vmatprep.subr.mxu0 0.0
    %1892 = vmatpush1.msra.mxu0 0.0
    %1893 = vmatprep.subr.mxu0 0.0
    %1894 = vmatpush1.msra.mxu0 0.0
    %1895 = vmatprep.subr.mxu0 0.0
    %1896 = vmatpush1.msra.mxu0 0.0
    %1897 = vmatprep.subr.mxu0 0.0
    %1898 = vmatpush1.msra.mxu0 0.0
    %1899 = vmatprep.subr.mxu0 0.0
    %1900 = vmatpush1.msra.mxu0 0.0
    %1901 = vmatprep.subr.mxu0 0.0
    %1902 = vmatpush1.msra.mxu0 0.0
    %1903 = vmatprep.subr.mxu0 0.0
    %1904 = vmatpush1.msra.mxu0 0.0
    %1905 = vmatprep.subr.mxu0 0.0
    %1906 = vmatpush1.msra.mxu0 0.0
    %1907 = vmatprep.subr.mxu0 0.0
    %1908 = vmatpush1.msra.mxu0 0.0
    %1909 = vmatprep.subr.mxu0 0.0
    %1910 = vmatpush1.msra.mxu0 0.0
    %1911 = vmatprep.subr.mxu0 0.0
    %1912 = vmatpush1.msra.mxu0 0.0
    %1913 = vmatprep.subr.mxu0 0.0
    %1914 = vmatpush1.msra.mxu0 0.0
    %1915 = vmatprep.subr.mxu0 0.0
    %1916 = vmatpush1.msra.mxu0 0.0
    %1917 = vmatprep.subr.mxu0 0.0
    %1918 = vmatpush1.msra.mxu0 0.0
    %1919 = vmatprep.subr.mxu0 0.0
    %1920 = vmatpush1.msra.mxu0 0.0
    %1921 = vmatprep.subr.mxu0 0.0
    %1922 = vmatpush1.msra.mxu0 0.0
    %1923 = vmatprep.subr.mxu0 0.0
    %1924 = vmatpush1.msra.mxu0 0.0
    %1925 = vmatprep.subr.mxu0 0.0
    %1926 = vmatpush1.msra.mxu0 0.0
    %1927 = vmatprep.subr.mxu0 0.0
    %1928 = vmatpush1.msra.mxu0 0.0
    %1929 = vmatprep.subr.mxu0 0.0
    %1930 = vmatpush1.msra.mxu0 0.0
    %1931 = vmatprep.subr.mxu0 0.0
    %1932 = vmatpush1.msra.mxu0 0.0
    %1933 = vmatprep.subr.mxu0 0.0
    %1934 = vmatpush1.msra.mxu0 0.0
    %1935 = vmatprep.subr.mxu0 0.0
    %1936 = vmatpush1.msra.mxu0 0.0
    %1937 = vmatprep.mubr.f32.mxu0 0.0
    %v1938 = vand.u32 %v1862, 4294901760
    %v1939 = vsub.f32 %v1862, %v1938
    %v1940 = vand.u32 %v1939, 4294901760
    %v1941 = vsub.f32 %v1939, %v1940
    %v1942 = vand.u32 %v1941, 4294901760
    %1943 = vmatmul.mubr.f32.gmra.mrb[0].mxu0 %v1942
    %v1944 = vpop.f32.mrb[0].mxu0
    %v1945 = vadd.f32 %v47, %v1944
    %v1946 = vpop.f32.mrb[0].mxu0
    %1947 = vmatprep.mubr.f32.mxu0 0.0
    %v1948 = vand.u32 %v1865, 4294901760
    %v1949 = vsub.f32 %v1865, %v1948
    %v1950 = vand.u32 %v1949, 4294901760
    %v1951 = vsub.f32 %v1949, %v1950
    %v1952 = vand.u32 %v1951, 4294901760
    %1953 = vmatmul.mubr.f32.gmra.mrb[0].mxu0 %v1952
    %v1954 = vpop.f32.mrb[0].mxu0
    %v1955 = vadd.f32 %v47, %v1954
    %v1956 = vpop.f32.mrb[0].mxu0
    %1957 = vdwg.mxu0
    %1958 = vmatprep.subr.mxu0 0.0
    %v1959 = vand.u32 %v43, 4294901760
    %v1960 = vsub.f32 %v43, %v1959
    %v1961 = vand.u32 %v1960, 4294901760
    %v1962 = vsub.f32 %v1960, %v1961
    %v1963 = vand.u32 %v1962, 4294901760
    %1964 = vmatpush1.msra.mxu0 %v1963
    %1965 = vmatprep.subr.mxu0 0.0
    %v1966 = vand.u32 %v44, 4294901760
    %v1967 = vsub.f32 %v44, %v1966
    %v1968 = vand.u32 %v1967, 4294901760
    %v1969 = vsub.f32 %v1967, %v1968
    %v1970 = vand.u32 %v1969, 4294901760
    %1971 = vmatpush1.msra.mxu0 %v1970
    %1972 = vmatprep.subr.mxu0 0.0
    %v1973 = vand.u32 %v45, 4294901760
    %v1974 = vsub.f32 %v45, %v1973
    %v1975 = vand.u32 %v1974, 4294901760
    %v1976 = vsub.f32 %v1974, %v1975
    %v1977 = vand.u32 %v1976, 4294901760
    %1978 = vmatpush1.msra.mxu0 %v1977
    %1979 = vmatprep.subr.mxu0 0.0
    %v1980 = vand.u32 %v46, 4294901760
    %v1981 = vsub.f32 %v46, %v1980
    %v1982 = vand.u32 %v1981, 4294901760
    %v1983 = vsub.f32 %v1981, %v1982
    %v1984 = vand.u32 %v1983, 4294901760
    %1985 = vmatpush1.msra.mxu0 %v1984
    %1986 = vmatprep.subr.mxu0 0.0
    %v1987 = vand.u32 %v1857, 4294901760
    %v1988 = vsub.f32 %v1857, %v1987
    %v1989 = vand.u32 %v1988, 4294901760
    %v1990 = vsub.f32 %v1988, %v1989
    %v1991 = vand.u32 %v1990, 4294901760
    %1992 = vmatpush1.msra.mxu0 %v1991
    %1993 = vmatprep.subr.mxu0 0.0
    %v1994 = vand.u32 %v1858, 4294901760
    %v1995 = vsub.f32 %v1858, %v1994
    %v1996 = vand.u32 %v1995, 4294901760
    %v1997 = vsub.f32 %v1995, %v1996
    %v1998 = vand.u32 %v1997, 4294901760
    %1999 = vmatpush1.msra.mxu0 %v1998
    %2000 = vmatprep.subr.mxu0 0.0
    %2001 = vmatpush1.msra.mxu0 0.0
    %2002 = vmatprep.subr.mxu0 0.0
    %2003 = vmatpush1.msra.mxu0 0.0
    %2004 = vmatprep.subr.mxu0 0.0
    %2005 = vmatpush1.msra.mxu0 0.0
    %2006 = vmatprep.subr.mxu0 0.0
    %2007 = vmatpush1.msra.mxu0 0.0
    %2008 = vmatprep.subr.mxu0 0.0
    %2009 = vmatpush1.msra.mxu0 0.0
    %2010 = vmatprep.subr.mxu0 0.0
    %2011 = vmatpush1.msra.mxu0 0.0
    %2012 = vmatprep.subr.mxu0 0.0
    %2013 = vmatpush1.msra.mxu0 0.0
    %2014 = vmatprep.subr.mxu0 0.0
    %2015 = vmatpush1.msra.mxu0 0.0
    %2016 = vmatprep.subr.mxu0 0.0
    %2017 = vmatpush1.msra.mxu0 0.0
    %2018 = vmatprep.subr.mxu0 0.0
    %2019 = vmatpush1.msra.mxu0 0.0
    %2020 = vmatprep.subr.mxu0 0.0
    %2021 = vmatpush1.msra.mxu0 0.0
    %2022 = vmatprep.subr.mxu0 0.0
    %2023 = vmatpush1.msra.mxu0 0.0
    %2024 = vmatprep.subr.mxu0 0.0
    %2025 = vmatpush1.msra.mxu0 0.0
    %2026 = vmatprep.subr.mxu0 0.0
    %2027 = vmatpush1.msra.mxu0 0.0
    %2028 = vmatprep.subr.mxu0 0.0
    %2029 = vmatpush1.msra.mxu0 0.0
    %2030 = vmatprep.subr.mxu0 0.0
    %2031 = vmatpush1.msra.mxu0 0.0
    %2032 = vmatprep.subr.mxu0 0.0
    %2033 = vmatpush1.msra.mxu0 0.0
    %2034 = vmatprep.subr.mxu0 0.0
    %2035 = vmatpush1.msra.mxu0 0.0
    %2036 = vmatprep.subr.mxu0 0.0
    %2037 = vmatpush1.msra.mxu0 0.0
    %2038 = vmatprep.subr.mxu0 0.0
    %2039 = vmatpush1.msra.mxu0 0.0
    %2040 = vmatprep.subr.mxu0 0.0
    %2041 = vmatpush1.msra.mxu0 0.0
    %2042 = vmatprep.subr.mxu0 0.0
    %2043 = vmatpush1.msra.mxu0 0.0
    %2044 = vmatprep.subr.mxu0 0.0
    %2045 = vmatpush1.msra.mxu0 0.0
    %2046 = vmatprep.subr.mxu0 0.0
    %2047 = vmatpush1.msra.mxu0 0.0
    %2048 = vmatprep.subr.mxu0 0.0
    %2049 = vmatpush1.msra.mxu0 0.0
    %2050 = vmatprep.subr.mxu0 0.0
    %2051 = vmatpush1.msra.mxu0 0.0
    %2052 = vmatprep.mubr.f32.mxu0 0.0
    %v2053 = vand.u32 %v1862, 4294901760
    %2054 = vmatmul.mubr.f32.gmra.mrb[0].mxu0 %v2053
    %v2055 = vpop.f32.mrb[0].mxu0
    %v2056 = vadd.f32 %v1945, %v2055
    %v2057 = vpop.f32.mrb[0].mxu0
    %2058 = vmatprep.mubr.f32.mxu0 0.0
    %v2059 = vand.u32 %v1865, 4294901760
    %2060 = vmatmul.mubr.f32.gmra.mrb[0].mxu0 %v2059
    %v2061 = vpop.f32.mrb[0].mxu0
    %v2062 = vadd.f32 %v1955, %v2061
    %v2063 = vpop.f32.mrb[0].mxu0
    %2064 = vdwg.mxu0
    %2065 = vmatprep.subr.mxu0 0.0
    %v2066 = vand.u32 %v43, 4294901760
    %v2067 = vsub.f32 %v43, %v2066
    %2068 = vmatpush1.msra.mxu0 %v2067
    %2069 = vmatprep.subr.mxu0 0.0
    %v2070 = vand.u32 %v44, 4294901760
    %v2071 = vsub.f32 %v44, %v2070
    %2072 = vmatpush1.msra.mxu0 %v2071
    %2073 = vmatprep.subr.mxu0 0.0
    %v2074 = vand.u32 %v45, 4294901760
    %v2075 = vsub.f32 %v45, %v2074
    %2076 = vmatpush1.msra.mxu0 %v2075
    %2077 = vmatprep.subr.mxu0 0.0
    %v2078 = vand.u32 %v46, 4294901760
    %v2079 = vsub.f32 %v46, %v2078
    %2080 = vmatpush1.msra.mxu0 %v2079
    %2081 = vmatprep.subr.mxu0 0.0
    %v2082 = vand.u32 %v1857, 4294901760
    %v2083 = vsub.f32 %v1857, %v2082
    %2084 = vmatpush1.msra.mxu0 %v2083
    %2085 = vmatprep.subr.mxu0 0.0
    %v2086 = vand.u32 %v1858, 4294901760
    %v2087 = vsub.f32 %v1858, %v2086
    %2088 = vmatpush1.msra.mxu0 %v2087
    %2089 = vmatprep.subr.mxu0 0.0
    %2090 = vmatpush1.msra.mxu0 0.0
    %2091 = vmatprep.subr.mxu0 0.0
    %2092 = vmatpush1.msra.mxu0 0.0
    %2093 = vmatprep.subr.mxu0 0.0
    %2094 = vmatpush1.msra.mxu0 0.0
    %2095 = vmatprep.subr.mxu0 0.0
    %2096 = vmatpush1.msra.mxu0 0.0
    %2097 = vmatprep.subr.mxu0 0.0
    %2098 = vmatpush1.msra.mxu0 0.0
    %2099 = vmatprep.subr.mxu0 0.0
    %2100 = vmatpush1.msra.mxu0 0.0
    %2101 = vmatprep.subr.mxu0 0.0
    %2102 = vmatpush1.msra.mxu0 0.0
    %2103 = vmatprep.subr.mxu0 0.0
    %2104 = vmatpush1.msra.mxu0 0.0
    %2105 = vmatprep.subr.mxu0 0.0
    %2106 = vmatpush1.msra.mxu0 0.0
    %2107 = vmatprep.subr.mxu0 0.0
    %2108 = vmatpush1.msra.mxu0 0.0
    %2109 = vmatprep.subr.mxu0 0.0
    %2110 = vmatpush1.msra.mxu0 0.0
    %2111 = vmatprep.subr.mxu0 0.0
    %2112 = vmatpush1.msra.mxu0 0.0
    %2113 = vmatprep.subr.mxu0 0.0
    %2114 = vmatpush1.msra.mxu0 0.0
    %2115 = vmatprep.subr.mxu0 0.0
    %2116 = vmatpush1.msra.mxu0 0.0
    %2117 = vmatprep.subr.mxu0 0.0
    %2118 = vmatpush1.msra.mxu0 0.0
    %2119 = vmatprep.subr.mxu0 0.0
    %2120 = vmatpush1.msra.mxu0 0.0
    %2121 = vmatprep.subr.mxu0 0.0
    %2122 = vmatpush1.msra.mxu0 0.0
    %2123 = vmatprep.subr.mxu0 0.0
    %2124 = vmatpush1.msra.mxu0 0.0
    %2125 = vmatprep.subr.mxu0 0.0
    %2126 = vmatpush1.msra.mxu0 0.0
    %2127 = vmatprep.subr.mxu0 0.0
    %2128 = vmatpush1.msra.mxu0 0.0
    %2129 = vmatprep.subr.mxu0 0.0
    %2130 = vmatpush1.msra.mxu0 0.0
    %2131 = vmatprep.subr.mxu0 0.0
    %2132 = vmatpush1.msra.mxu0 0.0
    %2133 = vmatprep.subr.mxu0 0.0
    %2134 = vmatpush1.msra.mxu0 0.0
    %2135 = vmatprep.subr.mxu0 0.0
    %2136 = vmatpush1.msra.mxu0 0.0
    %2137 = vmatprep.subr.mxu0 0.0
    %2138 = vmatpush1.msra.mxu0 0.0
    %2139 = vmatprep.subr.mxu0 0.0
    %2140 = vmatpush1.msra.mxu0 0.0
    %2141 = vmatprep.mubr.f32.mxu0 0.0
    %v2142 = vand.u32 %v1862, 4294901760
    %v2143 = vsub.f32 %v1862, %v2142
    %2144 = vmatmul.mubr.f32.gmra.mrb[0].mxu0 %v2143
    %v2145 = vpop.f32.mrb[0].mxu0
    %v2146 = vadd.f32 %v2056, %v2145
    %v2147 = vpop.f32.mrb[0].mxu0
    %2148 = vmatprep.mubr.f32.mxu0 0.0
    %v2149 = vand.u32 %v1865, 4294901760
    %v2150 = vsub.f32 %v1865, %v2149
    %2151 = vmatmul.mubr.f32.gmra.mrb[0].mxu0 %v2150
    %v2152 = vpop.f32.mrb[0].mxu0
    %v2153 = vadd.f32 %v2062, %v2152
    %v2154 = vpop.f32.mrb[0].mxu0
    %2155 = vdwg.mxu0
    %2156 = vmatprep.subr.mxu0 0.0
    %v2157 = vand.u32 %v43, 4294901760
    %2158 = vmatpush1.msra.mxu0 %v2157
    %2159 = vmatprep.subr.mxu0 0.0
    %v2160 = vand.u32 %v44, 4294901760
    %2161 = vmatpush1.msra.mxu0 %v2160
    %2162 = vmatprep.subr.mxu0 0.0
    %v2163 = vand.u32 %v45, 4294901760
    %2164 = vmatpush1.msra.mxu0 %v2163
    %2165 = vmatprep.subr.mxu0 0.0
    %v2166 = vand.u32 %v46, 4294901760
    %2167 = vmatpush1.msra.mxu0 %v2166
    %2168 = vmatprep.subr.mxu0 0.0
    %v2169 = vand.u32 %v1857, 4294901760
    %2170 = vmatpush1.msra.mxu0 %v2169
    %2171 = vmatprep.subr.mxu0 0.0
    %v2172 = vand.u32 %v1858, 4294901760
    %2173 = vmatpush1.msra.mxu0 %v2172
    %2174 = vmatprep.subr.mxu0 0.0
    %2175 = vmatpush1.msra.mxu0 0.0
    %2176 = vmatprep.subr.mxu0 0.0
    %2177 = vmatpush1.msra.mxu0 0.0
    %2178 = vmatprep.subr.mxu0 0.0
    %2179 = vmatpush1.msra.mxu0 0.0
    %2180 = vmatprep.subr.mxu0 0.0
    %2181 = vmatpush1.msra.mxu0 0.0
    %2182 = vmatprep.subr.mxu0 0.0
    %2183 = vmatpush1.msra.mxu0 0.0
    %2184 = vmatprep.subr.mxu0 0.0
    %2185 = vmatpush1.msra.mxu0 0.0
    %2186 = vmatprep.subr.mxu0 0.0
    %2187 = vmatpush1.msra.mxu0 0.0
    %2188 = vmatprep.subr.mxu0 0.0
    %2189 = vmatpush1.msra.mxu0 0.0
    %2190 = vmatprep.subr.mxu0 0.0
    %2191 = vmatpush1.msra.mxu0 0.0
    %2192 = vmatprep.subr.mxu0 0.0
    %2193 = vmatpush1.msra.mxu0 0.0
    %2194 = vmatprep.subr.mxu0 0.0
    %2195 = vmatpush1.msra.mxu0 0.0
    %2196 = vmatprep.subr.mxu0 0.0
    %2197 = vmatpush1.msra.mxu0 0.0
    %2198 = vmatprep.subr.mxu0 0.0
    %2199 = vmatpush1.msra.mxu0 0.0
    %2200 = vmatprep.subr.mxu0 0.0
    %2201 = vmatpush1.msra.mxu0 0.0
    %2202 = vmatprep.subr.mxu0 0.0
    %2203 = vmatpush1.msra.mxu0 0.0
    %2204 = vmatprep.subr.mxu0 0.0
    %2205 = vmatpush1.msra.mxu0 0.0
    %2206 = vmatprep.subr.mxu0 0.0
    %2207 = vmatpush1.msra.mxu0 0.0
    %2208 = vmatprep.subr.mxu0 0.0
    %2209 = vmatpush1.msra.mxu0 0.0
    %2210 = vmatprep.subr.mxu0 0.0
    %2211 = vmatpush1.msra.mxu0 0.0
    %2212 = vmatprep.subr.mxu0 0.0
    %2213 = vmatpush1.msra.mxu0 0.0
    %2214 = vmatprep.subr.mxu0 0.0
    %2215 = vmatpush1.msra.mxu0 0.0
    %2216 = vmatprep.subr.mxu0 0.0
    %2217 = vmatpush1.msra.mxu0 0.0
    %2218 = vmatprep.subr.mxu0 0.0
    %2219 = vmatpush1.msra.mxu0 0.0
    %2220 = vmatprep.subr.mxu0 0.0
    %2221 = vmatpush1.msra.mxu0 0.0
    %2222 = vmatprep.subr.mxu0 0.0
    %2223 = vmatpush1.msra.mxu0 0.0
    %2224 = vmatprep.subr.mxu0 0.0
    %2225 = vmatpush1.msra.mxu0 0.0
    %2226 = vmatprep.mubr.f32.mxu0 0.0
    %v2227 = vand.u32 %v1862, 4294901760
    %v2228 = vsub.f32 %v1862, %v2227
    %v2229 = vand.u32 %v2228, 4294901760
    %2230 = vmatmul.mubr.f32.gmra.mrb[0].mxu0 %v2229
    %v2231 = vpop.f32.mrb[0].mxu0
    %v2232 = vadd.f32 %v2146, %v2231
    %v2233 = vpop.f32.mrb[0].mxu0
    %2234 = vmatprep.mubr.f32.mxu0 0.0
    %v2235 = vand.u32 %v1865, 4294901760
    %v2236 = vsub.f32 %v1865, %v2235
    %v2237 = vand.u32 %v2236, 4294901760
    %2238 = vmatmul.mubr.f32.gmra.mrb[0].mxu0 %v2237
    %v2239 = vpop.f32.mrb[0].mxu0
    %v2240 = vadd.f32 %v2153, %v2239
    %v2241 = vpop.f32.mrb[0].mxu0
    %2242 = vdwg.mxu0
    %2243 = vmatprep.subr.mxu0 0.0
    %v2244 = vand.u32 %v43, 4294901760
    %v2245 = vsub.f32 %v43, %v2244
    %v2246 = vand.u32 %v2245, 4294901760
    %2247 = vmatpush1.msra.mxu0 %v2246
    %2248 = vmatprep.subr.mxu0 0.0
    %v2249 = vand.u32 %v44, 4294901760
    %v2250 = vsub.f32 %v44, %v2249
    %v2251 = vand.u32 %v2250, 4294901760
    %2252 = vmatpush1.msra.mxu0 %v2251
    %2253 = vmatprep.subr.mxu0 0.0
    %v2254 = vand.u32 %v45, 4294901760
    %v2255 = vsub.f32 %v45, %v2254
    %v2256 = vand.u32 %v2255, 4294901760
    %2257 = vmatpush1.msra.mxu0 %v2256
    %2258 = vmatprep.subr.mxu0 0.0
    %v2259 = vand.u32 %v46, 4294901760
    %v2260 = vsub.f32 %v46, %v2259
    %v2261 = vand.u32 %v2260, 4294901760
    %2262 = vmatpush1.msra.mxu0 %v2261
    %2263 = vmatprep.subr.mxu0 0.0
    %v2264 = vand.u32 %v1857, 4294901760
    %v2265 = vsub.f32 %v1857, %v2264
    %v2266 = vand.u32 %v2265, 4294901760
    %2267 = vmatpush1.msra.mxu0 %v2266
    %2268 = vmatprep.subr.mxu0 0.0
    %v2269 = vand.u32 %v1858, 4294901760
    %v2270 = vsub.f32 %v1858, %v2269
    %v2271 = vand.u32 %v2270, 4294901760
    %2272 = vmatpush1.msra.mxu0 %v2271
    %2273 = vmatprep.subr.mxu0 0.0
    %2274 = vmatpush1.msra.mxu0 0.0
    %2275 = vmatprep.subr.mxu0 0.0
    %2276 = vmatpush1.msra.mxu0 0.0
    %2277 = vmatprep.subr.mxu0 0.0
    %2278 = vmatpush1.msra.mxu0 0.0
    %2279 = vmatprep.subr.mxu0 0.0
    %2280 = vmatpush1.msra.mxu0 0.0
    %2281 = vmatprep.subr.mxu0 0.0
    %2282 = vmatpush1.msra.mxu0 0.0
    %2283 = vmatprep.subr.mxu0 0.0
    %2284 = vmatpush1.msra.mxu0 0.0
    %2285 = vmatprep.subr.mxu0 0.0
    %2286 = vmatpush1.msra.mxu0 0.0
    %2287 = vmatprep.subr.mxu0 0.0
    %2288 = vmatpush1.msra.mxu0 0.0
    %2289 = vmatprep.subr.mxu0 0.0
    %2290 = vmatpush1.msra.mxu0 0.0
    %2291 = vmatprep.subr.mxu0 0.0
    %2292 = vmatpush1.msra.mxu0 0.0
    %2293 = vmatprep.subr.mxu0 0.0
    %2294 = vmatpush1.msra.mxu0 0.0
    %2295 = vmatprep.subr.mxu0 0.0
    %2296 = vmatpush1.msra.mxu0 0.0
    %2297 = vmatprep.subr.mxu0 0.0
    %2298 = vmatpush1.msra.mxu0 0.0
    %2299 = vmatprep.subr.mxu0 0.0
    %2300 = vmatpush1.msra.mxu0 0.0
    %2301 = vmatprep.subr.mxu0 0.0
    %2302 = vmatpush1.msra.mxu0 0.0
    %2303 = vmatprep.subr.mxu0 0.0
    %2304 = vmatpush1.msra.mxu0 0.0
    %2305 = vmatprep.subr.mxu0 0.0
    %2306 = vmatpush1.msra.mxu0 0.0
    %2307 = vmatprep.subr.mxu0 0.0
    %2308 = vmatpush1.msra.mxu0 0.0
    %2309 = vmatprep.subr.mxu0 0.0
    %2310 = vmatpush1.msra.mxu0 0.0
    %2311 = vmatprep.subr.mxu0 0.0
    %2312 = vmatpush1.msra.mxu0 0.0
    %2313 = vmatprep.subr.mxu0 0.0
    %2314 = vmatpush1.msra.mxu0 0.0
    %2315 = vmatprep.subr.mxu0 0.0
    %2316 = vmatpush1.msra.mxu0 0.0
    %2317 = vmatprep.subr.mxu0 0.0
    %2318 = vmatpush1.msra.mxu0 0.0
    %2319 = vmatprep.subr.mxu0 0.0
    %2320 = vmatpush1.msra.mxu0 0.0
    %2321 = vmatprep.subr.mxu0 0.0
    %2322 = vmatpush1.msra.mxu0 0.0
    %2323 = vmatprep.subr.mxu0 0.0
    %2324 = vmatpush1.msra.mxu0 0.0
    %2325 = vmatprep.mubr.f32.mxu0 0.0
    %v2326 = vand.u32 %v1862, 4294901760
    %2327 = vmatmul.mubr.f32.gmra.mrb[0].mxu0 %v2326
    %v2328 = vpop.f32.mrb[0].mxu0
    %v2329 = vadd.f32 %v2232, %v2328
    %v2330 = vpop.f32.mrb[0].mxu0
    %2331 = vmatprep.mubr.f32.mxu0 0.0
    %v2332 = vand.u32 %v1865, 4294901760
    %2333 = vmatmul.mubr.f32.gmra.mrb[0].mxu0 %v2332
    %v2334 = vpop.f32.mrb[0].mxu0
    %v2335 = vadd.f32 %v2240, %v2334
    %v2336 = vpop.f32.mrb[0].mxu0
    %2337 = vdwg.mxu0
    %2338 = vmatprep.subr.mxu0 0.0
    %v2339 = vand.u32 %v43, 4294901760
    %2340 = vmatpush1.msra.mxu0 %v2339
    %2341 = vmatprep.subr.mxu0 0.0
    %v2342 = vand.u32 %v44, 4294901760
    %2343 = vmatpush1.msra.mxu0 %v2342
    %2344 = vmatprep.subr.mxu0 0.0
    %v2345 = vand.u32 %v45, 4294901760
    %2346 = vmatpush1.msra.mxu0 %v2345
    %2347 = vmatprep.subr.mxu0 0.0
    %v2348 = vand.u32 %v46, 4294901760
    %2349 = vmatpush1.msra.mxu0 %v2348
    %2350 = vmatprep.subr.mxu0 0.0
    %v2351 = vand.u32 %v1857, 4294901760
    %2352 = vmatpush1.msra.mxu0 %v2351
    %2353 = vmatprep.subr.mxu0 0.0
    %v2354 = vand.u32 %v1858, 4294901760
    %2355 = vmatpush1.msra.mxu0 %v2354
    %2356 = vmatprep.subr.mxu0 0.0
    %2357 = vmatpush1.msra.mxu0 0.0
    %2358 = vmatprep.subr.mxu0 0.0
    %2359 = vmatpush1.msra.mxu0 0.0
    %2360 = vmatprep.subr.mxu0 0.0
    %2361 = vmatpush1.msra.mxu0 0.0
    %2362 = vmatprep.subr.mxu0 0.0
    %2363 = vmatpush1.msra.mxu0 0.0
    %2364 = vmatprep.subr.mxu0 0.0
    %2365 = vmatpush1.msra.mxu0 0.0
    %2366 = vmatprep.subr.mxu0 0.0
    %2367 = vmatpush1.msra.mxu0 0.0
    %2368 = vmatprep.subr.mxu0 0.0
    %2369 = vmatpush1.msra.mxu0 0.0
    %2370 = vmatprep.subr.mxu0 0.0
    %2371 = vmatpush1.msra.mxu0 0.0
    %2372 = vmatprep.subr.mxu0 0.0
    %2373 = vmatpush1.msra.mxu0 0.0
    %2374 = vmatprep.subr.mxu0 0.0
    %2375 = vmatpush1.msra.mxu0 0.0
    %2376 = vmatprep.subr.mxu0 0.0
    %2377 = vmatpush1.msra.mxu0 0.0
    %2378 = vmatprep.subr.mxu0 0.0
    %2379 = vmatpush1.msra.mxu0 0.0
    %2380 = vmatprep.subr.mxu0 0.0
    %2381 = vmatpush1.msra.mxu0 0.0
    %2382 = vmatprep.subr.mxu0 0.0
    %2383 = vmatpush1.msra.mxu0 0.0
    %2384 = vmatprep.subr.mxu0 0.0
    %2385 = vmatpush1.msra.mxu0 0.0
    %2386 = vmatprep.subr.mxu0 0.0
    %2387 = vmatpush1.msra.mxu0 0.0
    %2388 = vmatprep.subr.mxu0 0.0
    %2389 = vmatpush1.msra.mxu0 0.0
    %2390 = vmatprep.subr.mxu0 0.0
    %2391 = vmatpush1.msra.mxu0 0.0
    %2392 = vmatprep.subr.mxu0 0.0
    %2393 = vmatpush1.msra.mxu0 0.0
    %2394 = vmatprep.subr.mxu0 0.0
    %2395 = vmatpush1.msra.mxu0 0.0
    %2396 = vmatprep.subr.mxu0 0.0
    %2397 = vmatpush1.msra.mxu0 0.0
    %2398 = vmatprep.subr.mxu0 0.0
    %2399 = vmatpush1.msra.mxu0 0.0
    %2400 = vmatprep.subr.mxu0 0.0
    %2401 = vmatpush1.msra.mxu0 0.0
    %2402 = vmatprep.subr.mxu0 0.0
    %2403 = vmatpush1.msra.mxu0 0.0
    %2404 = vmatprep.subr.mxu0 0.0
    %2405 = vmatpush1.msra.mxu0 0.0
    %2406 = vmatprep.subr.mxu0 0.0
    %2407 = vmatpush1.msra.mxu0 0.0
    %2408 = vmatprep.mubr.f32.mxu0 0.0
    %v2409 = vand.u32 %v1862, 4294901760
    %2410 = vmatmul.mubr.f32.gmra.mrb[0].mxu0 %v2409
    %v2411 = vpop.f32.mrb[0].mxu0
    %v2412 = vadd.f32 %v2329, %v2411
    %v2413 = vpop.f32.mrb[0].mxu0
    %2414 = vmatprep.mubr.f32.mxu0 0.0
    %v2415 = vand.u32 %v1865, 4294901760
    %2416 = vmatmul.mubr.f32.gmra.mrb[0].mxu0 %v2415
    %v2417 = vpop.f32.mrb[0].mxu0
    %v2418 = vadd.f32 %v2335, %v2417
    %v2419 = vpop.f32.mrb[0].mxu0
    %2420 = vdwg.mxu0
    %v2421 = vmul.f32 %v1857, %v2412
    %v2422 = vmul.f32 %v1858, %v2418
    %v2423 = vsel %vm61, %v2421, 0.0
    %2424 = vadd.xlane.f32.xlu0 %v2423
    %v2425 = vpop.xlane.xlu0 %2424
    %v2426 = vsel %vm61, %v2422, 0.0
    %2427 = vadd.xlane.f32.xlu0 %v2426
    %v2428 = vpop.xlane.xlu0 %2427
    %v2429 = vmul.f32 %v2425, %v1857
    %v2430 = vmul.f32 %v2428, %v1858
    %v2431 = vsub.f32 %v2412, %v2429
    %v2432 = vsub.f32 %v2418, %v2430
    %v2433 = vmul.f32 %v58, %v2431
    %v2434 = vmul.f32 %v58, %v2432
    %v2435 = vadd.f32 %v1857, %v2433
    %v2436 = vadd.f32 %v1858, %v2434
    %v2437 = vmul.f32 %v2435, %v2435
    %v2438 = vmul.f32 %v2436, %v2436
    %v2439 = vsel %vm61, %v2437, 0.0
    %2440 = vadd.xlane.f32.xlu0 %v2439
    %v2441 = vpop.xlane.xlu0 %2440
    %v2442 = vsel %vm61, %v2438, 0.0
    %2443 = vadd.xlane.f32.xlu0 %v2442
    %v2444 = vpop.xlane.xlu0 %2443
    %v2445 = vmax.f32 %v2441, 1e-24
    %v2446 = vmax.f32 %v2444, 1e-24
    %v2447 = vrsqrt.pop %v2445
    %v2448 = vrsqrt.pop %v2446
    %v2449 = vmul.f32 %v2435, %v2447
    %v2450 = vmul.f32 %v2436, %v2448
    %v2451 = vsel %vm61, %v2449, %v77
    %v2452 = vsel %vm61, %v2450, %v79
    %v2454 = vsel %vm84, %v2451, 0
    %v2457 = vsel %vm84, %v2452, 0
    %2459 = vmatprep.subr.mxu0 0.0
    %v2460 = vand.u32 %v43, 4294901760
    %2461 = vmatpush1.msra.mxu0 %v2460
    %2462 = vmatprep.subr.mxu0 0.0
    %v2463 = vand.u32 %v44, 4294901760
    %2464 = vmatpush1.msra.mxu0 %v2463
    %2465 = vmatprep.subr.mxu0 0.0
    %v2466 = vand.u32 %v45, 4294901760
    %2467 = vmatpush1.msra.mxu0 %v2466
    %2468 = vmatprep.subr.mxu0 0.0
    %v2469 = vand.u32 %v46, 4294901760
    %2470 = vmatpush1.msra.mxu0 %v2469
    %2471 = vmatprep.subr.mxu0 0.0
    %v2472 = vand.u32 %v2449, 4294901760
    %2473 = vmatpush1.msra.mxu0 %v2472
    %2474 = vmatprep.subr.mxu0 0.0
    %v2475 = vand.u32 %v2450, 4294901760
    %2476 = vmatpush1.msra.mxu0 %v2475
    %2477 = vmatprep.subr.mxu0 0.0
    %2478 = vmatpush1.msra.mxu0 0.0
    %2479 = vmatprep.subr.mxu0 0.0
    %2480 = vmatpush1.msra.mxu0 0.0
    %2481 = vmatprep.subr.mxu0 0.0
    %2482 = vmatpush1.msra.mxu0 0.0
    %2483 = vmatprep.subr.mxu0 0.0
    %2484 = vmatpush1.msra.mxu0 0.0
    %2485 = vmatprep.subr.mxu0 0.0
    %2486 = vmatpush1.msra.mxu0 0.0
    %2487 = vmatprep.subr.mxu0 0.0
    %2488 = vmatpush1.msra.mxu0 0.0
    %2489 = vmatprep.subr.mxu0 0.0
    %2490 = vmatpush1.msra.mxu0 0.0
    %2491 = vmatprep.subr.mxu0 0.0
    %2492 = vmatpush1.msra.mxu0 0.0
    %2493 = vmatprep.subr.mxu0 0.0
    %2494 = vmatpush1.msra.mxu0 0.0
    %2495 = vmatprep.subr.mxu0 0.0
    %2496 = vmatpush1.msra.mxu0 0.0
    %2497 = vmatprep.subr.mxu0 0.0
    %2498 = vmatpush1.msra.mxu0 0.0
    %2499 = vmatprep.subr.mxu0 0.0
    %2500 = vmatpush1.msra.mxu0 0.0
    %2501 = vmatprep.subr.mxu0 0.0
    %2502 = vmatpush1.msra.mxu0 0.0
    %2503 = vmatprep.subr.mxu0 0.0
    %2504 = vmatpush1.msra.mxu0 0.0
    %2505 = vmatprep.subr.mxu0 0.0
    %2506 = vmatpush1.msra.mxu0 0.0
    %2507 = vmatprep.subr.mxu0 0.0
    %2508 = vmatpush1.msra.mxu0 0.0
    %2509 = vmatprep.subr.mxu0 0.0
    %2510 = vmatpush1.msra.mxu0 0.0
    %2511 = vmatprep.subr.mxu0 0.0
    %2512 = vmatpush1.msra.mxu0 0.0
    %2513 = vmatprep.subr.mxu0 0.0
    %2514 = vmatpush1.msra.mxu0 0.0
    %2515 = vmatprep.subr.mxu0 0.0
    %2516 = vmatpush1.msra.mxu0 0.0
    %2517 = vmatprep.subr.mxu0 0.0
    %2518 = vmatpush1.msra.mxu0 0.0
    %2519 = vmatprep.subr.mxu0 0.0
    %2520 = vmatpush1.msra.mxu0 0.0
    %2521 = vmatprep.subr.mxu0 0.0
    %2522 = vmatpush1.msra.mxu0 0.0
    %2523 = vmatprep.subr.mxu0 0.0
    %2524 = vmatpush1.msra.mxu0 0.0
    %2525 = vmatprep.subr.mxu0 0.0
    %2526 = vmatpush1.msra.mxu0 0.0
    %2527 = vmatprep.subr.mxu0 0.0
    %2528 = vmatpush1.msra.mxu0 0.0
    %2529 = vmatprep.mubr.f32.mxu0 0.0
    %v2530 = vand.u32 %v2454, 4294901760
    %v2531 = vsub.f32 %v2454, %v2530
    %v2532 = vand.u32 %v2531, 4294901760
    %v2533 = vsub.f32 %v2531, %v2532
    %v2534 = vand.u32 %v2533, 4294901760
    %2535 = vmatmul.mubr.f32.gmra.mrb[0].mxu0 %v2534
    %v2536 = vpop.f32.mrb[0].mxu0
    %v2537 = vadd.f32 %v47, %v2536
    %v2538 = vpop.f32.mrb[0].mxu0
    %2539 = vmatprep.mubr.f32.mxu0 0.0
    %v2540 = vand.u32 %v2457, 4294901760
    %v2541 = vsub.f32 %v2457, %v2540
    %v2542 = vand.u32 %v2541, 4294901760
    %v2543 = vsub.f32 %v2541, %v2542
    %v2544 = vand.u32 %v2543, 4294901760
    %2545 = vmatmul.mubr.f32.gmra.mrb[0].mxu0 %v2544
    %v2546 = vpop.f32.mrb[0].mxu0
    %v2547 = vadd.f32 %v47, %v2546
    %v2548 = vpop.f32.mrb[0].mxu0
    %2549 = vdwg.mxu0
    %2550 = vmatprep.subr.mxu0 0.0
    %v2551 = vand.u32 %v43, 4294901760
    %v2552 = vsub.f32 %v43, %v2551
    %v2553 = vand.u32 %v2552, 4294901760
    %v2554 = vsub.f32 %v2552, %v2553
    %v2555 = vand.u32 %v2554, 4294901760
    %2556 = vmatpush1.msra.mxu0 %v2555
    %2557 = vmatprep.subr.mxu0 0.0
    %v2558 = vand.u32 %v44, 4294901760
    %v2559 = vsub.f32 %v44, %v2558
    %v2560 = vand.u32 %v2559, 4294901760
    %v2561 = vsub.f32 %v2559, %v2560
    %v2562 = vand.u32 %v2561, 4294901760
    %2563 = vmatpush1.msra.mxu0 %v2562
    %2564 = vmatprep.subr.mxu0 0.0
    %v2565 = vand.u32 %v45, 4294901760
    %v2566 = vsub.f32 %v45, %v2565
    %v2567 = vand.u32 %v2566, 4294901760
    %v2568 = vsub.f32 %v2566, %v2567
    %v2569 = vand.u32 %v2568, 4294901760
    %2570 = vmatpush1.msra.mxu0 %v2569
    %2571 = vmatprep.subr.mxu0 0.0
    %v2572 = vand.u32 %v46, 4294901760
    %v2573 = vsub.f32 %v46, %v2572
    %v2574 = vand.u32 %v2573, 4294901760
    %v2575 = vsub.f32 %v2573, %v2574
    %v2576 = vand.u32 %v2575, 4294901760
    %2577 = vmatpush1.msra.mxu0 %v2576
    %2578 = vmatprep.subr.mxu0 0.0
    %v2579 = vand.u32 %v2449, 4294901760
    %v2580 = vsub.f32 %v2449, %v2579
    %v2581 = vand.u32 %v2580, 4294901760
    %v2582 = vsub.f32 %v2580, %v2581
    %v2583 = vand.u32 %v2582, 4294901760
    %2584 = vmatpush1.msra.mxu0 %v2583
    %2585 = vmatprep.subr.mxu0 0.0
    %v2586 = vand.u32 %v2450, 4294901760
    %v2587 = vsub.f32 %v2450, %v2586
    %v2588 = vand.u32 %v2587, 4294901760
    %v2589 = vsub.f32 %v2587, %v2588
    %v2590 = vand.u32 %v2589, 4294901760
    %2591 = vmatpush1.msra.mxu0 %v2590
    %2592 = vmatprep.subr.mxu0 0.0
    %2593 = vmatpush1.msra.mxu0 0.0
    %2594 = vmatprep.subr.mxu0 0.0
    %2595 = vmatpush1.msra.mxu0 0.0
    %2596 = vmatprep.subr.mxu0 0.0
    %2597 = vmatpush1.msra.mxu0 0.0
    %2598 = vmatprep.subr.mxu0 0.0
    %2599 = vmatpush1.msra.mxu0 0.0
    %2600 = vmatprep.subr.mxu0 0.0
    %2601 = vmatpush1.msra.mxu0 0.0
    %2602 = vmatprep.subr.mxu0 0.0
    %2603 = vmatpush1.msra.mxu0 0.0
    %2604 = vmatprep.subr.mxu0 0.0
    %2605 = vmatpush1.msra.mxu0 0.0
    %2606 = vmatprep.subr.mxu0 0.0
    %2607 = vmatpush1.msra.mxu0 0.0
    %2608 = vmatprep.subr.mxu0 0.0
    %2609 = vmatpush1.msra.mxu0 0.0
    %2610 = vmatprep.subr.mxu0 0.0
    %2611 = vmatpush1.msra.mxu0 0.0
    %2612 = vmatprep.subr.mxu0 0.0
    %2613 = vmatpush1.msra.mxu0 0.0
    %2614 = vmatprep.subr.mxu0 0.0
    %2615 = vmatpush1.msra.mxu0 0.0
    %2616 = vmatprep.subr.mxu0 0.0
    %2617 = vmatpush1.msra.mxu0 0.0
    %2618 = vmatprep.subr.mxu0 0.0
    %2619 = vmatpush1.msra.mxu0 0.0
    %2620 = vmatprep.subr.mxu0 0.0
    %2621 = vmatpush1.msra.mxu0 0.0
    %2622 = vmatprep.subr.mxu0 0.0
    %2623 = vmatpush1.msra.mxu0 0.0
    %2624 = vmatprep.subr.mxu0 0.0
    %2625 = vmatpush1.msra.mxu0 0.0
    %2626 = vmatprep.subr.mxu0 0.0
    %2627 = vmatpush1.msra.mxu0 0.0
    %2628 = vmatprep.subr.mxu0 0.0
    %2629 = vmatpush1.msra.mxu0 0.0
    %2630 = vmatprep.subr.mxu0 0.0
    %2631 = vmatpush1.msra.mxu0 0.0
    %2632 = vmatprep.subr.mxu0 0.0
    %2633 = vmatpush1.msra.mxu0 0.0
    %2634 = vmatprep.subr.mxu0 0.0
    %2635 = vmatpush1.msra.mxu0 0.0
    %2636 = vmatprep.subr.mxu0 0.0
    %2637 = vmatpush1.msra.mxu0 0.0
    %2638 = vmatprep.subr.mxu0 0.0
    %2639 = vmatpush1.msra.mxu0 0.0
    %2640 = vmatprep.subr.mxu0 0.0
    %2641 = vmatpush1.msra.mxu0 0.0
    %2642 = vmatprep.subr.mxu0 0.0
    %2643 = vmatpush1.msra.mxu0 0.0
    %2644 = vmatprep.mubr.f32.mxu0 0.0
    %v2645 = vand.u32 %v2454, 4294901760
    %2646 = vmatmul.mubr.f32.gmra.mrb[0].mxu0 %v2645
    %v2647 = vpop.f32.mrb[0].mxu0
    %v2648 = vadd.f32 %v2537, %v2647
    %v2649 = vpop.f32.mrb[0].mxu0
    %2650 = vmatprep.mubr.f32.mxu0 0.0
    %v2651 = vand.u32 %v2457, 4294901760
    %2652 = vmatmul.mubr.f32.gmra.mrb[0].mxu0 %v2651
    %v2653 = vpop.f32.mrb[0].mxu0
    %v2654 = vadd.f32 %v2547, %v2653
    %v2655 = vpop.f32.mrb[0].mxu0
    %2656 = vdwg.mxu0
    %2657 = vmatprep.subr.mxu0 0.0
    %v2658 = vand.u32 %v43, 4294901760
    %v2659 = vsub.f32 %v43, %v2658
    %2660 = vmatpush1.msra.mxu0 %v2659
    %2661 = vmatprep.subr.mxu0 0.0
    %v2662 = vand.u32 %v44, 4294901760
    %v2663 = vsub.f32 %v44, %v2662
    %2664 = vmatpush1.msra.mxu0 %v2663
    %2665 = vmatprep.subr.mxu0 0.0
    %v2666 = vand.u32 %v45, 4294901760
    %v2667 = vsub.f32 %v45, %v2666
    %2668 = vmatpush1.msra.mxu0 %v2667
    %2669 = vmatprep.subr.mxu0 0.0
    %v2670 = vand.u32 %v46, 4294901760
    %v2671 = vsub.f32 %v46, %v2670
    %2672 = vmatpush1.msra.mxu0 %v2671
    %2673 = vmatprep.subr.mxu0 0.0
    %v2674 = vand.u32 %v2449, 4294901760
    %v2675 = vsub.f32 %v2449, %v2674
    %2676 = vmatpush1.msra.mxu0 %v2675
    %2677 = vmatprep.subr.mxu0 0.0
    %v2678 = vand.u32 %v2450, 4294901760
    %v2679 = vsub.f32 %v2450, %v2678
    %2680 = vmatpush1.msra.mxu0 %v2679
    %2681 = vmatprep.subr.mxu0 0.0
    %2682 = vmatpush1.msra.mxu0 0.0
    %2683 = vmatprep.subr.mxu0 0.0
    %2684 = vmatpush1.msra.mxu0 0.0
    %2685 = vmatprep.subr.mxu0 0.0
    %2686 = vmatpush1.msra.mxu0 0.0
    %2687 = vmatprep.subr.mxu0 0.0
    %2688 = vmatpush1.msra.mxu0 0.0
    %2689 = vmatprep.subr.mxu0 0.0
    %2690 = vmatpush1.msra.mxu0 0.0
    %2691 = vmatprep.subr.mxu0 0.0
    %2692 = vmatpush1.msra.mxu0 0.0
    %2693 = vmatprep.subr.mxu0 0.0
    %2694 = vmatpush1.msra.mxu0 0.0
    %2695 = vmatprep.subr.mxu0 0.0
    %2696 = vmatpush1.msra.mxu0 0.0
    %2697 = vmatprep.subr.mxu0 0.0
    %2698 = vmatpush1.msra.mxu0 0.0
    %2699 = vmatprep.subr.mxu0 0.0
    %2700 = vmatpush1.msra.mxu0 0.0
    %2701 = vmatprep.subr.mxu0 0.0
    %2702 = vmatpush1.msra.mxu0 0.0
    %2703 = vmatprep.subr.mxu0 0.0
    %2704 = vmatpush1.msra.mxu0 0.0
    %2705 = vmatprep.subr.mxu0 0.0
    %2706 = vmatpush1.msra.mxu0 0.0
    %2707 = vmatprep.subr.mxu0 0.0
    %2708 = vmatpush1.msra.mxu0 0.0
    %2709 = vmatprep.subr.mxu0 0.0
    %2710 = vmatpush1.msra.mxu0 0.0
    %2711 = vmatprep.subr.mxu0 0.0
    %2712 = vmatpush1.msra.mxu0 0.0
    %2713 = vmatprep.subr.mxu0 0.0
    %2714 = vmatpush1.msra.mxu0 0.0
    %2715 = vmatprep.subr.mxu0 0.0
    %2716 = vmatpush1.msra.mxu0 0.0
    %2717 = vmatprep.subr.mxu0 0.0
    %2718 = vmatpush1.msra.mxu0 0.0
    %2719 = vmatprep.subr.mxu0 0.0
    %2720 = vmatpush1.msra.mxu0 0.0
    %2721 = vmatprep.subr.mxu0 0.0
    %2722 = vmatpush1.msra.mxu0 0.0
    %2723 = vmatprep.subr.mxu0 0.0
    %2724 = vmatpush1.msra.mxu0 0.0
    %2725 = vmatprep.subr.mxu0 0.0
    %2726 = vmatpush1.msra.mxu0 0.0
    %2727 = vmatprep.subr.mxu0 0.0
    %2728 = vmatpush1.msra.mxu0 0.0
    %2729 = vmatprep.subr.mxu0 0.0
    %2730 = vmatpush1.msra.mxu0 0.0
    %2731 = vmatprep.subr.mxu0 0.0
    %2732 = vmatpush1.msra.mxu0 0.0
    %2733 = vmatprep.mubr.f32.mxu0 0.0
    %v2734 = vand.u32 %v2454, 4294901760
    %v2735 = vsub.f32 %v2454, %v2734
    %2736 = vmatmul.mubr.f32.gmra.mrb[0].mxu0 %v2735
    %v2737 = vpop.f32.mrb[0].mxu0
    %v2738 = vadd.f32 %v2648, %v2737
    %v2739 = vpop.f32.mrb[0].mxu0
    %2740 = vmatprep.mubr.f32.mxu0 0.0
    %v2741 = vand.u32 %v2457, 4294901760
    %v2742 = vsub.f32 %v2457, %v2741
    %2743 = vmatmul.mubr.f32.gmra.mrb[0].mxu0 %v2742
    %v2744 = vpop.f32.mrb[0].mxu0
    %v2745 = vadd.f32 %v2654, %v2744
    %v2746 = vpop.f32.mrb[0].mxu0
    %2747 = vdwg.mxu0
    %2748 = vmatprep.subr.mxu0 0.0
    %v2749 = vand.u32 %v43, 4294901760
    %2750 = vmatpush1.msra.mxu0 %v2749
    %2751 = vmatprep.subr.mxu0 0.0
    %v2752 = vand.u32 %v44, 4294901760
    %2753 = vmatpush1.msra.mxu0 %v2752
    %2754 = vmatprep.subr.mxu0 0.0
    %v2755 = vand.u32 %v45, 4294901760
    %2756 = vmatpush1.msra.mxu0 %v2755
    %2757 = vmatprep.subr.mxu0 0.0
    %v2758 = vand.u32 %v46, 4294901760
    %2759 = vmatpush1.msra.mxu0 %v2758
    %2760 = vmatprep.subr.mxu0 0.0
    %v2761 = vand.u32 %v2449, 4294901760
    %2762 = vmatpush1.msra.mxu0 %v2761
    %2763 = vmatprep.subr.mxu0 0.0
    %v2764 = vand.u32 %v2450, 4294901760
    %2765 = vmatpush1.msra.mxu0 %v2764
    %2766 = vmatprep.subr.mxu0 0.0
    %2767 = vmatpush1.msra.mxu0 0.0
    %2768 = vmatprep.subr.mxu0 0.0
    %2769 = vmatpush1.msra.mxu0 0.0
    %2770 = vmatprep.subr.mxu0 0.0
    %2771 = vmatpush1.msra.mxu0 0.0
    %2772 = vmatprep.subr.mxu0 0.0
    %2773 = vmatpush1.msra.mxu0 0.0
    %2774 = vmatprep.subr.mxu0 0.0
    %2775 = vmatpush1.msra.mxu0 0.0
    %2776 = vmatprep.subr.mxu0 0.0
    %2777 = vmatpush1.msra.mxu0 0.0
    %2778 = vmatprep.subr.mxu0 0.0
    %2779 = vmatpush1.msra.mxu0 0.0
    %2780 = vmatprep.subr.mxu0 0.0
    %2781 = vmatpush1.msra.mxu0 0.0
    %2782 = vmatprep.subr.mxu0 0.0
    %2783 = vmatpush1.msra.mxu0 0.0
    %2784 = vmatprep.subr.mxu0 0.0
    %2785 = vmatpush1.msra.mxu0 0.0
    %2786 = vmatprep.subr.mxu0 0.0
    %2787 = vmatpush1.msra.mxu0 0.0
    %2788 = vmatprep.subr.mxu0 0.0
    %2789 = vmatpush1.msra.mxu0 0.0
    %2790 = vmatprep.subr.mxu0 0.0
    %2791 = vmatpush1.msra.mxu0 0.0
    %2792 = vmatprep.subr.mxu0 0.0
    %2793 = vmatpush1.msra.mxu0 0.0
    %2794 = vmatprep.subr.mxu0 0.0
    %2795 = vmatpush1.msra.mxu0 0.0
    %2796 = vmatprep.subr.mxu0 0.0
    %2797 = vmatpush1.msra.mxu0 0.0
    %2798 = vmatprep.subr.mxu0 0.0
    %2799 = vmatpush1.msra.mxu0 0.0
    %2800 = vmatprep.subr.mxu0 0.0
    %2801 = vmatpush1.msra.mxu0 0.0
    %2802 = vmatprep.subr.mxu0 0.0
    %2803 = vmatpush1.msra.mxu0 0.0
    %2804 = vmatprep.subr.mxu0 0.0
    %2805 = vmatpush1.msra.mxu0 0.0
    %2806 = vmatprep.subr.mxu0 0.0
    %2807 = vmatpush1.msra.mxu0 0.0
    %2808 = vmatprep.subr.mxu0 0.0
    %2809 = vmatpush1.msra.mxu0 0.0
    %2810 = vmatprep.subr.mxu0 0.0
    %2811 = vmatpush1.msra.mxu0 0.0
    %2812 = vmatprep.subr.mxu0 0.0
    %2813 = vmatpush1.msra.mxu0 0.0
    %2814 = vmatprep.subr.mxu0 0.0
    %2815 = vmatpush1.msra.mxu0 0.0
    %2816 = vmatprep.subr.mxu0 0.0
    %2817 = vmatpush1.msra.mxu0 0.0
    %2818 = vmatprep.mubr.f32.mxu0 0.0
    %v2819 = vand.u32 %v2454, 4294901760
    %v2820 = vsub.f32 %v2454, %v2819
    %v2821 = vand.u32 %v2820, 4294901760
    %2822 = vmatmul.mubr.f32.gmra.mrb[0].mxu0 %v2821
    %v2823 = vpop.f32.mrb[0].mxu0
    %v2824 = vadd.f32 %v2738, %v2823
    %v2825 = vpop.f32.mrb[0].mxu0
    %2826 = vmatprep.mubr.f32.mxu0 0.0
    %v2827 = vand.u32 %v2457, 4294901760
    %v2828 = vsub.f32 %v2457, %v2827
    %v2829 = vand.u32 %v2828, 4294901760
    %2830 = vmatmul.mubr.f32.gmra.mrb[0].mxu0 %v2829
    %v2831 = vpop.f32.mrb[0].mxu0
    %v2832 = vadd.f32 %v2745, %v2831
    %v2833 = vpop.f32.mrb[0].mxu0
    %2834 = vdwg.mxu0
    %2835 = vmatprep.subr.mxu0 0.0
    %v2836 = vand.u32 %v43, 4294901760
    %v2837 = vsub.f32 %v43, %v2836
    %v2838 = vand.u32 %v2837, 4294901760
    %2839 = vmatpush1.msra.mxu0 %v2838
    %2840 = vmatprep.subr.mxu0 0.0
    %v2841 = vand.u32 %v44, 4294901760
    %v2842 = vsub.f32 %v44, %v2841
    %v2843 = vand.u32 %v2842, 4294901760
    %2844 = vmatpush1.msra.mxu0 %v2843
    %2845 = vmatprep.subr.mxu0 0.0
    %v2846 = vand.u32 %v45, 4294901760
    %v2847 = vsub.f32 %v45, %v2846
    %v2848 = vand.u32 %v2847, 4294901760
    %2849 = vmatpush1.msra.mxu0 %v2848
    %2850 = vmatprep.subr.mxu0 0.0
    %v2851 = vand.u32 %v46, 4294901760
    %v2852 = vsub.f32 %v46, %v2851
    %v2853 = vand.u32 %v2852, 4294901760
    %2854 = vmatpush1.msra.mxu0 %v2853
    %2855 = vmatprep.subr.mxu0 0.0
    %v2856 = vand.u32 %v2449, 4294901760
    %v2857 = vsub.f32 %v2449, %v2856
    %v2858 = vand.u32 %v2857, 4294901760
    %2859 = vmatpush1.msra.mxu0 %v2858
    %2860 = vmatprep.subr.mxu0 0.0
    %v2861 = vand.u32 %v2450, 4294901760
    %v2862 = vsub.f32 %v2450, %v2861
    %v2863 = vand.u32 %v2862, 4294901760
    %2864 = vmatpush1.msra.mxu0 %v2863
    %2865 = vmatprep.subr.mxu0 0.0
    %2866 = vmatpush1.msra.mxu0 0.0
    %2867 = vmatprep.subr.mxu0 0.0
    %2868 = vmatpush1.msra.mxu0 0.0
    %2869 = vmatprep.subr.mxu0 0.0
    %2870 = vmatpush1.msra.mxu0 0.0
    %2871 = vmatprep.subr.mxu0 0.0
    %2872 = vmatpush1.msra.mxu0 0.0
    %2873 = vmatprep.subr.mxu0 0.0
    %2874 = vmatpush1.msra.mxu0 0.0
    %2875 = vmatprep.subr.mxu0 0.0
    %2876 = vmatpush1.msra.mxu0 0.0
    %2877 = vmatprep.subr.mxu0 0.0
    %2878 = vmatpush1.msra.mxu0 0.0
    %2879 = vmatprep.subr.mxu0 0.0
    %2880 = vmatpush1.msra.mxu0 0.0
    %2881 = vmatprep.subr.mxu0 0.0
    %2882 = vmatpush1.msra.mxu0 0.0
    %2883 = vmatprep.subr.mxu0 0.0
    %2884 = vmatpush1.msra.mxu0 0.0
    %2885 = vmatprep.subr.mxu0 0.0
    %2886 = vmatpush1.msra.mxu0 0.0
    %2887 = vmatprep.subr.mxu0 0.0
    %2888 = vmatpush1.msra.mxu0 0.0
    %2889 = vmatprep.subr.mxu0 0.0
    %2890 = vmatpush1.msra.mxu0 0.0
    %2891 = vmatprep.subr.mxu0 0.0
    %2892 = vmatpush1.msra.mxu0 0.0
    %2893 = vmatprep.subr.mxu0 0.0
    %2894 = vmatpush1.msra.mxu0 0.0
    %2895 = vmatprep.subr.mxu0 0.0
    %2896 = vmatpush1.msra.mxu0 0.0
    %2897 = vmatprep.subr.mxu0 0.0
    %2898 = vmatpush1.msra.mxu0 0.0
    %2899 = vmatprep.subr.mxu0 0.0
    %2900 = vmatpush1.msra.mxu0 0.0
    %2901 = vmatprep.subr.mxu0 0.0
    %2902 = vmatpush1.msra.mxu0 0.0
    %2903 = vmatprep.subr.mxu0 0.0
    %2904 = vmatpush1.msra.mxu0 0.0
    %2905 = vmatprep.subr.mxu0 0.0
    %2906 = vmatpush1.msra.mxu0 0.0
    %2907 = vmatprep.subr.mxu0 0.0
    %2908 = vmatpush1.msra.mxu0 0.0
    %2909 = vmatprep.subr.mxu0 0.0
    %2910 = vmatpush1.msra.mxu0 0.0
    %2911 = vmatprep.subr.mxu0 0.0
    %2912 = vmatpush1.msra.mxu0 0.0
    %2913 = vmatprep.subr.mxu0 0.0
    %2914 = vmatpush1.msra.mxu0 0.0
    %2915 = vmatprep.subr.mxu0 0.0
    %2916 = vmatpush1.msra.mxu0 0.0
    %2917 = vmatprep.mubr.f32.mxu0 0.0
    %v2918 = vand.u32 %v2454, 4294901760
    %2919 = vmatmul.mubr.f32.gmra.mrb[0].mxu0 %v2918
    %v2920 = vpop.f32.mrb[0].mxu0
    %v2921 = vadd.f32 %v2824, %v2920
    %v2922 = vpop.f32.mrb[0].mxu0
    %2923 = vmatprep.mubr.f32.mxu0 0.0
    %v2924 = vand.u32 %v2457, 4294901760
    %2925 = vmatmul.mubr.f32.gmra.mrb[0].mxu0 %v2924
    %v2926 = vpop.f32.mrb[0].mxu0
    %v2927 = vadd.f32 %v2832, %v2926
    %v2928 = vpop.f32.mrb[0].mxu0
    %2929 = vdwg.mxu0
    %2930 = vmatprep.subr.mxu0 0.0
    %v2931 = vand.u32 %v43, 4294901760
    %2932 = vmatpush1.msra.mxu0 %v2931
    %2933 = vmatprep.subr.mxu0 0.0
    %v2934 = vand.u32 %v44, 4294901760
    %2935 = vmatpush1.msra.mxu0 %v2934
    %2936 = vmatprep.subr.mxu0 0.0
    %v2937 = vand.u32 %v45, 4294901760
    %2938 = vmatpush1.msra.mxu0 %v2937
    %2939 = vmatprep.subr.mxu0 0.0
    %v2940 = vand.u32 %v46, 4294901760
    %2941 = vmatpush1.msra.mxu0 %v2940
    %2942 = vmatprep.subr.mxu0 0.0
    %v2943 = vand.u32 %v2449, 4294901760
    %2944 = vmatpush1.msra.mxu0 %v2943
    %2945 = vmatprep.subr.mxu0 0.0
    %v2946 = vand.u32 %v2450, 4294901760
    %2947 = vmatpush1.msra.mxu0 %v2946
    %2948 = vmatprep.subr.mxu0 0.0
    %2949 = vmatpush1.msra.mxu0 0.0
    %2950 = vmatprep.subr.mxu0 0.0
    %2951 = vmatpush1.msra.mxu0 0.0
    %2952 = vmatprep.subr.mxu0 0.0
    %2953 = vmatpush1.msra.mxu0 0.0
    %2954 = vmatprep.subr.mxu0 0.0
    %2955 = vmatpush1.msra.mxu0 0.0
    %2956 = vmatprep.subr.mxu0 0.0
    %2957 = vmatpush1.msra.mxu0 0.0
    %2958 = vmatprep.subr.mxu0 0.0
    %2959 = vmatpush1.msra.mxu0 0.0
    %2960 = vmatprep.subr.mxu0 0.0
    %2961 = vmatpush1.msra.mxu0 0.0
    %2962 = vmatprep.subr.mxu0 0.0
    %2963 = vmatpush1.msra.mxu0 0.0
    %2964 = vmatprep.subr.mxu0 0.0
    %2965 = vmatpush1.msra.mxu0 0.0
    %2966 = vmatprep.subr.mxu0 0.0
    %2967 = vmatpush1.msra.mxu0 0.0
    %2968 = vmatprep.subr.mxu0 0.0
    %2969 = vmatpush1.msra.mxu0 0.0
    %2970 = vmatprep.subr.mxu0 0.0
    %2971 = vmatpush1.msra.mxu0 0.0
    %2972 = vmatprep.subr.mxu0 0.0
    %2973 = vmatpush1.msra.mxu0 0.0
    %2974 = vmatprep.subr.mxu0 0.0
    %2975 = vmatpush1.msra.mxu0 0.0
    %2976 = vmatprep.subr.mxu0 0.0
    %2977 = vmatpush1.msra.mxu0 0.0
    %2978 = vmatprep.subr.mxu0 0.0
    %2979 = vmatpush1.msra.mxu0 0.0
    %2980 = vmatprep.subr.mxu0 0.0
    %2981 = vmatpush1.msra.mxu0 0.0
    %2982 = vmatprep.subr.mxu0 0.0
    %2983 = vmatpush1.msra.mxu0 0.0
    %2984 = vmatprep.subr.mxu0 0.0
    %2985 = vmatpush1.msra.mxu0 0.0
    %2986 = vmatprep.subr.mxu0 0.0
    %2987 = vmatpush1.msra.mxu0 0.0
    %2988 = vmatprep.subr.mxu0 0.0
    %2989 = vmatpush1.msra.mxu0 0.0
    %2990 = vmatprep.subr.mxu0 0.0
    %2991 = vmatpush1.msra.mxu0 0.0
    %2992 = vmatprep.subr.mxu0 0.0
    %2993 = vmatpush1.msra.mxu0 0.0
    %2994 = vmatprep.subr.mxu0 0.0
    %2995 = vmatpush1.msra.mxu0 0.0
    %2996 = vmatprep.subr.mxu0 0.0
    %2997 = vmatpush1.msra.mxu0 0.0
    %2998 = vmatprep.subr.mxu0 0.0
    %2999 = vmatpush1.msra.mxu0 0.0
    %3000 = vmatprep.mubr.f32.mxu0 0.0
    %v3001 = vand.u32 %v2454, 4294901760
    %3002 = vmatmul.mubr.f32.gmra.mrb[0].mxu0 %v3001
    %v3003 = vpop.f32.mrb[0].mxu0
    %v3004 = vadd.f32 %v2921, %v3003
    %v3005 = vpop.f32.mrb[0].mxu0
    %3006 = vmatprep.mubr.f32.mxu0 0.0
    %v3007 = vand.u32 %v2457, 4294901760
    %3008 = vmatmul.mubr.f32.gmra.mrb[0].mxu0 %v3007
    %v3009 = vpop.f32.mrb[0].mxu0
    %v3010 = vadd.f32 %v2927, %v3009
    %v3011 = vpop.f32.mrb[0].mxu0
    %3012 = vdwg.mxu0
    %v3013 = vmul.f32 %v2449, %v3004
    %v3014 = vmul.f32 %v2450, %v3010
    %v3015 = vsel %vm61, %v3013, 0.0
    %3016 = vadd.xlane.f32.xlu0 %v3015
    %v3017 = vpop.xlane.xlu0 %3016
    %v3018 = vsel %vm61, %v3014, 0.0
    %3019 = vadd.xlane.f32.xlu0 %v3018
    %v3020 = vpop.xlane.xlu0 %3019
    %v3021 = vmul.f32 %v3017, %v2449
    %v3022 = vmul.f32 %v3020, %v2450
    %v3023 = vsub.f32 %v3004, %v3021
    %v3024 = vsub.f32 %v3010, %v3022
    %v3025 = vmul.f32 %v58, %v3023
    %v3026 = vmul.f32 %v58, %v3024
    %v3027 = vadd.f32 %v2449, %v3025
    %v3028 = vadd.f32 %v2450, %v3026
    %v3029 = vmul.f32 %v3027, %v3027
    %v3030 = vmul.f32 %v3028, %v3028
    %v3031 = vsel %vm61, %v3029, 0.0
    %3032 = vadd.xlane.f32.xlu0 %v3031
    %v3033 = vpop.xlane.xlu0 %3032
    %v3034 = vsel %vm61, %v3030, 0.0
    %3035 = vadd.xlane.f32.xlu0 %v3034
    %v3036 = vpop.xlane.xlu0 %3035
    %v3037 = vmax.f32 %v3033, 1e-24
    %v3038 = vmax.f32 %v3036, 1e-24
    %v3039 = vrsqrt.pop %v3037
    %v3040 = vrsqrt.pop %v3038
    %v3041 = vmul.f32 %v3027, %v3039
    %v3042 = vmul.f32 %v3028, %v3040
    %v3043 = vsel %vm61, %v3041, %v77
    %v3044 = vsel %vm61, %v3042, %v79
    %v3046 = vsel %vm84, %v3043, 0
    %v3049 = vsel %vm84, %v3044, 0
    %3051 = vmatprep.subr.mxu0 0.0
    %v3052 = vand.u32 %v43, 4294901760
    %3053 = vmatpush1.msra.mxu0 %v3052
    %3054 = vmatprep.subr.mxu0 0.0
    %v3055 = vand.u32 %v44, 4294901760
    %3056 = vmatpush1.msra.mxu0 %v3055
    %3057 = vmatprep.subr.mxu0 0.0
    %v3058 = vand.u32 %v45, 4294901760
    %3059 = vmatpush1.msra.mxu0 %v3058
    %3060 = vmatprep.subr.mxu0 0.0
    %v3061 = vand.u32 %v46, 4294901760
    %3062 = vmatpush1.msra.mxu0 %v3061
    %3063 = vmatprep.subr.mxu0 0.0
    %v3064 = vand.u32 %v3041, 4294901760
    %3065 = vmatpush1.msra.mxu0 %v3064
    %3066 = vmatprep.subr.mxu0 0.0
    %v3067 = vand.u32 %v3042, 4294901760
    %3068 = vmatpush1.msra.mxu0 %v3067
    %3069 = vmatprep.subr.mxu0 0.0
    %3070 = vmatpush1.msra.mxu0 0.0
    %3071 = vmatprep.subr.mxu0 0.0
    %3072 = vmatpush1.msra.mxu0 0.0
    %3073 = vmatprep.subr.mxu0 0.0
    %3074 = vmatpush1.msra.mxu0 0.0
    %3075 = vmatprep.subr.mxu0 0.0
    %3076 = vmatpush1.msra.mxu0 0.0
    %3077 = vmatprep.subr.mxu0 0.0
    %3078 = vmatpush1.msra.mxu0 0.0
    %3079 = vmatprep.subr.mxu0 0.0
    %3080 = vmatpush1.msra.mxu0 0.0
    %3081 = vmatprep.subr.mxu0 0.0
    %3082 = vmatpush1.msra.mxu0 0.0
    %3083 = vmatprep.subr.mxu0 0.0
    %3084 = vmatpush1.msra.mxu0 0.0
    %3085 = vmatprep.subr.mxu0 0.0
    %3086 = vmatpush1.msra.mxu0 0.0
    %3087 = vmatprep.subr.mxu0 0.0
    %3088 = vmatpush1.msra.mxu0 0.0
    %3089 = vmatprep.subr.mxu0 0.0
    %3090 = vmatpush1.msra.mxu0 0.0
    %3091 = vmatprep.subr.mxu0 0.0
    %3092 = vmatpush1.msra.mxu0 0.0
    %3093 = vmatprep.subr.mxu0 0.0
    %3094 = vmatpush1.msra.mxu0 0.0
    %3095 = vmatprep.subr.mxu0 0.0
    %3096 = vmatpush1.msra.mxu0 0.0
    %3097 = vmatprep.subr.mxu0 0.0
    %3098 = vmatpush1.msra.mxu0 0.0
    %3099 = vmatprep.subr.mxu0 0.0
    %3100 = vmatpush1.msra.mxu0 0.0
    %3101 = vmatprep.subr.mxu0 0.0
    %3102 = vmatpush1.msra.mxu0 0.0
    %3103 = vmatprep.subr.mxu0 0.0
    %3104 = vmatpush1.msra.mxu0 0.0
    %3105 = vmatprep.subr.mxu0 0.0
    %3106 = vmatpush1.msra.mxu0 0.0
    %3107 = vmatprep.subr.mxu0 0.0
    %3108 = vmatpush1.msra.mxu0 0.0
    %3109 = vmatprep.subr.mxu0 0.0
    %3110 = vmatpush1.msra.mxu0 0.0
    %3111 = vmatprep.subr.mxu0 0.0
    %3112 = vmatpush1.msra.mxu0 0.0
    %3113 = vmatprep.subr.mxu0 0.0
    %3114 = vmatpush1.msra.mxu0 0.0
    %3115 = vmatprep.subr.mxu0 0.0
    %3116 = vmatpush1.msra.mxu0 0.0
    %3117 = vmatprep.subr.mxu0 0.0
    %3118 = vmatpush1.msra.mxu0 0.0
    %3119 = vmatprep.subr.mxu0 0.0
    %3120 = vmatpush1.msra.mxu0 0.0
    %3121 = vmatprep.mubr.f32.mxu0 0.0
    %v3122 = vand.u32 %v3046, 4294901760
    %v3123 = vsub.f32 %v3046, %v3122
    %v3124 = vand.u32 %v3123, 4294901760
    %v3125 = vsub.f32 %v3123, %v3124
    %v3126 = vand.u32 %v3125, 4294901760
    %3127 = vmatmul.mubr.f32.gmra.mrb[0].mxu0 %v3126
    %v3128 = vpop.f32.mrb[0].mxu0
    %v3129 = vadd.f32 %v47, %v3128
    %v3130 = vpop.f32.mrb[0].mxu0
    %3131 = vmatprep.mubr.f32.mxu0 0.0
    %v3132 = vand.u32 %v3049, 4294901760
    %v3133 = vsub.f32 %v3049, %v3132
    %v3134 = vand.u32 %v3133, 4294901760
    %v3135 = vsub.f32 %v3133, %v3134
    %v3136 = vand.u32 %v3135, 4294901760
    %3137 = vmatmul.mubr.f32.gmra.mrb[0].mxu0 %v3136
    %v3138 = vpop.f32.mrb[0].mxu0
    %v3139 = vadd.f32 %v47, %v3138
    %v3140 = vpop.f32.mrb[0].mxu0
    %3141 = vdwg.mxu0
    %3142 = vmatprep.subr.mxu0 0.0
    %v3143 = vand.u32 %v43, 4294901760
    %v3144 = vsub.f32 %v43, %v3143
    %v3145 = vand.u32 %v3144, 4294901760
    %v3146 = vsub.f32 %v3144, %v3145
    %v3147 = vand.u32 %v3146, 4294901760
    %3148 = vmatpush1.msra.mxu0 %v3147
    %3149 = vmatprep.subr.mxu0 0.0
    %v3150 = vand.u32 %v44, 4294901760
    %v3151 = vsub.f32 %v44, %v3150
    %v3152 = vand.u32 %v3151, 4294901760
    %v3153 = vsub.f32 %v3151, %v3152
    %v3154 = vand.u32 %v3153, 4294901760
    %3155 = vmatpush1.msra.mxu0 %v3154
    %3156 = vmatprep.subr.mxu0 0.0
    %v3157 = vand.u32 %v45, 4294901760
    %v3158 = vsub.f32 %v45, %v3157
    %v3159 = vand.u32 %v3158, 4294901760
    %v3160 = vsub.f32 %v3158, %v3159
    %v3161 = vand.u32 %v3160, 4294901760
    %3162 = vmatpush1.msra.mxu0 %v3161
    %3163 = vmatprep.subr.mxu0 0.0
    %v3164 = vand.u32 %v46, 4294901760
    %v3165 = vsub.f32 %v46, %v3164
    %v3166 = vand.u32 %v3165, 4294901760
    %v3167 = vsub.f32 %v3165, %v3166
    %v3168 = vand.u32 %v3167, 4294901760
    %3169 = vmatpush1.msra.mxu0 %v3168
    %3170 = vmatprep.subr.mxu0 0.0
    %v3171 = vand.u32 %v3041, 4294901760
    %v3172 = vsub.f32 %v3041, %v3171
    %v3173 = vand.u32 %v3172, 4294901760
    %v3174 = vsub.f32 %v3172, %v3173
    %v3175 = vand.u32 %v3174, 4294901760
    %3176 = vmatpush1.msra.mxu0 %v3175
    %3177 = vmatprep.subr.mxu0 0.0
    %v3178 = vand.u32 %v3042, 4294901760
    %v3179 = vsub.f32 %v3042, %v3178
    %v3180 = vand.u32 %v3179, 4294901760
    %v3181 = vsub.f32 %v3179, %v3180
    %v3182 = vand.u32 %v3181, 4294901760
    %3183 = vmatpush1.msra.mxu0 %v3182
    %3184 = vmatprep.subr.mxu0 0.0
    %3185 = vmatpush1.msra.mxu0 0.0
    %3186 = vmatprep.subr.mxu0 0.0
    %3187 = vmatpush1.msra.mxu0 0.0
    %3188 = vmatprep.subr.mxu0 0.0
    %3189 = vmatpush1.msra.mxu0 0.0
    %3190 = vmatprep.subr.mxu0 0.0
    %3191 = vmatpush1.msra.mxu0 0.0
    %3192 = vmatprep.subr.mxu0 0.0
    %3193 = vmatpush1.msra.mxu0 0.0
    %3194 = vmatprep.subr.mxu0 0.0
    %3195 = vmatpush1.msra.mxu0 0.0
    %3196 = vmatprep.subr.mxu0 0.0
    %3197 = vmatpush1.msra.mxu0 0.0
    %3198 = vmatprep.subr.mxu0 0.0
    %3199 = vmatpush1.msra.mxu0 0.0
    %3200 = vmatprep.subr.mxu0 0.0
    %3201 = vmatpush1.msra.mxu0 0.0
    %3202 = vmatprep.subr.mxu0 0.0
    %3203 = vmatpush1.msra.mxu0 0.0
    %3204 = vmatprep.subr.mxu0 0.0
    %3205 = vmatpush1.msra.mxu0 0.0
    %3206 = vmatprep.subr.mxu0 0.0
    %3207 = vmatpush1.msra.mxu0 0.0
    %3208 = vmatprep.subr.mxu0 0.0
    %3209 = vmatpush1.msra.mxu0 0.0
    %3210 = vmatprep.subr.mxu0 0.0
    %3211 = vmatpush1.msra.mxu0 0.0
    %3212 = vmatprep.subr.mxu0 0.0
    %3213 = vmatpush1.msra.mxu0 0.0
    %3214 = vmatprep.subr.mxu0 0.0
    %3215 = vmatpush1.msra.mxu0 0.0
    %3216 = vmatprep.subr.mxu0 0.0
    %3217 = vmatpush1.msra.mxu0 0.0
    %3218 = vmatprep.subr.mxu0 0.0
    %3219 = vmatpush1.msra.mxu0 0.0
    %3220 = vmatprep.subr.mxu0 0.0
    %3221 = vmatpush1.msra.mxu0 0.0
    %3222 = vmatprep.subr.mxu0 0.0
    %3223 = vmatpush1.msra.mxu0 0.0
    %3224 = vmatprep.subr.mxu0 0.0
    %3225 = vmatpush1.msra.mxu0 0.0
    %3226 = vmatprep.subr.mxu0 0.0
    %3227 = vmatpush1.msra.mxu0 0.0
    %3228 = vmatprep.subr.mxu0 0.0
    %3229 = vmatpush1.msra.mxu0 0.0
    %3230 = vmatprep.subr.mxu0 0.0
    %3231 = vmatpush1.msra.mxu0 0.0
    %3232 = vmatprep.subr.mxu0 0.0
    %3233 = vmatpush1.msra.mxu0 0.0
    %3234 = vmatprep.subr.mxu0 0.0
    %3235 = vmatpush1.msra.mxu0 0.0
    %3236 = vmatprep.mubr.f32.mxu0 0.0
    %v3237 = vand.u32 %v3046, 4294901760
    %3238 = vmatmul.mubr.f32.gmra.mrb[0].mxu0 %v3237
    %v3239 = vpop.f32.mrb[0].mxu0
    %v3240 = vadd.f32 %v3129, %v3239
    %v3241 = vpop.f32.mrb[0].mxu0
    %3242 = vmatprep.mubr.f32.mxu0 0.0
    %v3243 = vand.u32 %v3049, 4294901760
    %3244 = vmatmul.mubr.f32.gmra.mrb[0].mxu0 %v3243
    %v3245 = vpop.f32.mrb[0].mxu0
    %v3246 = vadd.f32 %v3139, %v3245
    %v3247 = vpop.f32.mrb[0].mxu0
    %3248 = vdwg.mxu0
    %3249 = vmatprep.subr.mxu0 0.0
    %v3250 = vand.u32 %v43, 4294901760
    %v3251 = vsub.f32 %v43, %v3250
    %3252 = vmatpush1.msra.mxu0 %v3251
    %3253 = vmatprep.subr.mxu0 0.0
    %v3254 = vand.u32 %v44, 4294901760
    %v3255 = vsub.f32 %v44, %v3254
    %3256 = vmatpush1.msra.mxu0 %v3255
    %3257 = vmatprep.subr.mxu0 0.0
    %v3258 = vand.u32 %v45, 4294901760
    %v3259 = vsub.f32 %v45, %v3258
    %3260 = vmatpush1.msra.mxu0 %v3259
    %3261 = vmatprep.subr.mxu0 0.0
    %v3262 = vand.u32 %v46, 4294901760
    %v3263 = vsub.f32 %v46, %v3262
    %3264 = vmatpush1.msra.mxu0 %v3263
    %3265 = vmatprep.subr.mxu0 0.0
    %v3266 = vand.u32 %v3041, 4294901760
    %v3267 = vsub.f32 %v3041, %v3266
    %3268 = vmatpush1.msra.mxu0 %v3267
    %3269 = vmatprep.subr.mxu0 0.0
    %v3270 = vand.u32 %v3042, 4294901760
    %v3271 = vsub.f32 %v3042, %v3270
    %3272 = vmatpush1.msra.mxu0 %v3271
    %3273 = vmatprep.subr.mxu0 0.0
    %3274 = vmatpush1.msra.mxu0 0.0
    %3275 = vmatprep.subr.mxu0 0.0
    %3276 = vmatpush1.msra.mxu0 0.0
    %3277 = vmatprep.subr.mxu0 0.0
    %3278 = vmatpush1.msra.mxu0 0.0
    %3279 = vmatprep.subr.mxu0 0.0
    %3280 = vmatpush1.msra.mxu0 0.0
    %3281 = vmatprep.subr.mxu0 0.0
    %3282 = vmatpush1.msra.mxu0 0.0
    %3283 = vmatprep.subr.mxu0 0.0
    %3284 = vmatpush1.msra.mxu0 0.0
    %3285 = vmatprep.subr.mxu0 0.0
    %3286 = vmatpush1.msra.mxu0 0.0
    %3287 = vmatprep.subr.mxu0 0.0
    %3288 = vmatpush1.msra.mxu0 0.0
    %3289 = vmatprep.subr.mxu0 0.0
    %3290 = vmatpush1.msra.mxu0 0.0
    %3291 = vmatprep.subr.mxu0 0.0
    %3292 = vmatpush1.msra.mxu0 0.0
    %3293 = vmatprep.subr.mxu0 0.0
    %3294 = vmatpush1.msra.mxu0 0.0
    %3295 = vmatprep.subr.mxu0 0.0
    %3296 = vmatpush1.msra.mxu0 0.0
    %3297 = vmatprep.subr.mxu0 0.0
    %3298 = vmatpush1.msra.mxu0 0.0
    %3299 = vmatprep.subr.mxu0 0.0
    %3300 = vmatpush1.msra.mxu0 0.0
    %3301 = vmatprep.subr.mxu0 0.0
    %3302 = vmatpush1.msra.mxu0 0.0
    %3303 = vmatprep.subr.mxu0 0.0
    %3304 = vmatpush1.msra.mxu0 0.0
    %3305 = vmatprep.subr.mxu0 0.0
    %3306 = vmatpush1.msra.mxu0 0.0
    %3307 = vmatprep.subr.mxu0 0.0
    %3308 = vmatpush1.msra.mxu0 0.0
    %3309 = vmatprep.subr.mxu0 0.0
    %3310 = vmatpush1.msra.mxu0 0.0
    %3311 = vmatprep.subr.mxu0 0.0
    %3312 = vmatpush1.msra.mxu0 0.0
    %3313 = vmatprep.subr.mxu0 0.0
    %3314 = vmatpush1.msra.mxu0 0.0
    %3315 = vmatprep.subr.mxu0 0.0
    %3316 = vmatpush1.msra.mxu0 0.0
    %3317 = vmatprep.subr.mxu0 0.0
    %3318 = vmatpush1.msra.mxu0 0.0
    %3319 = vmatprep.subr.mxu0 0.0
    %3320 = vmatpush1.msra.mxu0 0.0
    %3321 = vmatprep.subr.mxu0 0.0
    %3322 = vmatpush1.msra.mxu0 0.0
    %3323 = vmatprep.subr.mxu0 0.0
    %3324 = vmatpush1.msra.mxu0 0.0
    %3325 = vmatprep.mubr.f32.mxu0 0.0
    %v3326 = vand.u32 %v3046, 4294901760
    %v3327 = vsub.f32 %v3046, %v3326
    %3328 = vmatmul.mubr.f32.gmra.mrb[0].mxu0 %v3327
    %v3329 = vpop.f32.mrb[0].mxu0
    %v3330 = vadd.f32 %v3240, %v3329
    %v3331 = vpop.f32.mrb[0].mxu0
    %3332 = vmatprep.mubr.f32.mxu0 0.0
    %v3333 = vand.u32 %v3049, 4294901760
    %v3334 = vsub.f32 %v3049, %v3333
    %3335 = vmatmul.mubr.f32.gmra.mrb[0].mxu0 %v3334
    %v3336 = vpop.f32.mrb[0].mxu0
    %v3337 = vadd.f32 %v3246, %v3336
    %v3338 = vpop.f32.mrb[0].mxu0
    %3339 = vdwg.mxu0
    %3340 = vmatprep.subr.mxu0 0.0
    %v3341 = vand.u32 %v43, 4294901760
    %3342 = vmatpush1.msra.mxu0 %v3341
    %3343 = vmatprep.subr.mxu0 0.0
    %v3344 = vand.u32 %v44, 4294901760
    %3345 = vmatpush1.msra.mxu0 %v3344
    %3346 = vmatprep.subr.mxu0 0.0
    %v3347 = vand.u32 %v45, 4294901760
    %3348 = vmatpush1.msra.mxu0 %v3347
    %3349 = vmatprep.subr.mxu0 0.0
    %v3350 = vand.u32 %v46, 4294901760
    %3351 = vmatpush1.msra.mxu0 %v3350
    %3352 = vmatprep.subr.mxu0 0.0
    %v3353 = vand.u32 %v3041, 4294901760
    %3354 = vmatpush1.msra.mxu0 %v3353
    %3355 = vmatprep.subr.mxu0 0.0
    %v3356 = vand.u32 %v3042, 4294901760
    %3357 = vmatpush1.msra.mxu0 %v3356
    %3358 = vmatprep.subr.mxu0 0.0
    %3359 = vmatpush1.msra.mxu0 0.0
    %3360 = vmatprep.subr.mxu0 0.0
    %3361 = vmatpush1.msra.mxu0 0.0
    %3362 = vmatprep.subr.mxu0 0.0
    %3363 = vmatpush1.msra.mxu0 0.0
    %3364 = vmatprep.subr.mxu0 0.0
    %3365 = vmatpush1.msra.mxu0 0.0
    %3366 = vmatprep.subr.mxu0 0.0
    %3367 = vmatpush1.msra.mxu0 0.0
    %3368 = vmatprep.subr.mxu0 0.0
    %3369 = vmatpush1.msra.mxu0 0.0
    %3370 = vmatprep.subr.mxu0 0.0
    %3371 = vmatpush1.msra.mxu0 0.0
    %3372 = vmatprep.subr.mxu0 0.0
    %3373 = vmatpush1.msra.mxu0 0.0
    %3374 = vmatprep.subr.mxu0 0.0
    %3375 = vmatpush1.msra.mxu0 0.0
    %3376 = vmatprep.subr.mxu0 0.0
    %3377 = vmatpush1.msra.mxu0 0.0
    %3378 = vmatprep.subr.mxu0 0.0
    %3379 = vmatpush1.msra.mxu0 0.0
    %3380 = vmatprep.subr.mxu0 0.0
    %3381 = vmatpush1.msra.mxu0 0.0
    %3382 = vmatprep.subr.mxu0 0.0
    %3383 = vmatpush1.msra.mxu0 0.0
    %3384 = vmatprep.subr.mxu0 0.0
    %3385 = vmatpush1.msra.mxu0 0.0
    %3386 = vmatprep.subr.mxu0 0.0
    %3387 = vmatpush1.msra.mxu0 0.0
    %3388 = vmatprep.subr.mxu0 0.0
    %3389 = vmatpush1.msra.mxu0 0.0
    %3390 = vmatprep.subr.mxu0 0.0
    %3391 = vmatpush1.msra.mxu0 0.0
    %3392 = vmatprep.subr.mxu0 0.0
    %3393 = vmatpush1.msra.mxu0 0.0
    %3394 = vmatprep.subr.mxu0 0.0
    %3395 = vmatpush1.msra.mxu0 0.0
    %3396 = vmatprep.subr.mxu0 0.0
    %3397 = vmatpush1.msra.mxu0 0.0
    %3398 = vmatprep.subr.mxu0 0.0
    %3399 = vmatpush1.msra.mxu0 0.0
    %3400 = vmatprep.subr.mxu0 0.0
    %3401 = vmatpush1.msra.mxu0 0.0
    %3402 = vmatprep.subr.mxu0 0.0
    %3403 = vmatpush1.msra.mxu0 0.0
    %3404 = vmatprep.subr.mxu0 0.0
    %3405 = vmatpush1.msra.mxu0 0.0
    %3406 = vmatprep.subr.mxu0 0.0
    %3407 = vmatpush1.msra.mxu0 0.0
    %3408 = vmatprep.subr.mxu0 0.0
    %3409 = vmatpush1.msra.mxu0 0.0
    %3410 = vmatprep.mubr.f32.mxu0 0.0
    %v3411 = vand.u32 %v3046, 4294901760
    %v3412 = vsub.f32 %v3046, %v3411
    %v3413 = vand.u32 %v3412, 4294901760
    %3414 = vmatmul.mubr.f32.gmra.mrb[0].mxu0 %v3413
    %v3415 = vpop.f32.mrb[0].mxu0
    %v3416 = vadd.f32 %v3330, %v3415
    %v3417 = vpop.f32.mrb[0].mxu0
    %3418 = vmatprep.mubr.f32.mxu0 0.0
    %v3419 = vand.u32 %v3049, 4294901760
    %v3420 = vsub.f32 %v3049, %v3419
    %v3421 = vand.u32 %v3420, 4294901760
    %3422 = vmatmul.mubr.f32.gmra.mrb[0].mxu0 %v3421
    %v3423 = vpop.f32.mrb[0].mxu0
    %v3424 = vadd.f32 %v3337, %v3423
    %v3425 = vpop.f32.mrb[0].mxu0
    %3426 = vdwg.mxu0
    %3427 = vmatprep.subr.mxu0 0.0
    %v3428 = vand.u32 %v43, 4294901760
    %v3429 = vsub.f32 %v43, %v3428
    %v3430 = vand.u32 %v3429, 4294901760
    %3431 = vmatpush1.msra.mxu0 %v3430
    %3432 = vmatprep.subr.mxu0 0.0
    %v3433 = vand.u32 %v44, 4294901760
    %v3434 = vsub.f32 %v44, %v3433
    %v3435 = vand.u32 %v3434, 4294901760
    %3436 = vmatpush1.msra.mxu0 %v3435
    %3437 = vmatprep.subr.mxu0 0.0
    %v3438 = vand.u32 %v45, 4294901760
    %v3439 = vsub.f32 %v45, %v3438
    %v3440 = vand.u32 %v3439, 4294901760
    %3441 = vmatpush1.msra.mxu0 %v3440
    %3442 = vmatprep.subr.mxu0 0.0
    %v3443 = vand.u32 %v46, 4294901760
    %v3444 = vsub.f32 %v46, %v3443
    %v3445 = vand.u32 %v3444, 4294901760
    %3446 = vmatpush1.msra.mxu0 %v3445
    %3447 = vmatprep.subr.mxu0 0.0
    %v3448 = vand.u32 %v3041, 4294901760
    %v3449 = vsub.f32 %v3041, %v3448
    %v3450 = vand.u32 %v3449, 4294901760
    %3451 = vmatpush1.msra.mxu0 %v3450
    %3452 = vmatprep.subr.mxu0 0.0
    %v3453 = vand.u32 %v3042, 4294901760
    %v3454 = vsub.f32 %v3042, %v3453
    %v3455 = vand.u32 %v3454, 4294901760
    %3456 = vmatpush1.msra.mxu0 %v3455
    %3457 = vmatprep.subr.mxu0 0.0
    %3458 = vmatpush1.msra.mxu0 0.0
    %3459 = vmatprep.subr.mxu0 0.0
    %3460 = vmatpush1.msra.mxu0 0.0
    %3461 = vmatprep.subr.mxu0 0.0
    %3462 = vmatpush1.msra.mxu0 0.0
    %3463 = vmatprep.subr.mxu0 0.0
    %3464 = vmatpush1.msra.mxu0 0.0
    %3465 = vmatprep.subr.mxu0 0.0
    %3466 = vmatpush1.msra.mxu0 0.0
    %3467 = vmatprep.subr.mxu0 0.0
    %3468 = vmatpush1.msra.mxu0 0.0
    %3469 = vmatprep.subr.mxu0 0.0
    %3470 = vmatpush1.msra.mxu0 0.0
    %3471 = vmatprep.subr.mxu0 0.0
    %3472 = vmatpush1.msra.mxu0 0.0
    %3473 = vmatprep.subr.mxu0 0.0
    %3474 = vmatpush1.msra.mxu0 0.0
    %3475 = vmatprep.subr.mxu0 0.0
    %3476 = vmatpush1.msra.mxu0 0.0
    %3477 = vmatprep.subr.mxu0 0.0
    %3478 = vmatpush1.msra.mxu0 0.0
    %3479 = vmatprep.subr.mxu0 0.0
    %3480 = vmatpush1.msra.mxu0 0.0
    %3481 = vmatprep.subr.mxu0 0.0
    %3482 = vmatpush1.msra.mxu0 0.0
    %3483 = vmatprep.subr.mxu0 0.0
    %3484 = vmatpush1.msra.mxu0 0.0
    %3485 = vmatprep.subr.mxu0 0.0
    %3486 = vmatpush1.msra.mxu0 0.0
    %3487 = vmatprep.subr.mxu0 0.0
    %3488 = vmatpush1.msra.mxu0 0.0
    %3489 = vmatprep.subr.mxu0 0.0
    %3490 = vmatpush1.msra.mxu0 0.0
    %3491 = vmatprep.subr.mxu0 0.0
    %3492 = vmatpush1.msra.mxu0 0.0
    %3493 = vmatprep.subr.mxu0 0.0
    %3494 = vmatpush1.msra.mxu0 0.0
    %3495 = vmatprep.subr.mxu0 0.0
    %3496 = vmatpush1.msra.mxu0 0.0
    %3497 = vmatprep.subr.mxu0 0.0
    %3498 = vmatpush1.msra.mxu0 0.0
    %3499 = vmatprep.subr.mxu0 0.0
    %3500 = vmatpush1.msra.mxu0 0.0
    %3501 = vmatprep.subr.mxu0 0.0
    %3502 = vmatpush1.msra.mxu0 0.0
    %3503 = vmatprep.subr.mxu0 0.0
    %3504 = vmatpush1.msra.mxu0 0.0
    %3505 = vmatprep.subr.mxu0 0.0
    %3506 = vmatpush1.msra.mxu0 0.0
    %3507 = vmatprep.subr.mxu0 0.0
    %3508 = vmatpush1.msra.mxu0 0.0
    %3509 = vmatprep.mubr.f32.mxu0 0.0
    %v3510 = vand.u32 %v3046, 4294901760
    %3511 = vmatmul.mubr.f32.gmra.mrb[0].mxu0 %v3510
    %v3512 = vpop.f32.mrb[0].mxu0
    %v3513 = vadd.f32 %v3416, %v3512
    %v3514 = vpop.f32.mrb[0].mxu0
    %3515 = vmatprep.mubr.f32.mxu0 0.0
    %v3516 = vand.u32 %v3049, 4294901760
    %3517 = vmatmul.mubr.f32.gmra.mrb[0].mxu0 %v3516
    %v3518 = vpop.f32.mrb[0].mxu0
    %v3519 = vadd.f32 %v3424, %v3518
    %v3520 = vpop.f32.mrb[0].mxu0
    %3521 = vdwg.mxu0
    %3522 = vmatprep.subr.mxu0 0.0
    %v3523 = vand.u32 %v43, 4294901760
    %3524 = vmatpush1.msra.mxu0 %v3523
    %3525 = vmatprep.subr.mxu0 0.0
    %v3526 = vand.u32 %v44, 4294901760
    %3527 = vmatpush1.msra.mxu0 %v3526
    %3528 = vmatprep.subr.mxu0 0.0
    %v3529 = vand.u32 %v45, 4294901760
    %3530 = vmatpush1.msra.mxu0 %v3529
    %3531 = vmatprep.subr.mxu0 0.0
    %v3532 = vand.u32 %v46, 4294901760
    %3533 = vmatpush1.msra.mxu0 %v3532
    %3534 = vmatprep.subr.mxu0 0.0
    %v3535 = vand.u32 %v3041, 4294901760
    %3536 = vmatpush1.msra.mxu0 %v3535
    %3537 = vmatprep.subr.mxu0 0.0
    %v3538 = vand.u32 %v3042, 4294901760
    %3539 = vmatpush1.msra.mxu0 %v3538
    %3540 = vmatprep.subr.mxu0 0.0
    %3541 = vmatpush1.msra.mxu0 0.0
    %3542 = vmatprep.subr.mxu0 0.0
    %3543 = vmatpush1.msra.mxu0 0.0
    %3544 = vmatprep.subr.mxu0 0.0
    %3545 = vmatpush1.msra.mxu0 0.0
    %3546 = vmatprep.subr.mxu0 0.0
    %3547 = vmatpush1.msra.mxu0 0.0
    %3548 = vmatprep.subr.mxu0 0.0
    %3549 = vmatpush1.msra.mxu0 0.0
    %3550 = vmatprep.subr.mxu0 0.0
    %3551 = vmatpush1.msra.mxu0 0.0
    %3552 = vmatprep.subr.mxu0 0.0
    %3553 = vmatpush1.msra.mxu0 0.0
    %3554 = vmatprep.subr.mxu0 0.0
    %3555 = vmatpush1.msra.mxu0 0.0
    %3556 = vmatprep.subr.mxu0 0.0
    %3557 = vmatpush1.msra.mxu0 0.0
    %3558 = vmatprep.subr.mxu0 0.0
    %3559 = vmatpush1.msra.mxu0 0.0
    %3560 = vmatprep.subr.mxu0 0.0
    %3561 = vmatpush1.msra.mxu0 0.0
    %3562 = vmatprep.subr.mxu0 0.0
    %3563 = vmatpush1.msra.mxu0 0.0
    %3564 = vmatprep.subr.mxu0 0.0
    %3565 = vmatpush1.msra.mxu0 0.0
    %3566 = vmatprep.subr.mxu0 0.0
    %3567 = vmatpush1.msra.mxu0 0.0
    %3568 = vmatprep.subr.mxu0 0.0
    %3569 = vmatpush1.msra.mxu0 0.0
    %3570 = vmatprep.subr.mxu0 0.0
    %3571 = vmatpush1.msra.mxu0 0.0
    %3572 = vmatprep.subr.mxu0 0.0
    %3573 = vmatpush1.msra.mxu0 0.0
    %3574 = vmatprep.subr.mxu0 0.0
    %3575 = vmatpush1.msra.mxu0 0.0
    %3576 = vmatprep.subr.mxu0 0.0
    %3577 = vmatpush1.msra.mxu0 0.0
    %3578 = vmatprep.subr.mxu0 0.0
    %3579 = vmatpush1.msra.mxu0 0.0
    %3580 = vmatprep.subr.mxu0 0.0
    %3581 = vmatpush1.msra.mxu0 0.0
    %3582 = vmatprep.subr.mxu0 0.0
    %3583 = vmatpush1.msra.mxu0 0.0
    %3584 = vmatprep.subr.mxu0 0.0
    %3585 = vmatpush1.msra.mxu0 0.0
    %3586 = vmatprep.subr.mxu0 0.0
    %3587 = vmatpush1.msra.mxu0 0.0
    %3588 = vmatprep.subr.mxu0 0.0
    %3589 = vmatpush1.msra.mxu0 0.0
    %3590 = vmatprep.subr.mxu0 0.0
    %3591 = vmatpush1.msra.mxu0 0.0
    %3592 = vmatprep.mubr.f32.mxu0 0.0
    %v3593 = vand.u32 %v3046, 4294901760
    %3594 = vmatmul.mubr.f32.gmra.mrb[0].mxu0 %v3593
    %v3595 = vpop.f32.mrb[0].mxu0
    %v3596 = vadd.f32 %v3513, %v3595
    %v3597 = vpop.f32.mrb[0].mxu0
    %3598 = vmatprep.mubr.f32.mxu0 0.0
    %v3599 = vand.u32 %v3049, 4294901760
    %3600 = vmatmul.mubr.f32.gmra.mrb[0].mxu0 %v3599
    %v3601 = vpop.f32.mrb[0].mxu0
    %v3602 = vadd.f32 %v3519, %v3601
    %v3603 = vpop.f32.mrb[0].mxu0
    %3604 = vdwg.mxu0
    %v3605 = vmul.f32 %v3041, %v3596
    %v3606 = vmul.f32 %v3042, %v3602
    %v3607 = vsel %vm61, %v3605, 0.0
    %3608 = vadd.xlane.f32.xlu0 %v3607
    %v3609 = vpop.xlane.xlu0 %3608
    %v3610 = vsel %vm61, %v3606, 0.0
    %3611 = vadd.xlane.f32.xlu0 %v3610
    %v3612 = vpop.xlane.xlu0 %3611
    %v3613 = vmul.f32 %v3609, %v3041
    %v3614 = vmul.f32 %v3612, %v3042
    %v3615 = vsub.f32 %v3596, %v3613
    %v3616 = vsub.f32 %v3602, %v3614
    %v3617 = vmul.f32 %v58, %v3615
    %v3618 = vmul.f32 %v58, %v3616
    %v3619 = vadd.f32 %v3041, %v3617
    %v3620 = vadd.f32 %v3042, %v3618
    %v3621 = vmul.f32 %v3619, %v3619
    %v3622 = vmul.f32 %v3620, %v3620
    %v3623 = vsel %vm61, %v3621, 0.0
    %3624 = vadd.xlane.f32.xlu0 %v3623
    %v3625 = vpop.xlane.xlu0 %3624
    %v3626 = vsel %vm61, %v3622, 0.0
    %3627 = vadd.xlane.f32.xlu0 %v3626
    %v3628 = vpop.xlane.xlu0 %3627
    %v3629 = vmax.f32 %v3625, 1e-24
    %v3630 = vmax.f32 %v3628, 1e-24
    %v3631 = vrsqrt.pop %v3629
    %v3632 = vrsqrt.pop %v3630
    %v3633 = vmul.f32 %v3619, %v3631
    %v3634 = vmul.f32 %v3620, %v3632
    %v3635 = vsel %vm61, %v3633, %v77
    %v3636 = vsel %vm61, %v3634, %v79
    %v3638 = vsel %vm84, %v3635, 0
    %v3641 = vsel %vm84, %v3636, 0
    %3643 = vmatprep.subr.mxu0 0.0
    %v3644 = vand.u32 %v43, 4294901760
    %3645 = vmatpush1.msra.mxu0 %v3644
    %3646 = vmatprep.subr.mxu0 0.0
    %v3647 = vand.u32 %v44, 4294901760
    %3648 = vmatpush1.msra.mxu0 %v3647
    %3649 = vmatprep.subr.mxu0 0.0
    %v3650 = vand.u32 %v45, 4294901760
    %3651 = vmatpush1.msra.mxu0 %v3650
    %3652 = vmatprep.subr.mxu0 0.0
    %v3653 = vand.u32 %v46, 4294901760
    %3654 = vmatpush1.msra.mxu0 %v3653
    %3655 = vmatprep.subr.mxu0 0.0
    %v3656 = vand.u32 %v3633, 4294901760
    %3657 = vmatpush1.msra.mxu0 %v3656
    %3658 = vmatprep.subr.mxu0 0.0
    %v3659 = vand.u32 %v3634, 4294901760
    %3660 = vmatpush1.msra.mxu0 %v3659
    %3661 = vmatprep.subr.mxu0 0.0
    %3662 = vmatpush1.msra.mxu0 0.0
    %3663 = vmatprep.subr.mxu0 0.0
    %3664 = vmatpush1.msra.mxu0 0.0
    %3665 = vmatprep.subr.mxu0 0.0
    %3666 = vmatpush1.msra.mxu0 0.0
    %3667 = vmatprep.subr.mxu0 0.0
    %3668 = vmatpush1.msra.mxu0 0.0
    %3669 = vmatprep.subr.mxu0 0.0
    %3670 = vmatpush1.msra.mxu0 0.0
    %3671 = vmatprep.subr.mxu0 0.0
    %3672 = vmatpush1.msra.mxu0 0.0
    %3673 = vmatprep.subr.mxu0 0.0
    %3674 = vmatpush1.msra.mxu0 0.0
    %3675 = vmatprep.subr.mxu0 0.0
    %3676 = vmatpush1.msra.mxu0 0.0
    %3677 = vmatprep.subr.mxu0 0.0
    %3678 = vmatpush1.msra.mxu0 0.0
    %3679 = vmatprep.subr.mxu0 0.0
    %3680 = vmatpush1.msra.mxu0 0.0
    %3681 = vmatprep.subr.mxu0 0.0
    %3682 = vmatpush1.msra.mxu0 0.0
    %3683 = vmatprep.subr.mxu0 0.0
    %3684 = vmatpush1.msra.mxu0 0.0
    %3685 = vmatprep.subr.mxu0 0.0
    %3686 = vmatpush1.msra.mxu0 0.0
    %3687 = vmatprep.subr.mxu0 0.0
    %3688 = vmatpush1.msra.mxu0 0.0
    %3689 = vmatprep.subr.mxu0 0.0
    %3690 = vmatpush1.msra.mxu0 0.0
    %3691 = vmatprep.subr.mxu0 0.0
    %3692 = vmatpush1.msra.mxu0 0.0
    %3693 = vmatprep.subr.mxu0 0.0
    %3694 = vmatpush1.msra.mxu0 0.0
    %3695 = vmatprep.subr.mxu0 0.0
    %3696 = vmatpush1.msra.mxu0 0.0
    %3697 = vmatprep.subr.mxu0 0.0
    %3698 = vmatpush1.msra.mxu0 0.0
    %3699 = vmatprep.subr.mxu0 0.0
    %3700 = vmatpush1.msra.mxu0 0.0
    %3701 = vmatprep.subr.mxu0 0.0
    %3702 = vmatpush1.msra.mxu0 0.0
    %3703 = vmatprep.subr.mxu0 0.0
    %3704 = vmatpush1.msra.mxu0 0.0
    %3705 = vmatprep.subr.mxu0 0.0
    %3706 = vmatpush1.msra.mxu0 0.0
    %3707 = vmatprep.subr.mxu0 0.0
    %3708 = vmatpush1.msra.mxu0 0.0
    %3709 = vmatprep.subr.mxu0 0.0
    %3710 = vmatpush1.msra.mxu0 0.0
    %3711 = vmatprep.subr.mxu0 0.0
    %3712 = vmatpush1.msra.mxu0 0.0
    %3713 = vmatprep.mubr.f32.mxu0 0.0
    %v3714 = vand.u32 %v3638, 4294901760
    %v3715 = vsub.f32 %v3638, %v3714
    %v3716 = vand.u32 %v3715, 4294901760
    %v3717 = vsub.f32 %v3715, %v3716
    %v3718 = vand.u32 %v3717, 4294901760
    %3719 = vmatmul.mubr.f32.gmra.mrb[0].mxu0 %v3718
    %v3720 = vpop.f32.mrb[0].mxu0
    %v3721 = vadd.f32 %v47, %v3720
    %v3722 = vpop.f32.mrb[0].mxu0
    %3723 = vmatprep.mubr.f32.mxu0 0.0
    %v3724 = vand.u32 %v3641, 4294901760
    %v3725 = vsub.f32 %v3641, %v3724
    %v3726 = vand.u32 %v3725, 4294901760
    %v3727 = vsub.f32 %v3725, %v3726
    %v3728 = vand.u32 %v3727, 4294901760
    %3729 = vmatmul.mubr.f32.gmra.mrb[0].mxu0 %v3728
    %v3730 = vpop.f32.mrb[0].mxu0
    %v3731 = vadd.f32 %v47, %v3730
    %v3732 = vpop.f32.mrb[0].mxu0
    %3733 = vdwg.mxu0
    %3734 = vmatprep.subr.mxu0 0.0
    %v3735 = vand.u32 %v43, 4294901760
    %v3736 = vsub.f32 %v43, %v3735
    %v3737 = vand.u32 %v3736, 4294901760
    %v3738 = vsub.f32 %v3736, %v3737
    %v3739 = vand.u32 %v3738, 4294901760
    %3740 = vmatpush1.msra.mxu0 %v3739
    %3741 = vmatprep.subr.mxu0 0.0
    %v3742 = vand.u32 %v44, 4294901760
    %v3743 = vsub.f32 %v44, %v3742
    %v3744 = vand.u32 %v3743, 4294901760
    %v3745 = vsub.f32 %v3743, %v3744
    %v3746 = vand.u32 %v3745, 4294901760
    %3747 = vmatpush1.msra.mxu0 %v3746
    %3748 = vmatprep.subr.mxu0 0.0
    %v3749 = vand.u32 %v45, 4294901760
    %v3750 = vsub.f32 %v45, %v3749
    %v3751 = vand.u32 %v3750, 4294901760
    %v3752 = vsub.f32 %v3750, %v3751
    %v3753 = vand.u32 %v3752, 4294901760
    %3754 = vmatpush1.msra.mxu0 %v3753
    %3755 = vmatprep.subr.mxu0 0.0
    %v3756 = vand.u32 %v46, 4294901760
    %v3757 = vsub.f32 %v46, %v3756
    %v3758 = vand.u32 %v3757, 4294901760
    %v3759 = vsub.f32 %v3757, %v3758
    %v3760 = vand.u32 %v3759, 4294901760
    %3761 = vmatpush1.msra.mxu0 %v3760
    %3762 = vmatprep.subr.mxu0 0.0
    %v3763 = vand.u32 %v3633, 4294901760
    %v3764 = vsub.f32 %v3633, %v3763
    %v3765 = vand.u32 %v3764, 4294901760
    %v3766 = vsub.f32 %v3764, %v3765
    %v3767 = vand.u32 %v3766, 4294901760
    %3768 = vmatpush1.msra.mxu0 %v3767
    %3769 = vmatprep.subr.mxu0 0.0
    %v3770 = vand.u32 %v3634, 4294901760
    %v3771 = vsub.f32 %v3634, %v3770
    %v3772 = vand.u32 %v3771, 4294901760
    %v3773 = vsub.f32 %v3771, %v3772
    %v3774 = vand.u32 %v3773, 4294901760
    %3775 = vmatpush1.msra.mxu0 %v3774
    %3776 = vmatprep.subr.mxu0 0.0
    %3777 = vmatpush1.msra.mxu0 0.0
    %3778 = vmatprep.subr.mxu0 0.0
    %3779 = vmatpush1.msra.mxu0 0.0
    %3780 = vmatprep.subr.mxu0 0.0
    %3781 = vmatpush1.msra.mxu0 0.0
    %3782 = vmatprep.subr.mxu0 0.0
    %3783 = vmatpush1.msra.mxu0 0.0
    %3784 = vmatprep.subr.mxu0 0.0
    %3785 = vmatpush1.msra.mxu0 0.0
    %3786 = vmatprep.subr.mxu0 0.0
    %3787 = vmatpush1.msra.mxu0 0.0
    %3788 = vmatprep.subr.mxu0 0.0
    %3789 = vmatpush1.msra.mxu0 0.0
    %3790 = vmatprep.subr.mxu0 0.0
    %3791 = vmatpush1.msra.mxu0 0.0
    %3792 = vmatprep.subr.mxu0 0.0
    %3793 = vmatpush1.msra.mxu0 0.0
    %3794 = vmatprep.subr.mxu0 0.0
    %3795 = vmatpush1.msra.mxu0 0.0
    %3796 = vmatprep.subr.mxu0 0.0
    %3797 = vmatpush1.msra.mxu0 0.0
    %3798 = vmatprep.subr.mxu0 0.0
    %3799 = vmatpush1.msra.mxu0 0.0
    %3800 = vmatprep.subr.mxu0 0.0
    %3801 = vmatpush1.msra.mxu0 0.0
    %3802 = vmatprep.subr.mxu0 0.0
    %3803 = vmatpush1.msra.mxu0 0.0
    %3804 = vmatprep.subr.mxu0 0.0
    %3805 = vmatpush1.msra.mxu0 0.0
    %3806 = vmatprep.subr.mxu0 0.0
    %3807 = vmatpush1.msra.mxu0 0.0
    %3808 = vmatprep.subr.mxu0 0.0
    %3809 = vmatpush1.msra.mxu0 0.0
    %3810 = vmatprep.subr.mxu0 0.0
    %3811 = vmatpush1.msra.mxu0 0.0
    %3812 = vmatprep.subr.mxu0 0.0
    %3813 = vmatpush1.msra.mxu0 0.0
    %3814 = vmatprep.subr.mxu0 0.0
    %3815 = vmatpush1.msra.mxu0 0.0
    %3816 = vmatprep.subr.mxu0 0.0
    %3817 = vmatpush1.msra.mxu0 0.0
    %3818 = vmatprep.subr.mxu0 0.0
    %3819 = vmatpush1.msra.mxu0 0.0
    %3820 = vmatprep.subr.mxu0 0.0
    %3821 = vmatpush1.msra.mxu0 0.0
    %3822 = vmatprep.subr.mxu0 0.0
    %3823 = vmatpush1.msra.mxu0 0.0
    %3824 = vmatprep.subr.mxu0 0.0
    %3825 = vmatpush1.msra.mxu0 0.0
    %3826 = vmatprep.subr.mxu0 0.0
    %3827 = vmatpush1.msra.mxu0 0.0
    %3828 = vmatprep.mubr.f32.mxu0 0.0
    %v3829 = vand.u32 %v3638, 4294901760
    %3830 = vmatmul.mubr.f32.gmra.mrb[0].mxu0 %v3829
    %v3831 = vpop.f32.mrb[0].mxu0
    %v3832 = vadd.f32 %v3721, %v3831
    %v3833 = vpop.f32.mrb[0].mxu0
    %3834 = vmatprep.mubr.f32.mxu0 0.0
    %v3835 = vand.u32 %v3641, 4294901760
    %3836 = vmatmul.mubr.f32.gmra.mrb[0].mxu0 %v3835
    %v3837 = vpop.f32.mrb[0].mxu0
    %v3838 = vadd.f32 %v3731, %v3837
    %v3839 = vpop.f32.mrb[0].mxu0
    %3840 = vdwg.mxu0
    %3841 = vmatprep.subr.mxu0 0.0
    %v3842 = vand.u32 %v43, 4294901760
    %v3843 = vsub.f32 %v43, %v3842
    %3844 = vmatpush1.msra.mxu0 %v3843
    %3845 = vmatprep.subr.mxu0 0.0
    %v3846 = vand.u32 %v44, 4294901760
    %v3847 = vsub.f32 %v44, %v3846
    %3848 = vmatpush1.msra.mxu0 %v3847
    %3849 = vmatprep.subr.mxu0 0.0
    %v3850 = vand.u32 %v45, 4294901760
    %v3851 = vsub.f32 %v45, %v3850
    %3852 = vmatpush1.msra.mxu0 %v3851
    %3853 = vmatprep.subr.mxu0 0.0
    %v3854 = vand.u32 %v46, 4294901760
    %v3855 = vsub.f32 %v46, %v3854
    %3856 = vmatpush1.msra.mxu0 %v3855
    %3857 = vmatprep.subr.mxu0 0.0
    %v3858 = vand.u32 %v3633, 4294901760
    %v3859 = vsub.f32 %v3633, %v3858
    %3860 = vmatpush1.msra.mxu0 %v3859
    %3861 = vmatprep.subr.mxu0 0.0
    %v3862 = vand.u32 %v3634, 4294901760
    %v3863 = vsub.f32 %v3634, %v3862
    %3864 = vmatpush1.msra.mxu0 %v3863
    %3865 = vmatprep.subr.mxu0 0.0
    %3866 = vmatpush1.msra.mxu0 0.0
    %3867 = vmatprep.subr.mxu0 0.0
    %3868 = vmatpush1.msra.mxu0 0.0
    %3869 = vmatprep.subr.mxu0 0.0
    %3870 = vmatpush1.msra.mxu0 0.0
    %3871 = vmatprep.subr.mxu0 0.0
    %3872 = vmatpush1.msra.mxu0 0.0
    %3873 = vmatprep.subr.mxu0 0.0
    %3874 = vmatpush1.msra.mxu0 0.0
    %3875 = vmatprep.subr.mxu0 0.0
    %3876 = vmatpush1.msra.mxu0 0.0
    %3877 = vmatprep.subr.mxu0 0.0
    %3878 = vmatpush1.msra.mxu0 0.0
    %3879 = vmatprep.subr.mxu0 0.0
    %3880 = vmatpush1.msra.mxu0 0.0
    %3881 = vmatprep.subr.mxu0 0.0
    %3882 = vmatpush1.msra.mxu0 0.0
    %3883 = vmatprep.subr.mxu0 0.0
    %3884 = vmatpush1.msra.mxu0 0.0
    %3885 = vmatprep.subr.mxu0 0.0
    %3886 = vmatpush1.msra.mxu0 0.0
    %3887 = vmatprep.subr.mxu0 0.0
    %3888 = vmatpush1.msra.mxu0 0.0
    %3889 = vmatprep.subr.mxu0 0.0
    %3890 = vmatpush1.msra.mxu0 0.0
    %3891 = vmatprep.subr.mxu0 0.0
    %3892 = vmatpush1.msra.mxu0 0.0
    %3893 = vmatprep.subr.mxu0 0.0
    %3894 = vmatpush1.msra.mxu0 0.0
    %3895 = vmatprep.subr.mxu0 0.0
    %3896 = vmatpush1.msra.mxu0 0.0
    %3897 = vmatprep.subr.mxu0 0.0
    %3898 = vmatpush1.msra.mxu0 0.0
    %3899 = vmatprep.subr.mxu0 0.0
    %3900 = vmatpush1.msra.mxu0 0.0
    %3901 = vmatprep.subr.mxu0 0.0
    %3902 = vmatpush1.msra.mxu0 0.0
    %3903 = vmatprep.subr.mxu0 0.0
    %3904 = vmatpush1.msra.mxu0 0.0
    %3905 = vmatprep.subr.mxu0 0.0
    %3906 = vmatpush1.msra.mxu0 0.0
    %3907 = vmatprep.subr.mxu0 0.0
    %3908 = vmatpush1.msra.mxu0 0.0
    %3909 = vmatprep.subr.mxu0 0.0
    %3910 = vmatpush1.msra.mxu0 0.0
    %3911 = vmatprep.subr.mxu0 0.0
    %3912 = vmatpush1.msra.mxu0 0.0
    %3913 = vmatprep.subr.mxu0 0.0
    %3914 = vmatpush1.msra.mxu0 0.0
    %3915 = vmatprep.subr.mxu0 0.0
    %3916 = vmatpush1.msra.mxu0 0.0
    %3917 = vmatprep.mubr.f32.mxu0 0.0
    %v3918 = vand.u32 %v3638, 4294901760
    %v3919 = vsub.f32 %v3638, %v3918
    %3920 = vmatmul.mubr.f32.gmra.mrb[0].mxu0 %v3919
    %v3921 = vpop.f32.mrb[0].mxu0
    %v3922 = vadd.f32 %v3832, %v3921
    %v3923 = vpop.f32.mrb[0].mxu0
    %3924 = vmatprep.mubr.f32.mxu0 0.0
    %v3925 = vand.u32 %v3641, 4294901760
    %v3926 = vsub.f32 %v3641, %v3925
    %3927 = vmatmul.mubr.f32.gmra.mrb[0].mxu0 %v3926
    %v3928 = vpop.f32.mrb[0].mxu0
    %v3929 = vadd.f32 %v3838, %v3928
    %v3930 = vpop.f32.mrb[0].mxu0
    %3931 = vdwg.mxu0
    %3932 = vmatprep.subr.mxu0 0.0
    %v3933 = vand.u32 %v43, 4294901760
    %3934 = vmatpush1.msra.mxu0 %v3933
    %3935 = vmatprep.subr.mxu0 0.0
    %v3936 = vand.u32 %v44, 4294901760
    %3937 = vmatpush1.msra.mxu0 %v3936
    %3938 = vmatprep.subr.mxu0 0.0
    %v3939 = vand.u32 %v45, 4294901760
    %3940 = vmatpush1.msra.mxu0 %v3939
    %3941 = vmatprep.subr.mxu0 0.0
    %v3942 = vand.u32 %v46, 4294901760
    %3943 = vmatpush1.msra.mxu0 %v3942
    %3944 = vmatprep.subr.mxu0 0.0
    %v3945 = vand.u32 %v3633, 4294901760
    %3946 = vmatpush1.msra.mxu0 %v3945
    %3947 = vmatprep.subr.mxu0 0.0
    %v3948 = vand.u32 %v3634, 4294901760
    %3949 = vmatpush1.msra.mxu0 %v3948
    %3950 = vmatprep.subr.mxu0 0.0
    %3951 = vmatpush1.msra.mxu0 0.0
    %3952 = vmatprep.subr.mxu0 0.0
    %3953 = vmatpush1.msra.mxu0 0.0
    %3954 = vmatprep.subr.mxu0 0.0
    %3955 = vmatpush1.msra.mxu0 0.0
    %3956 = vmatprep.subr.mxu0 0.0
    %3957 = vmatpush1.msra.mxu0 0.0
    %3958 = vmatprep.subr.mxu0 0.0
    %3959 = vmatpush1.msra.mxu0 0.0
    %3960 = vmatprep.subr.mxu0 0.0
    %3961 = vmatpush1.msra.mxu0 0.0
    %3962 = vmatprep.subr.mxu0 0.0
    %3963 = vmatpush1.msra.mxu0 0.0
    %3964 = vmatprep.subr.mxu0 0.0
    %3965 = vmatpush1.msra.mxu0 0.0
    %3966 = vmatprep.subr.mxu0 0.0
    %3967 = vmatpush1.msra.mxu0 0.0
    %3968 = vmatprep.subr.mxu0 0.0
    %3969 = vmatpush1.msra.mxu0 0.0
    %3970 = vmatprep.subr.mxu0 0.0
    %3971 = vmatpush1.msra.mxu0 0.0
    %3972 = vmatprep.subr.mxu0 0.0
    %3973 = vmatpush1.msra.mxu0 0.0
    %3974 = vmatprep.subr.mxu0 0.0
    %3975 = vmatpush1.msra.mxu0 0.0
    %3976 = vmatprep.subr.mxu0 0.0
    %3977 = vmatpush1.msra.mxu0 0.0
    %3978 = vmatprep.subr.mxu0 0.0
    %3979 = vmatpush1.msra.mxu0 0.0
    %3980 = vmatprep.subr.mxu0 0.0
    %3981 = vmatpush1.msra.mxu0 0.0
    %3982 = vmatprep.subr.mxu0 0.0
    %3983 = vmatpush1.msra.mxu0 0.0
    %3984 = vmatprep.subr.mxu0 0.0
    %3985 = vmatpush1.msra.mxu0 0.0
    %3986 = vmatprep.subr.mxu0 0.0
    %3987 = vmatpush1.msra.mxu0 0.0
    %3988 = vmatprep.subr.mxu0 0.0
    %3989 = vmatpush1.msra.mxu0 0.0
    %3990 = vmatprep.subr.mxu0 0.0
    %3991 = vmatpush1.msra.mxu0 0.0
    %3992 = vmatprep.subr.mxu0 0.0
    %3993 = vmatpush1.msra.mxu0 0.0
    %3994 = vmatprep.subr.mxu0 0.0
    %3995 = vmatpush1.msra.mxu0 0.0
    %3996 = vmatprep.subr.mxu0 0.0
    %3997 = vmatpush1.msra.mxu0 0.0
    %3998 = vmatprep.subr.mxu0 0.0
    %3999 = vmatpush1.msra.mxu0 0.0
    %4000 = vmatprep.subr.mxu0 0.0
    %4001 = vmatpush1.msra.mxu0 0.0
    %4002 = vmatprep.mubr.f32.mxu0 0.0
    %v4003 = vand.u32 %v3638, 4294901760
    %v4004 = vsub.f32 %v3638, %v4003
    %v4005 = vand.u32 %v4004, 4294901760
    %4006 = vmatmul.mubr.f32.gmra.mrb[0].mxu0 %v4005
    %v4007 = vpop.f32.mrb[0].mxu0
    %v4008 = vadd.f32 %v3922, %v4007
    %v4009 = vpop.f32.mrb[0].mxu0
    %4010 = vmatprep.mubr.f32.mxu0 0.0
    %v4011 = vand.u32 %v3641, 4294901760
    %v4012 = vsub.f32 %v3641, %v4011
    %v4013 = vand.u32 %v4012, 4294901760
    %4014 = vmatmul.mubr.f32.gmra.mrb[0].mxu0 %v4013
    %v4015 = vpop.f32.mrb[0].mxu0
    %v4016 = vadd.f32 %v3929, %v4015
    %v4017 = vpop.f32.mrb[0].mxu0
    %4018 = vdwg.mxu0
    %4019 = vmatprep.subr.mxu0 0.0
    %v4020 = vand.u32 %v43, 4294901760
    %v4021 = vsub.f32 %v43, %v4020
    %v4022 = vand.u32 %v4021, 4294901760
    %4023 = vmatpush1.msra.mxu0 %v4022
    %4024 = vmatprep.subr.mxu0 0.0
    %v4025 = vand.u32 %v44, 4294901760
    %v4026 = vsub.f32 %v44, %v4025
    %v4027 = vand.u32 %v4026, 4294901760
    %4028 = vmatpush1.msra.mxu0 %v4027
    %4029 = vmatprep.subr.mxu0 0.0
    %v4030 = vand.u32 %v45, 4294901760
    %v4031 = vsub.f32 %v45, %v4030
    %v4032 = vand.u32 %v4031, 4294901760
    %4033 = vmatpush1.msra.mxu0 %v4032
    %4034 = vmatprep.subr.mxu0 0.0
    %v4035 = vand.u32 %v46, 4294901760
    %v4036 = vsub.f32 %v46, %v4035
    %v4037 = vand.u32 %v4036, 4294901760
    %4038 = vmatpush1.msra.mxu0 %v4037
    %4039 = vmatprep.subr.mxu0 0.0
    %v4040 = vand.u32 %v3633, 4294901760
    %v4041 = vsub.f32 %v3633, %v4040
    %v4042 = vand.u32 %v4041, 4294901760
    %4043 = vmatpush1.msra.mxu0 %v4042
    %4044 = vmatprep.subr.mxu0 0.0
    %v4045 = vand.u32 %v3634, 4294901760
    %v4046 = vsub.f32 %v3634, %v4045
    %v4047 = vand.u32 %v4046, 4294901760
    %4048 = vmatpush1.msra.mxu0 %v4047
    %4049 = vmatprep.subr.mxu0 0.0
    %4050 = vmatpush1.msra.mxu0 0.0
    %4051 = vmatprep.subr.mxu0 0.0
    %4052 = vmatpush1.msra.mxu0 0.0
    %4053 = vmatprep.subr.mxu0 0.0
    %4054 = vmatpush1.msra.mxu0 0.0
    %4055 = vmatprep.subr.mxu0 0.0
    %4056 = vmatpush1.msra.mxu0 0.0
    %4057 = vmatprep.subr.mxu0 0.0
    %4058 = vmatpush1.msra.mxu0 0.0
    %4059 = vmatprep.subr.mxu0 0.0
    %4060 = vmatpush1.msra.mxu0 0.0
    %4061 = vmatprep.subr.mxu0 0.0
    %4062 = vmatpush1.msra.mxu0 0.0
    %4063 = vmatprep.subr.mxu0 0.0
    %4064 = vmatpush1.msra.mxu0 0.0
    %4065 = vmatprep.subr.mxu0 0.0
    %4066 = vmatpush1.msra.mxu0 0.0
    %4067 = vmatprep.subr.mxu0 0.0
    %4068 = vmatpush1.msra.mxu0 0.0
    %4069 = vmatprep.subr.mxu0 0.0
    %4070 = vmatpush1.msra.mxu0 0.0
    %4071 = vmatprep.subr.mxu0 0.0
    %4072 = vmatpush1.msra.mxu0 0.0
    %4073 = vmatprep.subr.mxu0 0.0
    %4074 = vmatpush1.msra.mxu0 0.0
    %4075 = vmatprep.subr.mxu0 0.0
    %4076 = vmatpush1.msra.mxu0 0.0
    %4077 = vmatprep.subr.mxu0 0.0
    %4078 = vmatpush1.msra.mxu0 0.0
    %4079 = vmatprep.subr.mxu0 0.0
    %4080 = vmatpush1.msra.mxu0 0.0
    %4081 = vmatprep.subr.mxu0 0.0
    %4082 = vmatpush1.msra.mxu0 0.0
    %4083 = vmatprep.subr.mxu0 0.0
    %4084 = vmatpush1.msra.mxu0 0.0
    %4085 = vmatprep.subr.mxu0 0.0
    %4086 = vmatpush1.msra.mxu0 0.0
    %4087 = vmatprep.subr.mxu0 0.0
    %4088 = vmatpush1.msra.mxu0 0.0
    %4089 = vmatprep.subr.mxu0 0.0
    %4090 = vmatpush1.msra.mxu0 0.0
    %4091 = vmatprep.subr.mxu0 0.0
    %4092 = vmatpush1.msra.mxu0 0.0
    %4093 = vmatprep.subr.mxu0 0.0
    %4094 = vmatpush1.msra.mxu0 0.0
    %4095 = vmatprep.subr.mxu0 0.0
    %4096 = vmatpush1.msra.mxu0 0.0
    %4097 = vmatprep.subr.mxu0 0.0
    %4098 = vmatpush1.msra.mxu0 0.0
    %4099 = vmatprep.subr.mxu0 0.0
    %4100 = vmatpush1.msra.mxu0 0.0
    %4101 = vmatprep.mubr.f32.mxu0 0.0
    %v4102 = vand.u32 %v3638, 4294901760
    %4103 = vmatmul.mubr.f32.gmra.mrb[0].mxu0 %v4102
    %v4104 = vpop.f32.mrb[0].mxu0
    %v4105 = vadd.f32 %v4008, %v4104
    %v4106 = vpop.f32.mrb[0].mxu0
    %4107 = vmatprep.mubr.f32.mxu0 0.0
    %v4108 = vand.u32 %v3641, 4294901760
    %4109 = vmatmul.mubr.f32.gmra.mrb[0].mxu0 %v4108
    %v4110 = vpop.f32.mrb[0].mxu0
    %v4111 = vadd.f32 %v4016, %v4110
    %v4112 = vpop.f32.mrb[0].mxu0
    %4113 = vdwg.mxu0
    %4114 = vmatprep.subr.mxu0 0.0
    %v4115 = vand.u32 %v43, 4294901760
    %4116 = vmatpush1.msra.mxu0 %v4115
    %4117 = vmatprep.subr.mxu0 0.0
    %v4118 = vand.u32 %v44, 4294901760
    %4119 = vmatpush1.msra.mxu0 %v4118
    %4120 = vmatprep.subr.mxu0 0.0
    %v4121 = vand.u32 %v45, 4294901760
    %4122 = vmatpush1.msra.mxu0 %v4121
    %4123 = vmatprep.subr.mxu0 0.0
    %v4124 = vand.u32 %v46, 4294901760
    %4125 = vmatpush1.msra.mxu0 %v4124
    %4126 = vmatprep.subr.mxu0 0.0
    %v4127 = vand.u32 %v3633, 4294901760
    %4128 = vmatpush1.msra.mxu0 %v4127
    %4129 = vmatprep.subr.mxu0 0.0
    %v4130 = vand.u32 %v3634, 4294901760
    %4131 = vmatpush1.msra.mxu0 %v4130
    %4132 = vmatprep.subr.mxu0 0.0
    %4133 = vmatpush1.msra.mxu0 0.0
    %4134 = vmatprep.subr.mxu0 0.0
    %4135 = vmatpush1.msra.mxu0 0.0
    %4136 = vmatprep.subr.mxu0 0.0
    %4137 = vmatpush1.msra.mxu0 0.0
    %4138 = vmatprep.subr.mxu0 0.0
    %4139 = vmatpush1.msra.mxu0 0.0
    %4140 = vmatprep.subr.mxu0 0.0
    %4141 = vmatpush1.msra.mxu0 0.0
    %4142 = vmatprep.subr.mxu0 0.0
    %4143 = vmatpush1.msra.mxu0 0.0
    %4144 = vmatprep.subr.mxu0 0.0
    %4145 = vmatpush1.msra.mxu0 0.0
    %4146 = vmatprep.subr.mxu0 0.0
    %4147 = vmatpush1.msra.mxu0 0.0
    %4148 = vmatprep.subr.mxu0 0.0
    %4149 = vmatpush1.msra.mxu0 0.0
    %4150 = vmatprep.subr.mxu0 0.0
    %4151 = vmatpush1.msra.mxu0 0.0
    %4152 = vmatprep.subr.mxu0 0.0
    %4153 = vmatpush1.msra.mxu0 0.0
    %4154 = vmatprep.subr.mxu0 0.0
    %4155 = vmatpush1.msra.mxu0 0.0
    %4156 = vmatprep.subr.mxu0 0.0
    %4157 = vmatpush1.msra.mxu0 0.0
    %4158 = vmatprep.subr.mxu0 0.0
    %4159 = vmatpush1.msra.mxu0 0.0
    %4160 = vmatprep.subr.mxu0 0.0
    %4161 = vmatpush1.msra.mxu0 0.0
    %4162 = vmatprep.subr.mxu0 0.0
    %4163 = vmatpush1.msra.mxu0 0.0
    %4164 = vmatprep.subr.mxu0 0.0
    %4165 = vmatpush1.msra.mxu0 0.0
    %4166 = vmatprep.subr.mxu0 0.0
    %4167 = vmatpush1.msra.mxu0 0.0
    %4168 = vmatprep.subr.mxu0 0.0
    %4169 = vmatpush1.msra.mxu0 0.0
    %4170 = vmatprep.subr.mxu0 0.0
    %4171 = vmatpush1.msra.mxu0 0.0
    %4172 = vmatprep.subr.mxu0 0.0
    %4173 = vmatpush1.msra.mxu0 0.0
    %4174 = vmatprep.subr.mxu0 0.0
    %4175 = vmatpush1.msra.mxu0 0.0
    %4176 = vmatprep.subr.mxu0 0.0
    %4177 = vmatpush1.msra.mxu0 0.0
    %4178 = vmatprep.subr.mxu0 0.0
    %4179 = vmatpush1.msra.mxu0 0.0
    %4180 = vmatprep.subr.mxu0 0.0
    %4181 = vmatpush1.msra.mxu0 0.0
    %4182 = vmatprep.subr.mxu0 0.0
    %4183 = vmatpush1.msra.mxu0 0.0
    %4184 = vmatprep.mubr.f32.mxu0 0.0
    %v4185 = vand.u32 %v3638, 4294901760
    %4186 = vmatmul.mubr.f32.gmra.mrb[0].mxu0 %v4185
    %v4187 = vpop.f32.mrb[0].mxu0
    %v4188 = vadd.f32 %v4105, %v4187
    %v4189 = vpop.f32.mrb[0].mxu0
    %4190 = vmatprep.mubr.f32.mxu0 0.0
    %v4191 = vand.u32 %v3641, 4294901760
    %4192 = vmatmul.mubr.f32.gmra.mrb[0].mxu0 %v4191
    %v4193 = vpop.f32.mrb[0].mxu0
    %v4194 = vadd.f32 %v4111, %v4193
    %v4195 = vpop.f32.mrb[0].mxu0
    %4196 = vdwg.mxu0
    %v4197 = vmul.f32 %v3633, %v4188
    %v4198 = vmul.f32 %v3634, %v4194
    %v4199 = vsel %vm61, %v4197, 0.0
    %4200 = vadd.xlane.f32.xlu0 %v4199
    %v4201 = vpop.xlane.xlu0 %4200
    %v4202 = vsel %vm61, %v4198, 0.0
    %4203 = vadd.xlane.f32.xlu0 %v4202
    %v4204 = vpop.xlane.xlu0 %4203
    %v4205 = vmul.f32 %v4201, %v3633
    %v4206 = vmul.f32 %v4204, %v3634
    %v4207 = vsub.f32 %v4188, %v4205
    %v4208 = vsub.f32 %v4194, %v4206
    %v4209 = vmul.f32 %v58, %v4207
    %v4210 = vmul.f32 %v58, %v4208
    %v4211 = vadd.f32 %v3633, %v4209
    %v4212 = vadd.f32 %v3634, %v4210
    %v4213 = vmul.f32 %v4211, %v4211
    %v4214 = vmul.f32 %v4212, %v4212
    %v4215 = vsel %vm61, %v4213, 0.0
    %4216 = vadd.xlane.f32.xlu0 %v4215
    %v4217 = vpop.xlane.xlu0 %4216
    %v4218 = vsel %vm61, %v4214, 0.0
    %4219 = vadd.xlane.f32.xlu0 %v4218
    %v4220 = vpop.xlane.xlu0 %4219
    %v4221 = vmax.f32 %v4217, 1e-24
    %v4222 = vmax.f32 %v4220, 1e-24
    %v4223 = vrsqrt.pop %v4221
    %v4224 = vrsqrt.pop %v4222
    %v4225 = vmul.f32 %v4211, %v4223
    %v4226 = vmul.f32 %v4212, %v4224
    %v4227 = vsel %vm61, %v4225, %v77
    %v4228 = vsel %vm61, %v4226, %v79
    %v4230 = vsel %vm84, %v4227, 0
    %v4233 = vsel %vm84, %v4228, 0
    %4235 = vmatprep.subr.mxu0 0.0
    %v4236 = vand.u32 %v43, 4294901760
    %4237 = vmatpush1.msra.mxu0 %v4236
    %4238 = vmatprep.subr.mxu0 0.0
    %v4239 = vand.u32 %v44, 4294901760
    %4240 = vmatpush1.msra.mxu0 %v4239
    %4241 = vmatprep.subr.mxu0 0.0
    %v4242 = vand.u32 %v45, 4294901760
    %4243 = vmatpush1.msra.mxu0 %v4242
    %4244 = vmatprep.subr.mxu0 0.0
    %v4245 = vand.u32 %v46, 4294901760
    %4246 = vmatpush1.msra.mxu0 %v4245
    %4247 = vmatprep.subr.mxu0 0.0
    %v4248 = vand.u32 %v4225, 4294901760
    %4249 = vmatpush1.msra.mxu0 %v4248
    %4250 = vmatprep.subr.mxu0 0.0
    %v4251 = vand.u32 %v4226, 4294901760
    %4252 = vmatpush1.msra.mxu0 %v4251
    %4253 = vmatprep.subr.mxu0 0.0
    %4254 = vmatpush1.msra.mxu0 0.0
    %4255 = vmatprep.subr.mxu0 0.0
    %4256 = vmatpush1.msra.mxu0 0.0
    %4257 = vmatprep.subr.mxu0 0.0
    %4258 = vmatpush1.msra.mxu0 0.0
    %4259 = vmatprep.subr.mxu0 0.0
    %4260 = vmatpush1.msra.mxu0 0.0
    %4261 = vmatprep.subr.mxu0 0.0
    %4262 = vmatpush1.msra.mxu0 0.0
    %4263 = vmatprep.subr.mxu0 0.0
    %4264 = vmatpush1.msra.mxu0 0.0
    %4265 = vmatprep.subr.mxu0 0.0
    %4266 = vmatpush1.msra.mxu0 0.0
    %4267 = vmatprep.subr.mxu0 0.0
    %4268 = vmatpush1.msra.mxu0 0.0
    %4269 = vmatprep.subr.mxu0 0.0
    %4270 = vmatpush1.msra.mxu0 0.0
    %4271 = vmatprep.subr.mxu0 0.0
    %4272 = vmatpush1.msra.mxu0 0.0
    %4273 = vmatprep.subr.mxu0 0.0
    %4274 = vmatpush1.msra.mxu0 0.0
    %4275 = vmatprep.subr.mxu0 0.0
    %4276 = vmatpush1.msra.mxu0 0.0
    %4277 = vmatprep.subr.mxu0 0.0
    %4278 = vmatpush1.msra.mxu0 0.0
    %4279 = vmatprep.subr.mxu0 0.0
    %4280 = vmatpush1.msra.mxu0 0.0
    %4281 = vmatprep.subr.mxu0 0.0
    %4282 = vmatpush1.msra.mxu0 0.0
    %4283 = vmatprep.subr.mxu0 0.0
    %4284 = vmatpush1.msra.mxu0 0.0
    %4285 = vmatprep.subr.mxu0 0.0
    %4286 = vmatpush1.msra.mxu0 0.0
    %4287 = vmatprep.subr.mxu0 0.0
    %4288 = vmatpush1.msra.mxu0 0.0
    %4289 = vmatprep.subr.mxu0 0.0
    %4290 = vmatpush1.msra.mxu0 0.0
    %4291 = vmatprep.subr.mxu0 0.0
    %4292 = vmatpush1.msra.mxu0 0.0
    %4293 = vmatprep.subr.mxu0 0.0
    %4294 = vmatpush1.msra.mxu0 0.0
    %4295 = vmatprep.subr.mxu0 0.0
    %4296 = vmatpush1.msra.mxu0 0.0
    %4297 = vmatprep.subr.mxu0 0.0
    %4298 = vmatpush1.msra.mxu0 0.0
    %4299 = vmatprep.subr.mxu0 0.0
    %4300 = vmatpush1.msra.mxu0 0.0
    %4301 = vmatprep.subr.mxu0 0.0
    %4302 = vmatpush1.msra.mxu0 0.0
    %4303 = vmatprep.subr.mxu0 0.0
    %4304 = vmatpush1.msra.mxu0 0.0
    %4305 = vmatprep.mubr.f32.mxu0 0.0
    %v4306 = vand.u32 %v4230, 4294901760
    %v4307 = vsub.f32 %v4230, %v4306
    %v4308 = vand.u32 %v4307, 4294901760
    %v4309 = vsub.f32 %v4307, %v4308
    %v4310 = vand.u32 %v4309, 4294901760
    %4311 = vmatmul.mubr.f32.gmra.mrb[0].mxu0 %v4310
    %v4312 = vpop.f32.mrb[0].mxu0
    %v4313 = vadd.f32 %v47, %v4312
    %v4314 = vpop.f32.mrb[0].mxu0
    %4315 = vmatprep.mubr.f32.mxu0 0.0
    %v4316 = vand.u32 %v4233, 4294901760
    %v4317 = vsub.f32 %v4233, %v4316
    %v4318 = vand.u32 %v4317, 4294901760
    %v4319 = vsub.f32 %v4317, %v4318
    %v4320 = vand.u32 %v4319, 4294901760
    %4321 = vmatmul.mubr.f32.gmra.mrb[0].mxu0 %v4320
    %v4322 = vpop.f32.mrb[0].mxu0
    %v4323 = vadd.f32 %v47, %v4322
    %v4324 = vpop.f32.mrb[0].mxu0
    %4325 = vdwg.mxu0
    %4326 = vmatprep.subr.mxu0 0.0
    %v4327 = vand.u32 %v43, 4294901760
    %v4328 = vsub.f32 %v43, %v4327
    %v4329 = vand.u32 %v4328, 4294901760
    %v4330 = vsub.f32 %v4328, %v4329
    %v4331 = vand.u32 %v4330, 4294901760
    %4332 = vmatpush1.msra.mxu0 %v4331
    %4333 = vmatprep.subr.mxu0 0.0
    %v4334 = vand.u32 %v44, 4294901760
    %v4335 = vsub.f32 %v44, %v4334
    %v4336 = vand.u32 %v4335, 4294901760
    %v4337 = vsub.f32 %v4335, %v4336
    %v4338 = vand.u32 %v4337, 4294901760
    %4339 = vmatpush1.msra.mxu0 %v4338
    %4340 = vmatprep.subr.mxu0 0.0
    %v4341 = vand.u32 %v45, 4294901760
    %v4342 = vsub.f32 %v45, %v4341
    %v4343 = vand.u32 %v4342, 4294901760
    %v4344 = vsub.f32 %v4342, %v4343
    %v4345 = vand.u32 %v4344, 4294901760
    %4346 = vmatpush1.msra.mxu0 %v4345
    %4347 = vmatprep.subr.mxu0 0.0
    %v4348 = vand.u32 %v46, 4294901760
    %v4349 = vsub.f32 %v46, %v4348
    %v4350 = vand.u32 %v4349, 4294901760
    %v4351 = vsub.f32 %v4349, %v4350
    %v4352 = vand.u32 %v4351, 4294901760
    %4353 = vmatpush1.msra.mxu0 %v4352
    %4354 = vmatprep.subr.mxu0 0.0
    %v4355 = vand.u32 %v4225, 4294901760
    %v4356 = vsub.f32 %v4225, %v4355
    %v4357 = vand.u32 %v4356, 4294901760
    %v4358 = vsub.f32 %v4356, %v4357
    %v4359 = vand.u32 %v4358, 4294901760
    %4360 = vmatpush1.msra.mxu0 %v4359
    %4361 = vmatprep.subr.mxu0 0.0
    %v4362 = vand.u32 %v4226, 4294901760
    %v4363 = vsub.f32 %v4226, %v4362
    %v4364 = vand.u32 %v4363, 4294901760
    %v4365 = vsub.f32 %v4363, %v4364
    %v4366 = vand.u32 %v4365, 4294901760
    %4367 = vmatpush1.msra.mxu0 %v4366
    %4368 = vmatprep.subr.mxu0 0.0
    %4369 = vmatpush1.msra.mxu0 0.0
    %4370 = vmatprep.subr.mxu0 0.0
    %4371 = vmatpush1.msra.mxu0 0.0
    %4372 = vmatprep.subr.mxu0 0.0
    %4373 = vmatpush1.msra.mxu0 0.0
    %4374 = vmatprep.subr.mxu0 0.0
    %4375 = vmatpush1.msra.mxu0 0.0
    %4376 = vmatprep.subr.mxu0 0.0
    %4377 = vmatpush1.msra.mxu0 0.0
    %4378 = vmatprep.subr.mxu0 0.0
    %4379 = vmatpush1.msra.mxu0 0.0
    %4380 = vmatprep.subr.mxu0 0.0
    %4381 = vmatpush1.msra.mxu0 0.0
    %4382 = vmatprep.subr.mxu0 0.0
    %4383 = vmatpush1.msra.mxu0 0.0
    %4384 = vmatprep.subr.mxu0 0.0
    %4385 = vmatpush1.msra.mxu0 0.0
    %4386 = vmatprep.subr.mxu0 0.0
    %4387 = vmatpush1.msra.mxu0 0.0
    %4388 = vmatprep.subr.mxu0 0.0
    %4389 = vmatpush1.msra.mxu0 0.0
    %4390 = vmatprep.subr.mxu0 0.0
    %4391 = vmatpush1.msra.mxu0 0.0
    %4392 = vmatprep.subr.mxu0 0.0
    %4393 = vmatpush1.msra.mxu0 0.0
    %4394 = vmatprep.subr.mxu0 0.0
    %4395 = vmatpush1.msra.mxu0 0.0
    %4396 = vmatprep.subr.mxu0 0.0
    %4397 = vmatpush1.msra.mxu0 0.0
    %4398 = vmatprep.subr.mxu0 0.0
    %4399 = vmatpush1.msra.mxu0 0.0
    %4400 = vmatprep.subr.mxu0 0.0
    %4401 = vmatpush1.msra.mxu0 0.0
    %4402 = vmatprep.subr.mxu0 0.0
    %4403 = vmatpush1.msra.mxu0 0.0
    %4404 = vmatprep.subr.mxu0 0.0
    %4405 = vmatpush1.msra.mxu0 0.0
    %4406 = vmatprep.subr.mxu0 0.0
    %4407 = vmatpush1.msra.mxu0 0.0
    %4408 = vmatprep.subr.mxu0 0.0
    %4409 = vmatpush1.msra.mxu0 0.0
    %4410 = vmatprep.subr.mxu0 0.0
    %4411 = vmatpush1.msra.mxu0 0.0
    %4412 = vmatprep.subr.mxu0 0.0
    %4413 = vmatpush1.msra.mxu0 0.0
    %4414 = vmatprep.subr.mxu0 0.0
    %4415 = vmatpush1.msra.mxu0 0.0
    %4416 = vmatprep.subr.mxu0 0.0
    %4417 = vmatpush1.msra.mxu0 0.0
    %4418 = vmatprep.subr.mxu0 0.0
    %4419 = vmatpush1.msra.mxu0 0.0
    %4420 = vmatprep.mubr.f32.mxu0 0.0
    %v4421 = vand.u32 %v4230, 4294901760
    %4422 = vmatmul.mubr.f32.gmra.mrb[0].mxu0 %v4421
    %v4423 = vpop.f32.mrb[0].mxu0
    %v4424 = vadd.f32 %v4313, %v4423
    %v4425 = vpop.f32.mrb[0].mxu0
    %4426 = vmatprep.mubr.f32.mxu0 0.0
    %v4427 = vand.u32 %v4233, 4294901760
    %4428 = vmatmul.mubr.f32.gmra.mrb[0].mxu0 %v4427
    %v4429 = vpop.f32.mrb[0].mxu0
    %v4430 = vadd.f32 %v4323, %v4429
    %v4431 = vpop.f32.mrb[0].mxu0
    %4432 = vdwg.mxu0
    %4433 = vmatprep.subr.mxu0 0.0
    %v4434 = vand.u32 %v43, 4294901760
    %v4435 = vsub.f32 %v43, %v4434
    %4436 = vmatpush1.msra.mxu0 %v4435
    %4437 = vmatprep.subr.mxu0 0.0
    %v4438 = vand.u32 %v44, 4294901760
    %v4439 = vsub.f32 %v44, %v4438
    %4440 = vmatpush1.msra.mxu0 %v4439
    %4441 = vmatprep.subr.mxu0 0.0
    %v4442 = vand.u32 %v45, 4294901760
    %v4443 = vsub.f32 %v45, %v4442
    %4444 = vmatpush1.msra.mxu0 %v4443
    %4445 = vmatprep.subr.mxu0 0.0
    %v4446 = vand.u32 %v46, 4294901760
    %v4447 = vsub.f32 %v46, %v4446
    %4448 = vmatpush1.msra.mxu0 %v4447
    %4449 = vmatprep.subr.mxu0 0.0
    %v4450 = vand.u32 %v4225, 4294901760
    %v4451 = vsub.f32 %v4225, %v4450
    %4452 = vmatpush1.msra.mxu0 %v4451
    %4453 = vmatprep.subr.mxu0 0.0
    %v4454 = vand.u32 %v4226, 4294901760
    %v4455 = vsub.f32 %v4226, %v4454
    %4456 = vmatpush1.msra.mxu0 %v4455
    %4457 = vmatprep.subr.mxu0 0.0
    %4458 = vmatpush1.msra.mxu0 0.0
    %4459 = vmatprep.subr.mxu0 0.0
    %4460 = vmatpush1.msra.mxu0 0.0
    %4461 = vmatprep.subr.mxu0 0.0
    %4462 = vmatpush1.msra.mxu0 0.0
    %4463 = vmatprep.subr.mxu0 0.0
    %4464 = vmatpush1.msra.mxu0 0.0
    %4465 = vmatprep.subr.mxu0 0.0
    %4466 = vmatpush1.msra.mxu0 0.0
    %4467 = vmatprep.subr.mxu0 0.0
    %4468 = vmatpush1.msra.mxu0 0.0
    %4469 = vmatprep.subr.mxu0 0.0
    %4470 = vmatpush1.msra.mxu0 0.0
    %4471 = vmatprep.subr.mxu0 0.0
    %4472 = vmatpush1.msra.mxu0 0.0
    %4473 = vmatprep.subr.mxu0 0.0
    %4474 = vmatpush1.msra.mxu0 0.0
    %4475 = vmatprep.subr.mxu0 0.0
    %4476 = vmatpush1.msra.mxu0 0.0
    %4477 = vmatprep.subr.mxu0 0.0
    %4478 = vmatpush1.msra.mxu0 0.0
    %4479 = vmatprep.subr.mxu0 0.0
    %4480 = vmatpush1.msra.mxu0 0.0
    %4481 = vmatprep.subr.mxu0 0.0
    %4482 = vmatpush1.msra.mxu0 0.0
    %4483 = vmatprep.subr.mxu0 0.0
    %4484 = vmatpush1.msra.mxu0 0.0
    %4485 = vmatprep.subr.mxu0 0.0
    %4486 = vmatpush1.msra.mxu0 0.0
    %4487 = vmatprep.subr.mxu0 0.0
    %4488 = vmatpush1.msra.mxu0 0.0
    %4489 = vmatprep.subr.mxu0 0.0
    %4490 = vmatpush1.msra.mxu0 0.0
    %4491 = vmatprep.subr.mxu0 0.0
    %4492 = vmatpush1.msra.mxu0 0.0
    %4493 = vmatprep.subr.mxu0 0.0
    %4494 = vmatpush1.msra.mxu0 0.0
    %4495 = vmatprep.subr.mxu0 0.0
    %4496 = vmatpush1.msra.mxu0 0.0
    %4497 = vmatprep.subr.mxu0 0.0
    %4498 = vmatpush1.msra.mxu0 0.0
    %4499 = vmatprep.subr.mxu0 0.0
    %4500 = vmatpush1.msra.mxu0 0.0
    %4501 = vmatprep.subr.mxu0 0.0
    %4502 = vmatpush1.msra.mxu0 0.0
    %4503 = vmatprep.subr.mxu0 0.0
    %4504 = vmatpush1.msra.mxu0 0.0
    %4505 = vmatprep.subr.mxu0 0.0
    %4506 = vmatpush1.msra.mxu0 0.0
    %4507 = vmatprep.subr.mxu0 0.0
    %4508 = vmatpush1.msra.mxu0 0.0
    %4509 = vmatprep.mubr.f32.mxu0 0.0
    %v4510 = vand.u32 %v4230, 4294901760
    %v4511 = vsub.f32 %v4230, %v4510
    %4512 = vmatmul.mubr.f32.gmra.mrb[0].mxu0 %v4511
    %v4513 = vpop.f32.mrb[0].mxu0
    %v4514 = vadd.f32 %v4424, %v4513
    %v4515 = vpop.f32.mrb[0].mxu0
    %4516 = vmatprep.mubr.f32.mxu0 0.0
    %v4517 = vand.u32 %v4233, 4294901760
    %v4518 = vsub.f32 %v4233, %v4517
    %4519 = vmatmul.mubr.f32.gmra.mrb[0].mxu0 %v4518
    %v4520 = vpop.f32.mrb[0].mxu0
    %v4521 = vadd.f32 %v4430, %v4520
    %v4522 = vpop.f32.mrb[0].mxu0
    %4523 = vdwg.mxu0
    %4524 = vmatprep.subr.mxu0 0.0
    %v4525 = vand.u32 %v43, 4294901760
    %4526 = vmatpush1.msra.mxu0 %v4525
    %4527 = vmatprep.subr.mxu0 0.0
    %v4528 = vand.u32 %v44, 4294901760
    %4529 = vmatpush1.msra.mxu0 %v4528
    %4530 = vmatprep.subr.mxu0 0.0
    %v4531 = vand.u32 %v45, 4294901760
    %4532 = vmatpush1.msra.mxu0 %v4531
    %4533 = vmatprep.subr.mxu0 0.0
    %v4534 = vand.u32 %v46, 4294901760
    %4535 = vmatpush1.msra.mxu0 %v4534
    %4536 = vmatprep.subr.mxu0 0.0
    %v4537 = vand.u32 %v4225, 4294901760
    %4538 = vmatpush1.msra.mxu0 %v4537
    %4539 = vmatprep.subr.mxu0 0.0
    %v4540 = vand.u32 %v4226, 4294901760
    %4541 = vmatpush1.msra.mxu0 %v4540
    %4542 = vmatprep.subr.mxu0 0.0
    %4543 = vmatpush1.msra.mxu0 0.0
    %4544 = vmatprep.subr.mxu0 0.0
    %4545 = vmatpush1.msra.mxu0 0.0
    %4546 = vmatprep.subr.mxu0 0.0
    %4547 = vmatpush1.msra.mxu0 0.0
    %4548 = vmatprep.subr.mxu0 0.0
    %4549 = vmatpush1.msra.mxu0 0.0
    %4550 = vmatprep.subr.mxu0 0.0
    %4551 = vmatpush1.msra.mxu0 0.0
    %4552 = vmatprep.subr.mxu0 0.0
    %4553 = vmatpush1.msra.mxu0 0.0
    %4554 = vmatprep.subr.mxu0 0.0
    %4555 = vmatpush1.msra.mxu0 0.0
    %4556 = vmatprep.subr.mxu0 0.0
    %4557 = vmatpush1.msra.mxu0 0.0
    %4558 = vmatprep.subr.mxu0 0.0
    %4559 = vmatpush1.msra.mxu0 0.0
    %4560 = vmatprep.subr.mxu0 0.0
    %4561 = vmatpush1.msra.mxu0 0.0
    %4562 = vmatprep.subr.mxu0 0.0
    %4563 = vmatpush1.msra.mxu0 0.0
    %4564 = vmatprep.subr.mxu0 0.0
    %4565 = vmatpush1.msra.mxu0 0.0
    %4566 = vmatprep.subr.mxu0 0.0
    %4567 = vmatpush1.msra.mxu0 0.0
    %4568 = vmatprep.subr.mxu0 0.0
    %4569 = vmatpush1.msra.mxu0 0.0
    %4570 = vmatprep.subr.mxu0 0.0
    %4571 = vmatpush1.msra.mxu0 0.0
    %4572 = vmatprep.subr.mxu0 0.0
    %4573 = vmatpush1.msra.mxu0 0.0
    %4574 = vmatprep.subr.mxu0 0.0
    %4575 = vmatpush1.msra.mxu0 0.0
    %4576 = vmatprep.subr.mxu0 0.0
    %4577 = vmatpush1.msra.mxu0 0.0
    %4578 = vmatprep.subr.mxu0 0.0
    %4579 = vmatpush1.msra.mxu0 0.0
    %4580 = vmatprep.subr.mxu0 0.0
    %4581 = vmatpush1.msra.mxu0 0.0
    %4582 = vmatprep.subr.mxu0 0.0
    %4583 = vmatpush1.msra.mxu0 0.0
    %4584 = vmatprep.subr.mxu0 0.0
    %4585 = vmatpush1.msra.mxu0 0.0
    %4586 = vmatprep.subr.mxu0 0.0
    %4587 = vmatpush1.msra.mxu0 0.0
    %4588 = vmatprep.subr.mxu0 0.0
    %4589 = vmatpush1.msra.mxu0 0.0
    %4590 = vmatprep.subr.mxu0 0.0
    %4591 = vmatpush1.msra.mxu0 0.0
    %4592 = vmatprep.subr.mxu0 0.0
    %4593 = vmatpush1.msra.mxu0 0.0
    %4594 = vmatprep.mubr.f32.mxu0 0.0
    %v4595 = vand.u32 %v4230, 4294901760
    %v4596 = vsub.f32 %v4230, %v4595
    %v4597 = vand.u32 %v4596, 4294901760
    %4598 = vmatmul.mubr.f32.gmra.mrb[0].mxu0 %v4597
    %v4599 = vpop.f32.mrb[0].mxu0
    %v4600 = vadd.f32 %v4514, %v4599
    %v4601 = vpop.f32.mrb[0].mxu0
    %4602 = vmatprep.mubr.f32.mxu0 0.0
    %v4603 = vand.u32 %v4233, 4294901760
    %v4604 = vsub.f32 %v4233, %v4603
    %v4605 = vand.u32 %v4604, 4294901760
    %4606 = vmatmul.mubr.f32.gmra.mrb[0].mxu0 %v4605
    %v4607 = vpop.f32.mrb[0].mxu0
    %v4608 = vadd.f32 %v4521, %v4607
    %v4609 = vpop.f32.mrb[0].mxu0
    %4610 = vdwg.mxu0
    %4611 = vmatprep.subr.mxu0 0.0
    %v4612 = vand.u32 %v43, 4294901760
    %v4613 = vsub.f32 %v43, %v4612
    %v4614 = vand.u32 %v4613, 4294901760
    %4615 = vmatpush1.msra.mxu0 %v4614
    %4616 = vmatprep.subr.mxu0 0.0
    %v4617 = vand.u32 %v44, 4294901760
    %v4618 = vsub.f32 %v44, %v4617
    %v4619 = vand.u32 %v4618, 4294901760
    %4620 = vmatpush1.msra.mxu0 %v4619
    %4621 = vmatprep.subr.mxu0 0.0
    %v4622 = vand.u32 %v45, 4294901760
    %v4623 = vsub.f32 %v45, %v4622
    %v4624 = vand.u32 %v4623, 4294901760
    %4625 = vmatpush1.msra.mxu0 %v4624
    %4626 = vmatprep.subr.mxu0 0.0
    %v4627 = vand.u32 %v46, 4294901760
    %v4628 = vsub.f32 %v46, %v4627
    %v4629 = vand.u32 %v4628, 4294901760
    %4630 = vmatpush1.msra.mxu0 %v4629
    %4631 = vmatprep.subr.mxu0 0.0
    %v4632 = vand.u32 %v4225, 4294901760
    %v4633 = vsub.f32 %v4225, %v4632
    %v4634 = vand.u32 %v4633, 4294901760
    %4635 = vmatpush1.msra.mxu0 %v4634
    %4636 = vmatprep.subr.mxu0 0.0
    %v4637 = vand.u32 %v4226, 4294901760
    %v4638 = vsub.f32 %v4226, %v4637
    %v4639 = vand.u32 %v4638, 4294901760
    %4640 = vmatpush1.msra.mxu0 %v4639
    %4641 = vmatprep.subr.mxu0 0.0
    %4642 = vmatpush1.msra.mxu0 0.0
    %4643 = vmatprep.subr.mxu0 0.0
    %4644 = vmatpush1.msra.mxu0 0.0
    %4645 = vmatprep.subr.mxu0 0.0
    %4646 = vmatpush1.msra.mxu0 0.0
    %4647 = vmatprep.subr.mxu0 0.0
    %4648 = vmatpush1.msra.mxu0 0.0
    %4649 = vmatprep.subr.mxu0 0.0
    %4650 = vmatpush1.msra.mxu0 0.0
    %4651 = vmatprep.subr.mxu0 0.0
    %4652 = vmatpush1.msra.mxu0 0.0
    %4653 = vmatprep.subr.mxu0 0.0
    %4654 = vmatpush1.msra.mxu0 0.0
    %4655 = vmatprep.subr.mxu0 0.0
    %4656 = vmatpush1.msra.mxu0 0.0
    %4657 = vmatprep.subr.mxu0 0.0
    %4658 = vmatpush1.msra.mxu0 0.0
    %4659 = vmatprep.subr.mxu0 0.0
    %4660 = vmatpush1.msra.mxu0 0.0
    %4661 = vmatprep.subr.mxu0 0.0
    %4662 = vmatpush1.msra.mxu0 0.0
    %4663 = vmatprep.subr.mxu0 0.0
    %4664 = vmatpush1.msra.mxu0 0.0
    %4665 = vmatprep.subr.mxu0 0.0
    %4666 = vmatpush1.msra.mxu0 0.0
    %4667 = vmatprep.subr.mxu0 0.0
    %4668 = vmatpush1.msra.mxu0 0.0
    %4669 = vmatprep.subr.mxu0 0.0
    %4670 = vmatpush1.msra.mxu0 0.0
    %4671 = vmatprep.subr.mxu0 0.0
    %4672 = vmatpush1.msra.mxu0 0.0
    %4673 = vmatprep.subr.mxu0 0.0
    %4674 = vmatpush1.msra.mxu0 0.0
    %4675 = vmatprep.subr.mxu0 0.0
    %4676 = vmatpush1.msra.mxu0 0.0
    %4677 = vmatprep.subr.mxu0 0.0
    %4678 = vmatpush1.msra.mxu0 0.0
    %4679 = vmatprep.subr.mxu0 0.0
    %4680 = vmatpush1.msra.mxu0 0.0
    %4681 = vmatprep.subr.mxu0 0.0
    %4682 = vmatpush1.msra.mxu0 0.0
    %4683 = vmatprep.subr.mxu0 0.0
    %4684 = vmatpush1.msra.mxu0 0.0
    %4685 = vmatprep.subr.mxu0 0.0
    %4686 = vmatpush1.msra.mxu0 0.0
    %4687 = vmatprep.subr.mxu0 0.0
    %4688 = vmatpush1.msra.mxu0 0.0
    %4689 = vmatprep.subr.mxu0 0.0
    %4690 = vmatpush1.msra.mxu0 0.0
    %4691 = vmatprep.subr.mxu0 0.0
    %4692 = vmatpush1.msra.mxu0 0.0
    %4693 = vmatprep.mubr.f32.mxu0 0.0
    %v4694 = vand.u32 %v4230, 4294901760
    %4695 = vmatmul.mubr.f32.gmra.mrb[0].mxu0 %v4694
    %v4696 = vpop.f32.mrb[0].mxu0
    %v4697 = vadd.f32 %v4600, %v4696
    %v4698 = vpop.f32.mrb[0].mxu0
    %4699 = vmatprep.mubr.f32.mxu0 0.0
    %v4700 = vand.u32 %v4233, 4294901760
    %4701 = vmatmul.mubr.f32.gmra.mrb[0].mxu0 %v4700
    %v4702 = vpop.f32.mrb[0].mxu0
    %v4703 = vadd.f32 %v4608, %v4702
    %v4704 = vpop.f32.mrb[0].mxu0
    %4705 = vdwg.mxu0
    %4706 = vmatprep.subr.mxu0 0.0
    %v4707 = vand.u32 %v43, 4294901760
    %4708 = vmatpush1.msra.mxu0 %v4707
    %4709 = vmatprep.subr.mxu0 0.0
    %v4710 = vand.u32 %v44, 4294901760
    %4711 = vmatpush1.msra.mxu0 %v4710
    %4712 = vmatprep.subr.mxu0 0.0
    %v4713 = vand.u32 %v45, 4294901760
    %4714 = vmatpush1.msra.mxu0 %v4713
    %4715 = vmatprep.subr.mxu0 0.0
    %v4716 = vand.u32 %v46, 4294901760
    %4717 = vmatpush1.msra.mxu0 %v4716
    %4718 = vmatprep.subr.mxu0 0.0
    %v4719 = vand.u32 %v4225, 4294901760
    %4720 = vmatpush1.msra.mxu0 %v4719
    %4721 = vmatprep.subr.mxu0 0.0
    %v4722 = vand.u32 %v4226, 4294901760
    %4723 = vmatpush1.msra.mxu0 %v4722
    %4724 = vmatprep.subr.mxu0 0.0
    %4725 = vmatpush1.msra.mxu0 0.0
    %4726 = vmatprep.subr.mxu0 0.0
    %4727 = vmatpush1.msra.mxu0 0.0
    %4728 = vmatprep.subr.mxu0 0.0
    %4729 = vmatpush1.msra.mxu0 0.0
    %4730 = vmatprep.subr.mxu0 0.0
    %4731 = vmatpush1.msra.mxu0 0.0
    %4732 = vmatprep.subr.mxu0 0.0
    %4733 = vmatpush1.msra.mxu0 0.0
    %4734 = vmatprep.subr.mxu0 0.0
    %4735 = vmatpush1.msra.mxu0 0.0
    %4736 = vmatprep.subr.mxu0 0.0
    %4737 = vmatpush1.msra.mxu0 0.0
    %4738 = vmatprep.subr.mxu0 0.0
    %4739 = vmatpush1.msra.mxu0 0.0
    %4740 = vmatprep.subr.mxu0 0.0
    %4741 = vmatpush1.msra.mxu0 0.0
    %4742 = vmatprep.subr.mxu0 0.0
    %4743 = vmatpush1.msra.mxu0 0.0
    %4744 = vmatprep.subr.mxu0 0.0
    %4745 = vmatpush1.msra.mxu0 0.0
    %4746 = vmatprep.subr.mxu0 0.0
    %4747 = vmatpush1.msra.mxu0 0.0
    %4748 = vmatprep.subr.mxu0 0.0
    %4749 = vmatpush1.msra.mxu0 0.0
    %4750 = vmatprep.subr.mxu0 0.0
    %4751 = vmatpush1.msra.mxu0 0.0
    %4752 = vmatprep.subr.mxu0 0.0
    %4753 = vmatpush1.msra.mxu0 0.0
    %4754 = vmatprep.subr.mxu0 0.0
    %4755 = vmatpush1.msra.mxu0 0.0
    %4756 = vmatprep.subr.mxu0 0.0
    %4757 = vmatpush1.msra.mxu0 0.0
    %4758 = vmatprep.subr.mxu0 0.0
    %4759 = vmatpush1.msra.mxu0 0.0
    %4760 = vmatprep.subr.mxu0 0.0
    %4761 = vmatpush1.msra.mxu0 0.0
    %4762 = vmatprep.subr.mxu0 0.0
    %4763 = vmatpush1.msra.mxu0 0.0
    %4764 = vmatprep.subr.mxu0 0.0
    %4765 = vmatpush1.msra.mxu0 0.0
    %4766 = vmatprep.subr.mxu0 0.0
    %4767 = vmatpush1.msra.mxu0 0.0
    %4768 = vmatprep.subr.mxu0 0.0
    %4769 = vmatpush1.msra.mxu0 0.0
    %4770 = vmatprep.subr.mxu0 0.0
    %4771 = vmatpush1.msra.mxu0 0.0
    %4772 = vmatprep.subr.mxu0 0.0
    %4773 = vmatpush1.msra.mxu0 0.0
    %4774 = vmatprep.subr.mxu0 0.0
    %4775 = vmatpush1.msra.mxu0 0.0
    %4776 = vmatprep.mubr.f32.mxu0 0.0
    %v4777 = vand.u32 %v4230, 4294901760
    %4778 = vmatmul.mubr.f32.gmra.mrb[0].mxu0 %v4777
    %v4779 = vpop.f32.mrb[0].mxu0
    %v4780 = vadd.f32 %v4697, %v4779
    %v4781 = vpop.f32.mrb[0].mxu0
    %4782 = vmatprep.mubr.f32.mxu0 0.0
    %v4783 = vand.u32 %v4233, 4294901760
    %4784 = vmatmul.mubr.f32.gmra.mrb[0].mxu0 %v4783
    %v4785 = vpop.f32.mrb[0].mxu0
    %v4786 = vadd.f32 %v4703, %v4785
    %v4787 = vpop.f32.mrb[0].mxu0
    %4788 = vdwg.mxu0
    %v4789 = vmul.f32 %v4225, %v4780
    %v4790 = vmul.f32 %v4226, %v4786
    %v4791 = vsel %vm61, %v4789, 0.0
    %4792 = vadd.xlane.f32.xlu0 %v4791
    %v4793 = vpop.xlane.xlu0 %4792
    %v4794 = vsel %vm61, %v4790, 0.0
    %4795 = vadd.xlane.f32.xlu0 %v4794
    %v4796 = vpop.xlane.xlu0 %4795
    %v4797 = vmul.f32 %v4793, %v4225
    %v4798 = vmul.f32 %v4796, %v4226
    %v4799 = vsub.f32 %v4780, %v4797
    %v4800 = vsub.f32 %v4786, %v4798
    %v4801 = vmul.f32 %v58, %v4799
    %v4802 = vmul.f32 %v58, %v4800
    %v4803 = vadd.f32 %v4225, %v4801
    %v4804 = vadd.f32 %v4226, %v4802
    %v4805 = vmul.f32 %v4803, %v4803
    %v4806 = vmul.f32 %v4804, %v4804
    %v4807 = vsel %vm61, %v4805, 0.0
    %4808 = vadd.xlane.f32.xlu0 %v4807
    %v4809 = vpop.xlane.xlu0 %4808
    %v4810 = vsel %vm61, %v4806, 0.0
    %4811 = vadd.xlane.f32.xlu0 %v4810
    %v4812 = vpop.xlane.xlu0 %4811
    %v4813 = vmax.f32 %v4809, 1e-24
    %v4814 = vmax.f32 %v4812, 1e-24
    %v4815 = vrsqrt.pop %v4813
    %v4816 = vrsqrt.pop %v4814
    %v4817 = vmul.f32 %v4803, %v4815
    %v4818 = vmul.f32 %v4804, %v4816
    %v4819 = vsel %vm61, %v4817, %v77
    %v4820 = vsel %vm61, %v4818, %v79
    %v4822 = vsel %vm84, %v4819, 0
    %v4825 = vsel %vm84, %v4820, 0
    %4827 = vmatprep.subr.mxu0 0.0
    %v4828 = vand.u32 %v43, 4294901760
    %4829 = vmatpush1.msra.mxu0 %v4828
    %4830 = vmatprep.subr.mxu0 0.0
    %v4831 = vand.u32 %v44, 4294901760
    %4832 = vmatpush1.msra.mxu0 %v4831
    %4833 = vmatprep.subr.mxu0 0.0
    %v4834 = vand.u32 %v45, 4294901760
    %4835 = vmatpush1.msra.mxu0 %v4834
    %4836 = vmatprep.subr.mxu0 0.0
    %v4837 = vand.u32 %v46, 4294901760
    %4838 = vmatpush1.msra.mxu0 %v4837
    %4839 = vmatprep.subr.mxu0 0.0
    %v4840 = vand.u32 %v4817, 4294901760
    %4841 = vmatpush1.msra.mxu0 %v4840
    %4842 = vmatprep.subr.mxu0 0.0
    %v4843 = vand.u32 %v4818, 4294901760
    %4844 = vmatpush1.msra.mxu0 %v4843
    %4845 = vmatprep.subr.mxu0 0.0
    %4846 = vmatpush1.msra.mxu0 0.0
    %4847 = vmatprep.subr.mxu0 0.0
    %4848 = vmatpush1.msra.mxu0 0.0
    %4849 = vmatprep.subr.mxu0 0.0
    %4850 = vmatpush1.msra.mxu0 0.0
    %4851 = vmatprep.subr.mxu0 0.0
    %4852 = vmatpush1.msra.mxu0 0.0
    %4853 = vmatprep.subr.mxu0 0.0
    %4854 = vmatpush1.msra.mxu0 0.0
    %4855 = vmatprep.subr.mxu0 0.0
    %4856 = vmatpush1.msra.mxu0 0.0
    %4857 = vmatprep.subr.mxu0 0.0
    %4858 = vmatpush1.msra.mxu0 0.0
    %4859 = vmatprep.subr.mxu0 0.0
    %4860 = vmatpush1.msra.mxu0 0.0
    %4861 = vmatprep.subr.mxu0 0.0
    %4862 = vmatpush1.msra.mxu0 0.0
    %4863 = vmatprep.subr.mxu0 0.0
    %4864 = vmatpush1.msra.mxu0 0.0
    %4865 = vmatprep.subr.mxu0 0.0
    %4866 = vmatpush1.msra.mxu0 0.0
    %4867 = vmatprep.subr.mxu0 0.0
    %4868 = vmatpush1.msra.mxu0 0.0
    %4869 = vmatprep.subr.mxu0 0.0
    %4870 = vmatpush1.msra.mxu0 0.0
    %4871 = vmatprep.subr.mxu0 0.0
    %4872 = vmatpush1.msra.mxu0 0.0
    %4873 = vmatprep.subr.mxu0 0.0
    %4874 = vmatpush1.msra.mxu0 0.0
    %4875 = vmatprep.subr.mxu0 0.0
    %4876 = vmatpush1.msra.mxu0 0.0
    %4877 = vmatprep.subr.mxu0 0.0
    %4878 = vmatpush1.msra.mxu0 0.0
    %4879 = vmatprep.subr.mxu0 0.0
    %4880 = vmatpush1.msra.mxu0 0.0
    %4881 = vmatprep.subr.mxu0 0.0
    %4882 = vmatpush1.msra.mxu0 0.0
    %4883 = vmatprep.subr.mxu0 0.0
    %4884 = vmatpush1.msra.mxu0 0.0
    %4885 = vmatprep.subr.mxu0 0.0
    %4886 = vmatpush1.msra.mxu0 0.0
    %4887 = vmatprep.subr.mxu0 0.0
    %4888 = vmatpush1.msra.mxu0 0.0
    %4889 = vmatprep.subr.mxu0 0.0
    %4890 = vmatpush1.msra.mxu0 0.0
    %4891 = vmatprep.subr.mxu0 0.0
    %4892 = vmatpush1.msra.mxu0 0.0
    %4893 = vmatprep.subr.mxu0 0.0
    %4894 = vmatpush1.msra.mxu0 0.0
    %4895 = vmatprep.subr.mxu0 0.0
    %4896 = vmatpush1.msra.mxu0 0.0
    %4897 = vmatprep.mubr.f32.mxu0 0.0
    %v4898 = vand.u32 %v4822, 4294901760
    %v4899 = vsub.f32 %v4822, %v4898
    %v4900 = vand.u32 %v4899, 4294901760
    %v4901 = vsub.f32 %v4899, %v4900
    %v4902 = vand.u32 %v4901, 4294901760
    %4903 = vmatmul.mubr.f32.gmra.mrb[0].mxu0 %v4902
    %v4904 = vpop.f32.mrb[0].mxu0
    %v4905 = vadd.f32 %v47, %v4904
    %v4906 = vpop.f32.mrb[0].mxu0
    %4907 = vmatprep.mubr.f32.mxu0 0.0
    %v4908 = vand.u32 %v4825, 4294901760
    %v4909 = vsub.f32 %v4825, %v4908
    %v4910 = vand.u32 %v4909, 4294901760
    %v4911 = vsub.f32 %v4909, %v4910
    %v4912 = vand.u32 %v4911, 4294901760
    %4913 = vmatmul.mubr.f32.gmra.mrb[0].mxu0 %v4912
    %v4914 = vpop.f32.mrb[0].mxu0
    %v4915 = vadd.f32 %v47, %v4914
    %v4916 = vpop.f32.mrb[0].mxu0
    %4917 = vdwg.mxu0
    %4918 = vmatprep.subr.mxu0 0.0
    %v4919 = vand.u32 %v43, 4294901760
    %v4920 = vsub.f32 %v43, %v4919
    %v4921 = vand.u32 %v4920, 4294901760
    %v4922 = vsub.f32 %v4920, %v4921
    %v4923 = vand.u32 %v4922, 4294901760
    %4924 = vmatpush1.msra.mxu0 %v4923
    %4925 = vmatprep.subr.mxu0 0.0
    %v4926 = vand.u32 %v44, 4294901760
    %v4927 = vsub.f32 %v44, %v4926
    %v4928 = vand.u32 %v4927, 4294901760
    %v4929 = vsub.f32 %v4927, %v4928
    %v4930 = vand.u32 %v4929, 4294901760
    %4931 = vmatpush1.msra.mxu0 %v4930
    %4932 = vmatprep.subr.mxu0 0.0
    %v4933 = vand.u32 %v45, 4294901760
    %v4934 = vsub.f32 %v45, %v4933
    %v4935 = vand.u32 %v4934, 4294901760
    %v4936 = vsub.f32 %v4934, %v4935
    %v4937 = vand.u32 %v4936, 4294901760
    %4938 = vmatpush1.msra.mxu0 %v4937
    %4939 = vmatprep.subr.mxu0 0.0
    %v4940 = vand.u32 %v46, 4294901760
    %v4941 = vsub.f32 %v46, %v4940
    %v4942 = vand.u32 %v4941, 4294901760
    %v4943 = vsub.f32 %v4941, %v4942
    %v4944 = vand.u32 %v4943, 4294901760
    %4945 = vmatpush1.msra.mxu0 %v4944
    %4946 = vmatprep.subr.mxu0 0.0
    %v4947 = vand.u32 %v4817, 4294901760
    %v4948 = vsub.f32 %v4817, %v4947
    %v4949 = vand.u32 %v4948, 4294901760
    %v4950 = vsub.f32 %v4948, %v4949
    %v4951 = vand.u32 %v4950, 4294901760
    %4952 = vmatpush1.msra.mxu0 %v4951
    %4953 = vmatprep.subr.mxu0 0.0
    %v4954 = vand.u32 %v4818, 4294901760
    %v4955 = vsub.f32 %v4818, %v4954
    %v4956 = vand.u32 %v4955, 4294901760
    %v4957 = vsub.f32 %v4955, %v4956
    %v4958 = vand.u32 %v4957, 4294901760
    %4959 = vmatpush1.msra.mxu0 %v4958
    %4960 = vmatprep.subr.mxu0 0.0
    %4961 = vmatpush1.msra.mxu0 0.0
    %4962 = vmatprep.subr.mxu0 0.0
    %4963 = vmatpush1.msra.mxu0 0.0
    %4964 = vmatprep.subr.mxu0 0.0
    %4965 = vmatpush1.msra.mxu0 0.0
    %4966 = vmatprep.subr.mxu0 0.0
    %4967 = vmatpush1.msra.mxu0 0.0
    %4968 = vmatprep.subr.mxu0 0.0
    %4969 = vmatpush1.msra.mxu0 0.0
    %4970 = vmatprep.subr.mxu0 0.0
    %4971 = vmatpush1.msra.mxu0 0.0
    %4972 = vmatprep.subr.mxu0 0.0
    %4973 = vmatpush1.msra.mxu0 0.0
    %4974 = vmatprep.subr.mxu0 0.0
    %4975 = vmatpush1.msra.mxu0 0.0
    %4976 = vmatprep.subr.mxu0 0.0
    %4977 = vmatpush1.msra.mxu0 0.0
    %4978 = vmatprep.subr.mxu0 0.0
    %4979 = vmatpush1.msra.mxu0 0.0
    %4980 = vmatprep.subr.mxu0 0.0
    %4981 = vmatpush1.msra.mxu0 0.0
    %4982 = vmatprep.subr.mxu0 0.0
    %4983 = vmatpush1.msra.mxu0 0.0
    %4984 = vmatprep.subr.mxu0 0.0
    %4985 = vmatpush1.msra.mxu0 0.0
    %4986 = vmatprep.subr.mxu0 0.0
    %4987 = vmatpush1.msra.mxu0 0.0
    %4988 = vmatprep.subr.mxu0 0.0
    %4989 = vmatpush1.msra.mxu0 0.0
    %4990 = vmatprep.subr.mxu0 0.0
    %4991 = vmatpush1.msra.mxu0 0.0
    %4992 = vmatprep.subr.mxu0 0.0
    %4993 = vmatpush1.msra.mxu0 0.0
    %4994 = vmatprep.subr.mxu0 0.0
    %4995 = vmatpush1.msra.mxu0 0.0
    %4996 = vmatprep.subr.mxu0 0.0
    %4997 = vmatpush1.msra.mxu0 0.0
    %4998 = vmatprep.subr.mxu0 0.0
    %4999 = vmatpush1.msra.mxu0 0.0
    %5000 = vmatprep.subr.mxu0 0.0
    %5001 = vmatpush1.msra.mxu0 0.0
    %5002 = vmatprep.subr.mxu0 0.0
    %5003 = vmatpush1.msra.mxu0 0.0
    %5004 = vmatprep.subr.mxu0 0.0
    %5005 = vmatpush1.msra.mxu0 0.0
    %5006 = vmatprep.subr.mxu0 0.0
    %5007 = vmatpush1.msra.mxu0 0.0
    %5008 = vmatprep.subr.mxu0 0.0
    %5009 = vmatpush1.msra.mxu0 0.0
    %5010 = vmatprep.subr.mxu0 0.0
    %5011 = vmatpush1.msra.mxu0 0.0
    %5012 = vmatprep.mubr.f32.mxu0 0.0
    %v5013 = vand.u32 %v4822, 4294901760
    %5014 = vmatmul.mubr.f32.gmra.mrb[0].mxu0 %v5013
    %v5015 = vpop.f32.mrb[0].mxu0
    %v5016 = vadd.f32 %v4905, %v5015
    %v5017 = vpop.f32.mrb[0].mxu0
    %5018 = vmatprep.mubr.f32.mxu0 0.0
    %v5019 = vand.u32 %v4825, 4294901760
    %5020 = vmatmul.mubr.f32.gmra.mrb[0].mxu0 %v5019
    %v5021 = vpop.f32.mrb[0].mxu0
    %v5022 = vadd.f32 %v4915, %v5021
    %v5023 = vpop.f32.mrb[0].mxu0
    %5024 = vdwg.mxu0
    %5025 = vmatprep.subr.mxu0 0.0
    %v5026 = vand.u32 %v43, 4294901760
    %v5027 = vsub.f32 %v43, %v5026
    %5028 = vmatpush1.msra.mxu0 %v5027
    %5029 = vmatprep.subr.mxu0 0.0
    %v5030 = vand.u32 %v44, 4294901760
    %v5031 = vsub.f32 %v44, %v5030
    %5032 = vmatpush1.msra.mxu0 %v5031
    %5033 = vmatprep.subr.mxu0 0.0
    %v5034 = vand.u32 %v45, 4294901760
    %v5035 = vsub.f32 %v45, %v5034
    %5036 = vmatpush1.msra.mxu0 %v5035
    %5037 = vmatprep.subr.mxu0 0.0
    %v5038 = vand.u32 %v46, 4294901760
    %v5039 = vsub.f32 %v46, %v5038
    %5040 = vmatpush1.msra.mxu0 %v5039
    %5041 = vmatprep.subr.mxu0 0.0
    %v5042 = vand.u32 %v4817, 4294901760
    %v5043 = vsub.f32 %v4817, %v5042
    %5044 = vmatpush1.msra.mxu0 %v5043
    %5045 = vmatprep.subr.mxu0 0.0
    %v5046 = vand.u32 %v4818, 4294901760
    %v5047 = vsub.f32 %v4818, %v5046
    %5048 = vmatpush1.msra.mxu0 %v5047
    %5049 = vmatprep.subr.mxu0 0.0
    %5050 = vmatpush1.msra.mxu0 0.0
    %5051 = vmatprep.subr.mxu0 0.0
    %5052 = vmatpush1.msra.mxu0 0.0
    %5053 = vmatprep.subr.mxu0 0.0
    %5054 = vmatpush1.msra.mxu0 0.0
    %5055 = vmatprep.subr.mxu0 0.0
    %5056 = vmatpush1.msra.mxu0 0.0
    %5057 = vmatprep.subr.mxu0 0.0
    %5058 = vmatpush1.msra.mxu0 0.0
    %5059 = vmatprep.subr.mxu0 0.0
    %5060 = vmatpush1.msra.mxu0 0.0
    %5061 = vmatprep.subr.mxu0 0.0
    %5062 = vmatpush1.msra.mxu0 0.0
    %5063 = vmatprep.subr.mxu0 0.0
    %5064 = vmatpush1.msra.mxu0 0.0
    %5065 = vmatprep.subr.mxu0 0.0
    %5066 = vmatpush1.msra.mxu0 0.0
    %5067 = vmatprep.subr.mxu0 0.0
    %5068 = vmatpush1.msra.mxu0 0.0
    %5069 = vmatprep.subr.mxu0 0.0
    %5070 = vmatpush1.msra.mxu0 0.0
    %5071 = vmatprep.subr.mxu0 0.0
    %5072 = vmatpush1.msra.mxu0 0.0
    %5073 = vmatprep.subr.mxu0 0.0
    %5074 = vmatpush1.msra.mxu0 0.0
    %5075 = vmatprep.subr.mxu0 0.0
    %5076 = vmatpush1.msra.mxu0 0.0
    %5077 = vmatprep.subr.mxu0 0.0
    %5078 = vmatpush1.msra.mxu0 0.0
    %5079 = vmatprep.subr.mxu0 0.0
    %5080 = vmatpush1.msra.mxu0 0.0
    %5081 = vmatprep.subr.mxu0 0.0
    %5082 = vmatpush1.msra.mxu0 0.0
    %5083 = vmatprep.subr.mxu0 0.0
    %5084 = vmatpush1.msra.mxu0 0.0
    %5085 = vmatprep.subr.mxu0 0.0
    %5086 = vmatpush1.msra.mxu0 0.0
    %5087 = vmatprep.subr.mxu0 0.0
    %5088 = vmatpush1.msra.mxu0 0.0
    %5089 = vmatprep.subr.mxu0 0.0
    %5090 = vmatpush1.msra.mxu0 0.0
    %5091 = vmatprep.subr.mxu0 0.0
    %5092 = vmatpush1.msra.mxu0 0.0
    %5093 = vmatprep.subr.mxu0 0.0
    %5094 = vmatpush1.msra.mxu0 0.0
    %5095 = vmatprep.subr.mxu0 0.0
    %5096 = vmatpush1.msra.mxu0 0.0
    %5097 = vmatprep.subr.mxu0 0.0
    %5098 = vmatpush1.msra.mxu0 0.0
    %5099 = vmatprep.subr.mxu0 0.0
    %5100 = vmatpush1.msra.mxu0 0.0
    %5101 = vmatprep.mubr.f32.mxu0 0.0
    %v5102 = vand.u32 %v4822, 4294901760
    %v5103 = vsub.f32 %v4822, %v5102
    %5104 = vmatmul.mubr.f32.gmra.mrb[0].mxu0 %v5103
    %v5105 = vpop.f32.mrb[0].mxu0
    %v5106 = vadd.f32 %v5016, %v5105
    %v5107 = vpop.f32.mrb[0].mxu0
    %5108 = vmatprep.mubr.f32.mxu0 0.0
    %v5109 = vand.u32 %v4825, 4294901760
    %v5110 = vsub.f32 %v4825, %v5109
    %5111 = vmatmul.mubr.f32.gmra.mrb[0].mxu0 %v5110
    %v5112 = vpop.f32.mrb[0].mxu0
    %v5113 = vadd.f32 %v5022, %v5112
    %v5114 = vpop.f32.mrb[0].mxu0
    %5115 = vdwg.mxu0
    %5116 = vmatprep.subr.mxu0 0.0
    %v5117 = vand.u32 %v43, 4294901760
    %5118 = vmatpush1.msra.mxu0 %v5117
    %5119 = vmatprep.subr.mxu0 0.0
    %v5120 = vand.u32 %v44, 4294901760
    %5121 = vmatpush1.msra.mxu0 %v5120
    %5122 = vmatprep.subr.mxu0 0.0
    %v5123 = vand.u32 %v45, 4294901760
    %5124 = vmatpush1.msra.mxu0 %v5123
    %5125 = vmatprep.subr.mxu0 0.0
    %v5126 = vand.u32 %v46, 4294901760
    %5127 = vmatpush1.msra.mxu0 %v5126
    %5128 = vmatprep.subr.mxu0 0.0
    %v5129 = vand.u32 %v4817, 4294901760
    %5130 = vmatpush1.msra.mxu0 %v5129
    %5131 = vmatprep.subr.mxu0 0.0
    %v5132 = vand.u32 %v4818, 4294901760
    %5133 = vmatpush1.msra.mxu0 %v5132
    %5134 = vmatprep.subr.mxu0 0.0
    %5135 = vmatpush1.msra.mxu0 0.0
    %5136 = vmatprep.subr.mxu0 0.0
    %5137 = vmatpush1.msra.mxu0 0.0
    %5138 = vmatprep.subr.mxu0 0.0
    %5139 = vmatpush1.msra.mxu0 0.0
    %5140 = vmatprep.subr.mxu0 0.0
    %5141 = vmatpush1.msra.mxu0 0.0
    %5142 = vmatprep.subr.mxu0 0.0
    %5143 = vmatpush1.msra.mxu0 0.0
    %5144 = vmatprep.subr.mxu0 0.0
    %5145 = vmatpush1.msra.mxu0 0.0
    %5146 = vmatprep.subr.mxu0 0.0
    %5147 = vmatpush1.msra.mxu0 0.0
    %5148 = vmatprep.subr.mxu0 0.0
    %5149 = vmatpush1.msra.mxu0 0.0
    %5150 = vmatprep.subr.mxu0 0.0
    %5151 = vmatpush1.msra.mxu0 0.0
    %5152 = vmatprep.subr.mxu0 0.0
    %5153 = vmatpush1.msra.mxu0 0.0
    %5154 = vmatprep.subr.mxu0 0.0
    %5155 = vmatpush1.msra.mxu0 0.0
    %5156 = vmatprep.subr.mxu0 0.0
    %5157 = vmatpush1.msra.mxu0 0.0
    %5158 = vmatprep.subr.mxu0 0.0
    %5159 = vmatpush1.msra.mxu0 0.0
    %5160 = vmatprep.subr.mxu0 0.0
    %5161 = vmatpush1.msra.mxu0 0.0
    %5162 = vmatprep.subr.mxu0 0.0
    %5163 = vmatpush1.msra.mxu0 0.0
    %5164 = vmatprep.subr.mxu0 0.0
    %5165 = vmatpush1.msra.mxu0 0.0
    %5166 = vmatprep.subr.mxu0 0.0
    %5167 = vmatpush1.msra.mxu0 0.0
    %5168 = vmatprep.subr.mxu0 0.0
    %5169 = vmatpush1.msra.mxu0 0.0
    %5170 = vmatprep.subr.mxu0 0.0
    %5171 = vmatpush1.msra.mxu0 0.0
    %5172 = vmatprep.subr.mxu0 0.0
    %5173 = vmatpush1.msra.mxu0 0.0
    %5174 = vmatprep.subr.mxu0 0.0
    %5175 = vmatpush1.msra.mxu0 0.0
    %5176 = vmatprep.subr.mxu0 0.0
    %5177 = vmatpush1.msra.mxu0 0.0
    %5178 = vmatprep.subr.mxu0 0.0
    %5179 = vmatpush1.msra.mxu0 0.0
    %5180 = vmatprep.subr.mxu0 0.0
    %5181 = vmatpush1.msra.mxu0 0.0
    %5182 = vmatprep.subr.mxu0 0.0
    %5183 = vmatpush1.msra.mxu0 0.0
    %5184 = vmatprep.subr.mxu0 0.0
    %5185 = vmatpush1.msra.mxu0 0.0
    %5186 = vmatprep.mubr.f32.mxu0 0.0
    %v5187 = vand.u32 %v4822, 4294901760
    %v5188 = vsub.f32 %v4822, %v5187
    %v5189 = vand.u32 %v5188, 4294901760
    %5190 = vmatmul.mubr.f32.gmra.mrb[0].mxu0 %v5189
    %v5191 = vpop.f32.mrb[0].mxu0
    %v5192 = vadd.f32 %v5106, %v5191
    %v5193 = vpop.f32.mrb[0].mxu0
    %5194 = vmatprep.mubr.f32.mxu0 0.0
    %v5195 = vand.u32 %v4825, 4294901760
    %v5196 = vsub.f32 %v4825, %v5195
    %v5197 = vand.u32 %v5196, 4294901760
    %5198 = vmatmul.mubr.f32.gmra.mrb[0].mxu0 %v5197
    %v5199 = vpop.f32.mrb[0].mxu0
    %v5200 = vadd.f32 %v5113, %v5199
    %v5201 = vpop.f32.mrb[0].mxu0
    %5202 = vdwg.mxu0
    %5203 = vmatprep.subr.mxu0 0.0
    %v5204 = vand.u32 %v43, 4294901760
    %v5205 = vsub.f32 %v43, %v5204
    %v5206 = vand.u32 %v5205, 4294901760
    %5207 = vmatpush1.msra.mxu0 %v5206
    %5208 = vmatprep.subr.mxu0 0.0
    %v5209 = vand.u32 %v44, 4294901760
    %v5210 = vsub.f32 %v44, %v5209
    %v5211 = vand.u32 %v5210, 4294901760
    %5212 = vmatpush1.msra.mxu0 %v5211
    %5213 = vmatprep.subr.mxu0 0.0
    %v5214 = vand.u32 %v45, 4294901760
    %v5215 = vsub.f32 %v45, %v5214
    %v5216 = vand.u32 %v5215, 4294901760
    %5217 = vmatpush1.msra.mxu0 %v5216
    %5218 = vmatprep.subr.mxu0 0.0
    %v5219 = vand.u32 %v46, 4294901760
    %v5220 = vsub.f32 %v46, %v5219
    %v5221 = vand.u32 %v5220, 4294901760
    %5222 = vmatpush1.msra.mxu0 %v5221
    %5223 = vmatprep.subr.mxu0 0.0
    %v5224 = vand.u32 %v4817, 4294901760
    %v5225 = vsub.f32 %v4817, %v5224
    %v5226 = vand.u32 %v5225, 4294901760
    %5227 = vmatpush1.msra.mxu0 %v5226
    %5228 = vmatprep.subr.mxu0 0.0
    %v5229 = vand.u32 %v4818, 4294901760
    %v5230 = vsub.f32 %v4818, %v5229
    %v5231 = vand.u32 %v5230, 4294901760
    %5232 = vmatpush1.msra.mxu0 %v5231
    %5233 = vmatprep.subr.mxu0 0.0
    %5234 = vmatpush1.msra.mxu0 0.0
    %5235 = vmatprep.subr.mxu0 0.0
    %5236 = vmatpush1.msra.mxu0 0.0
    %5237 = vmatprep.subr.mxu0 0.0
    %5238 = vmatpush1.msra.mxu0 0.0
    %5239 = vmatprep.subr.mxu0 0.0
    %5240 = vmatpush1.msra.mxu0 0.0
    %5241 = vmatprep.subr.mxu0 0.0
    %5242 = vmatpush1.msra.mxu0 0.0
    %5243 = vmatprep.subr.mxu0 0.0
    %5244 = vmatpush1.msra.mxu0 0.0
    %5245 = vmatprep.subr.mxu0 0.0
    %5246 = vmatpush1.msra.mxu0 0.0
    %5247 = vmatprep.subr.mxu0 0.0
    %5248 = vmatpush1.msra.mxu0 0.0
    %5249 = vmatprep.subr.mxu0 0.0
    %5250 = vmatpush1.msra.mxu0 0.0
    %5251 = vmatprep.subr.mxu0 0.0
    %5252 = vmatpush1.msra.mxu0 0.0
    %5253 = vmatprep.subr.mxu0 0.0
    %5254 = vmatpush1.msra.mxu0 0.0
    %5255 = vmatprep.subr.mxu0 0.0
    %5256 = vmatpush1.msra.mxu0 0.0
    %5257 = vmatprep.subr.mxu0 0.0
    %5258 = vmatpush1.msra.mxu0 0.0
    %5259 = vmatprep.subr.mxu0 0.0
    %5260 = vmatpush1.msra.mxu0 0.0
    %5261 = vmatprep.subr.mxu0 0.0
    %5262 = vmatpush1.msra.mxu0 0.0
    %5263 = vmatprep.subr.mxu0 0.0
    %5264 = vmatpush1.msra.mxu0 0.0
    %5265 = vmatprep.subr.mxu0 0.0
    %5266 = vmatpush1.msra.mxu0 0.0
    %5267 = vmatprep.subr.mxu0 0.0
    %5268 = vmatpush1.msra.mxu0 0.0
    %5269 = vmatprep.subr.mxu0 0.0
    %5270 = vmatpush1.msra.mxu0 0.0
    %5271 = vmatprep.subr.mxu0 0.0
    %5272 = vmatpush1.msra.mxu0 0.0
    %5273 = vmatprep.subr.mxu0 0.0
    %5274 = vmatpush1.msra.mxu0 0.0
    %5275 = vmatprep.subr.mxu0 0.0
    %5276 = vmatpush1.msra.mxu0 0.0
    %5277 = vmatprep.subr.mxu0 0.0
    %5278 = vmatpush1.msra.mxu0 0.0
    %5279 = vmatprep.subr.mxu0 0.0
    %5280 = vmatpush1.msra.mxu0 0.0
    %5281 = vmatprep.subr.mxu0 0.0
    %5282 = vmatpush1.msra.mxu0 0.0
    %5283 = vmatprep.subr.mxu0 0.0
    %5284 = vmatpush1.msra.mxu0 0.0
    %5285 = vmatprep.mubr.f32.mxu0 0.0
    %v5286 = vand.u32 %v4822, 4294901760
    %5287 = vmatmul.mubr.f32.gmra.mrb[0].mxu0 %v5286
    %v5288 = vpop.f32.mrb[0].mxu0
    %v5289 = vadd.f32 %v5192, %v5288
    %v5290 = vpop.f32.mrb[0].mxu0
    %5291 = vmatprep.mubr.f32.mxu0 0.0
    %v5292 = vand.u32 %v4825, 4294901760
    %5293 = vmatmul.mubr.f32.gmra.mrb[0].mxu0 %v5292
    %v5294 = vpop.f32.mrb[0].mxu0
    %v5295 = vadd.f32 %v5200, %v5294
    %v5296 = vpop.f32.mrb[0].mxu0
    %5297 = vdwg.mxu0
    %5298 = vmatprep.subr.mxu0 0.0
    %v5299 = vand.u32 %v43, 4294901760
    %5300 = vmatpush1.msra.mxu0 %v5299
    %5301 = vmatprep.subr.mxu0 0.0
    %v5302 = vand.u32 %v44, 4294901760
    %5303 = vmatpush1.msra.mxu0 %v5302
    %5304 = vmatprep.subr.mxu0 0.0
    %v5305 = vand.u32 %v45, 4294901760
    %5306 = vmatpush1.msra.mxu0 %v5305
    %5307 = vmatprep.subr.mxu0 0.0
    %v5308 = vand.u32 %v46, 4294901760
    %5309 = vmatpush1.msra.mxu0 %v5308
    %5310 = vmatprep.subr.mxu0 0.0
    %v5311 = vand.u32 %v4817, 4294901760
    %5312 = vmatpush1.msra.mxu0 %v5311
    %5313 = vmatprep.subr.mxu0 0.0
    %v5314 = vand.u32 %v4818, 4294901760
    %5315 = vmatpush1.msra.mxu0 %v5314
    %5316 = vmatprep.subr.mxu0 0.0
    %5317 = vmatpush1.msra.mxu0 0.0
    %5318 = vmatprep.subr.mxu0 0.0
    %5319 = vmatpush1.msra.mxu0 0.0
    %5320 = vmatprep.subr.mxu0 0.0
    %5321 = vmatpush1.msra.mxu0 0.0
    %5322 = vmatprep.subr.mxu0 0.0
    %5323 = vmatpush1.msra.mxu0 0.0
    %5324 = vmatprep.subr.mxu0 0.0
    %5325 = vmatpush1.msra.mxu0 0.0
    %5326 = vmatprep.subr.mxu0 0.0
    %5327 = vmatpush1.msra.mxu0 0.0
    %5328 = vmatprep.subr.mxu0 0.0
    %5329 = vmatpush1.msra.mxu0 0.0
    %5330 = vmatprep.subr.mxu0 0.0
    %5331 = vmatpush1.msra.mxu0 0.0
    %5332 = vmatprep.subr.mxu0 0.0
    %5333 = vmatpush1.msra.mxu0 0.0
    %5334 = vmatprep.subr.mxu0 0.0
    %5335 = vmatpush1.msra.mxu0 0.0
    %5336 = vmatprep.subr.mxu0 0.0
    %5337 = vmatpush1.msra.mxu0 0.0
    %5338 = vmatprep.subr.mxu0 0.0
    %5339 = vmatpush1.msra.mxu0 0.0
    %5340 = vmatprep.subr.mxu0 0.0
    %5341 = vmatpush1.msra.mxu0 0.0
    %5342 = vmatprep.subr.mxu0 0.0
    %5343 = vmatpush1.msra.mxu0 0.0
    %5344 = vmatprep.subr.mxu0 0.0
    %5345 = vmatpush1.msra.mxu0 0.0
    %5346 = vmatprep.subr.mxu0 0.0
    %5347 = vmatpush1.msra.mxu0 0.0
    %5348 = vmatprep.subr.mxu0 0.0
    %5349 = vmatpush1.msra.mxu0 0.0
    %5350 = vmatprep.subr.mxu0 0.0
    %5351 = vmatpush1.msra.mxu0 0.0
    %5352 = vmatprep.subr.mxu0 0.0
    %5353 = vmatpush1.msra.mxu0 0.0
    %5354 = vmatprep.subr.mxu0 0.0
    %5355 = vmatpush1.msra.mxu0 0.0
    %5356 = vmatprep.subr.mxu0 0.0
    %5357 = vmatpush1.msra.mxu0 0.0
    %5358 = vmatprep.subr.mxu0 0.0
    %5359 = vmatpush1.msra.mxu0 0.0
    %5360 = vmatprep.subr.mxu0 0.0
    %5361 = vmatpush1.msra.mxu0 0.0
    %5362 = vmatprep.subr.mxu0 0.0
    %5363 = vmatpush1.msra.mxu0 0.0
    %5364 = vmatprep.subr.mxu0 0.0
    %5365 = vmatpush1.msra.mxu0 0.0
    %5366 = vmatprep.subr.mxu0 0.0
    %5367 = vmatpush1.msra.mxu0 0.0
    %5368 = vmatprep.mubr.f32.mxu0 0.0
    %v5369 = vand.u32 %v4822, 4294901760
    %5370 = vmatmul.mubr.f32.gmra.mrb[0].mxu0 %v5369
    %v5371 = vpop.f32.mrb[0].mxu0
    %v5372 = vadd.f32 %v5289, %v5371
    %v5373 = vpop.f32.mrb[0].mxu0
    %5374 = vmatprep.mubr.f32.mxu0 0.0
    %v5375 = vand.u32 %v4825, 4294901760
    %5376 = vmatmul.mubr.f32.gmra.mrb[0].mxu0 %v5375
    %v5377 = vpop.f32.mrb[0].mxu0
    %v5378 = vadd.f32 %v5295, %v5377
    %v5379 = vpop.f32.mrb[0].mxu0
    %5380 = vdwg.mxu0
    %v5381 = vmul.f32 %v4817, %v5372
    %v5382 = vmul.f32 %v4818, %v5378
    %v5383 = vsel %vm61, %v5381, 0.0
    %5384 = vadd.xlane.f32.xlu0 %v5383
    %v5385 = vpop.xlane.xlu0 %5384
    %v5386 = vsel %vm61, %v5382, 0.0
    %5387 = vadd.xlane.f32.xlu0 %v5386
    %v5388 = vpop.xlane.xlu0 %5387
    %v5389 = vmul.f32 %v5385, %v4817
    %v5390 = vmul.f32 %v5388, %v4818
    %v5391 = vsub.f32 %v5372, %v5389
    %v5392 = vsub.f32 %v5378, %v5390
    %v5393 = vmul.f32 %v58, %v5391
    %v5394 = vmul.f32 %v58, %v5392
    %v5395 = vadd.f32 %v4817, %v5393
    %v5396 = vadd.f32 %v4818, %v5394
    %v5397 = vmul.f32 %v5395, %v5395
    %v5398 = vmul.f32 %v5396, %v5396
    %v5399 = vsel %vm61, %v5397, 0.0
    %5400 = vadd.xlane.f32.xlu0 %v5399
    %v5401 = vpop.xlane.xlu0 %5400
    %v5402 = vsel %vm61, %v5398, 0.0
    %5403 = vadd.xlane.f32.xlu0 %v5402
    %v5404 = vpop.xlane.xlu0 %5403
    %v5405 = vmax.f32 %v5401, 1e-24
    %v5406 = vmax.f32 %v5404, 1e-24
    %v5407 = vrsqrt.pop %v5405
    %v5408 = vrsqrt.pop %v5406
    %v5409 = vmul.f32 %v5395, %v5407
    %v5410 = vmul.f32 %v5396, %v5408
    %v5411 = vsel %vm61, %v5409, %v77
    %v5412 = vsel %vm61, %v5410, %v79
    %v5414 = vsel %vm84, %v5411, 0
    %v5417 = vsel %vm84, %v5412, 0
    %5419 = vmatprep.subr.mxu0 0.0
    %v5420 = vand.u32 %v43, 4294901760
    %5421 = vmatpush1.msra.mxu0 %v5420
    %5422 = vmatprep.subr.mxu0 0.0
    %v5423 = vand.u32 %v44, 4294901760
    %5424 = vmatpush1.msra.mxu0 %v5423
    %5425 = vmatprep.subr.mxu0 0.0
    %v5426 = vand.u32 %v45, 4294901760
    %5427 = vmatpush1.msra.mxu0 %v5426
    %5428 = vmatprep.subr.mxu0 0.0
    %v5429 = vand.u32 %v46, 4294901760
    %5430 = vmatpush1.msra.mxu0 %v5429
    %5431 = vmatprep.subr.mxu0 0.0
    %v5432 = vand.u32 %v5409, 4294901760
    %5433 = vmatpush1.msra.mxu0 %v5432
    %5434 = vmatprep.subr.mxu0 0.0
    %v5435 = vand.u32 %v5410, 4294901760
    %5436 = vmatpush1.msra.mxu0 %v5435
    %5437 = vmatprep.subr.mxu0 0.0
    %5438 = vmatpush1.msra.mxu0 0.0
    %5439 = vmatprep.subr.mxu0 0.0
    %5440 = vmatpush1.msra.mxu0 0.0
    %5441 = vmatprep.subr.mxu0 0.0
    %5442 = vmatpush1.msra.mxu0 0.0
    %5443 = vmatprep.subr.mxu0 0.0
    %5444 = vmatpush1.msra.mxu0 0.0
    %5445 = vmatprep.subr.mxu0 0.0
    %5446 = vmatpush1.msra.mxu0 0.0
    %5447 = vmatprep.subr.mxu0 0.0
    %5448 = vmatpush1.msra.mxu0 0.0
    %5449 = vmatprep.subr.mxu0 0.0
    %5450 = vmatpush1.msra.mxu0 0.0
    %5451 = vmatprep.subr.mxu0 0.0
    %5452 = vmatpush1.msra.mxu0 0.0
    %5453 = vmatprep.subr.mxu0 0.0
    %5454 = vmatpush1.msra.mxu0 0.0
    %5455 = vmatprep.subr.mxu0 0.0
    %5456 = vmatpush1.msra.mxu0 0.0
    %5457 = vmatprep.subr.mxu0 0.0
    %5458 = vmatpush1.msra.mxu0 0.0
    %5459 = vmatprep.subr.mxu0 0.0
    %5460 = vmatpush1.msra.mxu0 0.0
    %5461 = vmatprep.subr.mxu0 0.0
    %5462 = vmatpush1.msra.mxu0 0.0
    %5463 = vmatprep.subr.mxu0 0.0
    %5464 = vmatpush1.msra.mxu0 0.0
    %5465 = vmatprep.subr.mxu0 0.0
    %5466 = vmatpush1.msra.mxu0 0.0
    %5467 = vmatprep.subr.mxu0 0.0
    %5468 = vmatpush1.msra.mxu0 0.0
    %5469 = vmatprep.subr.mxu0 0.0
    %5470 = vmatpush1.msra.mxu0 0.0
    %5471 = vmatprep.subr.mxu0 0.0
    %5472 = vmatpush1.msra.mxu0 0.0
    %5473 = vmatprep.subr.mxu0 0.0
    %5474 = vmatpush1.msra.mxu0 0.0
    %5475 = vmatprep.subr.mxu0 0.0
    %5476 = vmatpush1.msra.mxu0 0.0
    %5477 = vmatprep.subr.mxu0 0.0
    %5478 = vmatpush1.msra.mxu0 0.0
    %5479 = vmatprep.subr.mxu0 0.0
    %5480 = vmatpush1.msra.mxu0 0.0
    %5481 = vmatprep.subr.mxu0 0.0
    %5482 = vmatpush1.msra.mxu0 0.0
    %5483 = vmatprep.subr.mxu0 0.0
    %5484 = vmatpush1.msra.mxu0 0.0
    %5485 = vmatprep.subr.mxu0 0.0
    %5486 = vmatpush1.msra.mxu0 0.0
    %5487 = vmatprep.subr.mxu0 0.0
    %5488 = vmatpush1.msra.mxu0 0.0
    %5489 = vmatprep.mubr.f32.mxu0 0.0
    %v5490 = vand.u32 %v5414, 4294901760
    %v5491 = vsub.f32 %v5414, %v5490
    %v5492 = vand.u32 %v5491, 4294901760
    %v5493 = vsub.f32 %v5491, %v5492
    %v5494 = vand.u32 %v5493, 4294901760
    %5495 = vmatmul.mubr.f32.gmra.mrb[0].mxu0 %v5494
    %v5496 = vpop.f32.mrb[0].mxu0
    %v5497 = vadd.f32 %v47, %v5496
    %v5498 = vpop.f32.mrb[0].mxu0
    %5499 = vmatprep.mubr.f32.mxu0 0.0
    %v5500 = vand.u32 %v5417, 4294901760
    %v5501 = vsub.f32 %v5417, %v5500
    %v5502 = vand.u32 %v5501, 4294901760
    %v5503 = vsub.f32 %v5501, %v5502
    %v5504 = vand.u32 %v5503, 4294901760
    %5505 = vmatmul.mubr.f32.gmra.mrb[0].mxu0 %v5504
    %v5506 = vpop.f32.mrb[0].mxu0
    %v5507 = vadd.f32 %v47, %v5506
    %v5508 = vpop.f32.mrb[0].mxu0
    %5509 = vdwg.mxu0
    %5510 = vmatprep.subr.mxu0 0.0
    %v5511 = vand.u32 %v43, 4294901760
    %v5512 = vsub.f32 %v43, %v5511
    %v5513 = vand.u32 %v5512, 4294901760
    %v5514 = vsub.f32 %v5512, %v5513
    %v5515 = vand.u32 %v5514, 4294901760
    %5516 = vmatpush1.msra.mxu0 %v5515
    %5517 = vmatprep.subr.mxu0 0.0
    %v5518 = vand.u32 %v44, 4294901760
    %v5519 = vsub.f32 %v44, %v5518
    %v5520 = vand.u32 %v5519, 4294901760
    %v5521 = vsub.f32 %v5519, %v5520
    %v5522 = vand.u32 %v5521, 4294901760
    %5523 = vmatpush1.msra.mxu0 %v5522
    %5524 = vmatprep.subr.mxu0 0.0
    %v5525 = vand.u32 %v45, 4294901760
    %v5526 = vsub.f32 %v45, %v5525
    %v5527 = vand.u32 %v5526, 4294901760
    %v5528 = vsub.f32 %v5526, %v5527
    %v5529 = vand.u32 %v5528, 4294901760
    %5530 = vmatpush1.msra.mxu0 %v5529
    %5531 = vmatprep.subr.mxu0 0.0
    %v5532 = vand.u32 %v46, 4294901760
    %v5533 = vsub.f32 %v46, %v5532
    %v5534 = vand.u32 %v5533, 4294901760
    %v5535 = vsub.f32 %v5533, %v5534
    %v5536 = vand.u32 %v5535, 4294901760
    %5537 = vmatpush1.msra.mxu0 %v5536
    %5538 = vmatprep.subr.mxu0 0.0
    %v5539 = vand.u32 %v5409, 4294901760
    %v5540 = vsub.f32 %v5409, %v5539
    %v5541 = vand.u32 %v5540, 4294901760
    %v5542 = vsub.f32 %v5540, %v5541
    %v5543 = vand.u32 %v5542, 4294901760
    %5544 = vmatpush1.msra.mxu0 %v5543
    %5545 = vmatprep.subr.mxu0 0.0
    %v5546 = vand.u32 %v5410, 4294901760
    %v5547 = vsub.f32 %v5410, %v5546
    %v5548 = vand.u32 %v5547, 4294901760
    %v5549 = vsub.f32 %v5547, %v5548
    %v5550 = vand.u32 %v5549, 4294901760
    %5551 = vmatpush1.msra.mxu0 %v5550
    %5552 = vmatprep.subr.mxu0 0.0
    %5553 = vmatpush1.msra.mxu0 0.0
    %5554 = vmatprep.subr.mxu0 0.0
    %5555 = vmatpush1.msra.mxu0 0.0
    %5556 = vmatprep.subr.mxu0 0.0
    %5557 = vmatpush1.msra.mxu0 0.0
    %5558 = vmatprep.subr.mxu0 0.0
    %5559 = vmatpush1.msra.mxu0 0.0
    %5560 = vmatprep.subr.mxu0 0.0
    %5561 = vmatpush1.msra.mxu0 0.0
    %5562 = vmatprep.subr.mxu0 0.0
    %5563 = vmatpush1.msra.mxu0 0.0
    %5564 = vmatprep.subr.mxu0 0.0
    %5565 = vmatpush1.msra.mxu0 0.0
    %5566 = vmatprep.subr.mxu0 0.0
    %5567 = vmatpush1.msra.mxu0 0.0
    %5568 = vmatprep.subr.mxu0 0.0
    %5569 = vmatpush1.msra.mxu0 0.0
    %5570 = vmatprep.subr.mxu0 0.0
    %5571 = vmatpush1.msra.mxu0 0.0
    %5572 = vmatprep.subr.mxu0 0.0
    %5573 = vmatpush1.msra.mxu0 0.0
    %5574 = vmatprep.subr.mxu0 0.0
    %5575 = vmatpush1.msra.mxu0 0.0
    %5576 = vmatprep.subr.mxu0 0.0
    %5577 = vmatpush1.msra.mxu0 0.0
    %5578 = vmatprep.subr.mxu0 0.0
    %5579 = vmatpush1.msra.mxu0 0.0
    %5580 = vmatprep.subr.mxu0 0.0
    %5581 = vmatpush1.msra.mxu0 0.0
    %5582 = vmatprep.subr.mxu0 0.0
    %5583 = vmatpush1.msra.mxu0 0.0
    %5584 = vmatprep.subr.mxu0 0.0
    %5585 = vmatpush1.msra.mxu0 0.0
    %5586 = vmatprep.subr.mxu0 0.0
    %5587 = vmatpush1.msra.mxu0 0.0
    %5588 = vmatprep.subr.mxu0 0.0
    %5589 = vmatpush1.msra.mxu0 0.0
    %5590 = vmatprep.subr.mxu0 0.0
    %5591 = vmatpush1.msra.mxu0 0.0
    %5592 = vmatprep.subr.mxu0 0.0
    %5593 = vmatpush1.msra.mxu0 0.0
    %5594 = vmatprep.subr.mxu0 0.0
    %5595 = vmatpush1.msra.mxu0 0.0
    %5596 = vmatprep.subr.mxu0 0.0
    %5597 = vmatpush1.msra.mxu0 0.0
    %5598 = vmatprep.subr.mxu0 0.0
    %5599 = vmatpush1.msra.mxu0 0.0
    %5600 = vmatprep.subr.mxu0 0.0
    %5601 = vmatpush1.msra.mxu0 0.0
    %5602 = vmatprep.subr.mxu0 0.0
    %5603 = vmatpush1.msra.mxu0 0.0
    %5604 = vmatprep.mubr.f32.mxu0 0.0
    %v5605 = vand.u32 %v5414, 4294901760
    %5606 = vmatmul.mubr.f32.gmra.mrb[0].mxu0 %v5605
    %v5607 = vpop.f32.mrb[0].mxu0
    %v5608 = vadd.f32 %v5497, %v5607
    %v5609 = vpop.f32.mrb[0].mxu0
    %5610 = vmatprep.mubr.f32.mxu0 0.0
    %v5611 = vand.u32 %v5417, 4294901760
    %5612 = vmatmul.mubr.f32.gmra.mrb[0].mxu0 %v5611
    %v5613 = vpop.f32.mrb[0].mxu0
    %v5614 = vadd.f32 %v5507, %v5613
    %v5615 = vpop.f32.mrb[0].mxu0
    %5616 = vdwg.mxu0
    %5617 = vmatprep.subr.mxu0 0.0
    %v5618 = vand.u32 %v43, 4294901760
    %v5619 = vsub.f32 %v43, %v5618
    %5620 = vmatpush1.msra.mxu0 %v5619
    %5621 = vmatprep.subr.mxu0 0.0
    %v5622 = vand.u32 %v44, 4294901760
    %v5623 = vsub.f32 %v44, %v5622
    %5624 = vmatpush1.msra.mxu0 %v5623
    %5625 = vmatprep.subr.mxu0 0.0
    %v5626 = vand.u32 %v45, 4294901760
    %v5627 = vsub.f32 %v45, %v5626
    %5628 = vmatpush1.msra.mxu0 %v5627
    %5629 = vmatprep.subr.mxu0 0.0
    %v5630 = vand.u32 %v46, 4294901760
    %v5631 = vsub.f32 %v46, %v5630
    %5632 = vmatpush1.msra.mxu0 %v5631
    %5633 = vmatprep.subr.mxu0 0.0
    %v5634 = vand.u32 %v5409, 4294901760
    %v5635 = vsub.f32 %v5409, %v5634
    %5636 = vmatpush1.msra.mxu0 %v5635
    %5637 = vmatprep.subr.mxu0 0.0
    %v5638 = vand.u32 %v5410, 4294901760
    %v5639 = vsub.f32 %v5410, %v5638
    %5640 = vmatpush1.msra.mxu0 %v5639
    %5641 = vmatprep.subr.mxu0 0.0
    %5642 = vmatpush1.msra.mxu0 0.0
    %5643 = vmatprep.subr.mxu0 0.0
    %5644 = vmatpush1.msra.mxu0 0.0
    %5645 = vmatprep.subr.mxu0 0.0
    %5646 = vmatpush1.msra.mxu0 0.0
    %5647 = vmatprep.subr.mxu0 0.0
    %5648 = vmatpush1.msra.mxu0 0.0
    %5649 = vmatprep.subr.mxu0 0.0
    %5650 = vmatpush1.msra.mxu0 0.0
    %5651 = vmatprep.subr.mxu0 0.0
    %5652 = vmatpush1.msra.mxu0 0.0
    %5653 = vmatprep.subr.mxu0 0.0
    %5654 = vmatpush1.msra.mxu0 0.0
    %5655 = vmatprep.subr.mxu0 0.0
    %5656 = vmatpush1.msra.mxu0 0.0
    %5657 = vmatprep.subr.mxu0 0.0
    %5658 = vmatpush1.msra.mxu0 0.0
    %5659 = vmatprep.subr.mxu0 0.0
    %5660 = vmatpush1.msra.mxu0 0.0
    %5661 = vmatprep.subr.mxu0 0.0
    %5662 = vmatpush1.msra.mxu0 0.0
    %5663 = vmatprep.subr.mxu0 0.0
    %5664 = vmatpush1.msra.mxu0 0.0
    %5665 = vmatprep.subr.mxu0 0.0
    %5666 = vmatpush1.msra.mxu0 0.0
    %5667 = vmatprep.subr.mxu0 0.0
    %5668 = vmatpush1.msra.mxu0 0.0
    %5669 = vmatprep.subr.mxu0 0.0
    %5670 = vmatpush1.msra.mxu0 0.0
    %5671 = vmatprep.subr.mxu0 0.0
    %5672 = vmatpush1.msra.mxu0 0.0
    %5673 = vmatprep.subr.mxu0 0.0
    %5674 = vmatpush1.msra.mxu0 0.0
    %5675 = vmatprep.subr.mxu0 0.0
    %5676 = vmatpush1.msra.mxu0 0.0
    %5677 = vmatprep.subr.mxu0 0.0
    %5678 = vmatpush1.msra.mxu0 0.0
    %5679 = vmatprep.subr.mxu0 0.0
    %5680 = vmatpush1.msra.mxu0 0.0
    %5681 = vmatprep.subr.mxu0 0.0
    %5682 = vmatpush1.msra.mxu0 0.0
    %5683 = vmatprep.subr.mxu0 0.0
    %5684 = vmatpush1.msra.mxu0 0.0
    %5685 = vmatprep.subr.mxu0 0.0
    %5686 = vmatpush1.msra.mxu0 0.0
    %5687 = vmatprep.subr.mxu0 0.0
    %5688 = vmatpush1.msra.mxu0 0.0
    %5689 = vmatprep.subr.mxu0 0.0
    %5690 = vmatpush1.msra.mxu0 0.0
    %5691 = vmatprep.subr.mxu0 0.0
    %5692 = vmatpush1.msra.mxu0 0.0
    %5693 = vmatprep.mubr.f32.mxu0 0.0
    %v5694 = vand.u32 %v5414, 4294901760
    %v5695 = vsub.f32 %v5414, %v5694
    %5696 = vmatmul.mubr.f32.gmra.mrb[0].mxu0 %v5695
    %v5697 = vpop.f32.mrb[0].mxu0
    %v5698 = vadd.f32 %v5608, %v5697
    %v5699 = vpop.f32.mrb[0].mxu0
    %5700 = vmatprep.mubr.f32.mxu0 0.0
    %v5701 = vand.u32 %v5417, 4294901760
    %v5702 = vsub.f32 %v5417, %v5701
    %5703 = vmatmul.mubr.f32.gmra.mrb[0].mxu0 %v5702
    %v5704 = vpop.f32.mrb[0].mxu0
    %v5705 = vadd.f32 %v5614, %v5704
    %v5706 = vpop.f32.mrb[0].mxu0
    %5707 = vdwg.mxu0
    %5708 = vmatprep.subr.mxu0 0.0
    %v5709 = vand.u32 %v43, 4294901760
    %5710 = vmatpush1.msra.mxu0 %v5709
    %5711 = vmatprep.subr.mxu0 0.0
    %v5712 = vand.u32 %v44, 4294901760
    %5713 = vmatpush1.msra.mxu0 %v5712
    %5714 = vmatprep.subr.mxu0 0.0
    %v5715 = vand.u32 %v45, 4294901760
    %5716 = vmatpush1.msra.mxu0 %v5715
    %5717 = vmatprep.subr.mxu0 0.0
    %v5718 = vand.u32 %v46, 4294901760
    %5719 = vmatpush1.msra.mxu0 %v5718
    %5720 = vmatprep.subr.mxu0 0.0
    %v5721 = vand.u32 %v5409, 4294901760
    %5722 = vmatpush1.msra.mxu0 %v5721
    %5723 = vmatprep.subr.mxu0 0.0
    %v5724 = vand.u32 %v5410, 4294901760
    %5725 = vmatpush1.msra.mxu0 %v5724
    %5726 = vmatprep.subr.mxu0 0.0
    %5727 = vmatpush1.msra.mxu0 0.0
    %5728 = vmatprep.subr.mxu0 0.0
    %5729 = vmatpush1.msra.mxu0 0.0
    %5730 = vmatprep.subr.mxu0 0.0
    %5731 = vmatpush1.msra.mxu0 0.0
    %5732 = vmatprep.subr.mxu0 0.0
    %5733 = vmatpush1.msra.mxu0 0.0
    %5734 = vmatprep.subr.mxu0 0.0
    %5735 = vmatpush1.msra.mxu0 0.0
    %5736 = vmatprep.subr.mxu0 0.0
    %5737 = vmatpush1.msra.mxu0 0.0
    %5738 = vmatprep.subr.mxu0 0.0
    %5739 = vmatpush1.msra.mxu0 0.0
    %5740 = vmatprep.subr.mxu0 0.0
    %5741 = vmatpush1.msra.mxu0 0.0
    %5742 = vmatprep.subr.mxu0 0.0
    %5743 = vmatpush1.msra.mxu0 0.0
    %5744 = vmatprep.subr.mxu0 0.0
    %5745 = vmatpush1.msra.mxu0 0.0
    %5746 = vmatprep.subr.mxu0 0.0
    %5747 = vmatpush1.msra.mxu0 0.0
    %5748 = vmatprep.subr.mxu0 0.0
    %5749 = vmatpush1.msra.mxu0 0.0
    %5750 = vmatprep.subr.mxu0 0.0
    %5751 = vmatpush1.msra.mxu0 0.0
    %5752 = vmatprep.subr.mxu0 0.0
    %5753 = vmatpush1.msra.mxu0 0.0
    %5754 = vmatprep.subr.mxu0 0.0
    %5755 = vmatpush1.msra.mxu0 0.0
    %5756 = vmatprep.subr.mxu0 0.0
    %5757 = vmatpush1.msra.mxu0 0.0
    %5758 = vmatprep.subr.mxu0 0.0
    %5759 = vmatpush1.msra.mxu0 0.0
    %5760 = vmatprep.subr.mxu0 0.0
    %5761 = vmatpush1.msra.mxu0 0.0
    %5762 = vmatprep.subr.mxu0 0.0
    %5763 = vmatpush1.msra.mxu0 0.0
    %5764 = vmatprep.subr.mxu0 0.0
    %5765 = vmatpush1.msra.mxu0 0.0
    %5766 = vmatprep.subr.mxu0 0.0
    %5767 = vmatpush1.msra.mxu0 0.0
    %5768 = vmatprep.subr.mxu0 0.0
    %5769 = vmatpush1.msra.mxu0 0.0
    %5770 = vmatprep.subr.mxu0 0.0
    %5771 = vmatpush1.msra.mxu0 0.0
    %5772 = vmatprep.subr.mxu0 0.0
    %5773 = vmatpush1.msra.mxu0 0.0
    %5774 = vmatprep.subr.mxu0 0.0
    %5775 = vmatpush1.msra.mxu0 0.0
    %5776 = vmatprep.subr.mxu0 0.0
    %5777 = vmatpush1.msra.mxu0 0.0
    %5778 = vmatprep.mubr.f32.mxu0 0.0
    %v5779 = vand.u32 %v5414, 4294901760
    %v5780 = vsub.f32 %v5414, %v5779
    %v5781 = vand.u32 %v5780, 4294901760
    %5782 = vmatmul.mubr.f32.gmra.mrb[0].mxu0 %v5781
    %v5783 = vpop.f32.mrb[0].mxu0
    %v5784 = vadd.f32 %v5698, %v5783
    %v5785 = vpop.f32.mrb[0].mxu0
    %5786 = vmatprep.mubr.f32.mxu0 0.0
    %v5787 = vand.u32 %v5417, 4294901760
    %v5788 = vsub.f32 %v5417, %v5787
    %v5789 = vand.u32 %v5788, 4294901760
    %5790 = vmatmul.mubr.f32.gmra.mrb[0].mxu0 %v5789
    %v5791 = vpop.f32.mrb[0].mxu0
    %v5792 = vadd.f32 %v5705, %v5791
    %v5793 = vpop.f32.mrb[0].mxu0
    %5794 = vdwg.mxu0
    %5795 = vmatprep.subr.mxu0 0.0
    %v5796 = vand.u32 %v43, 4294901760
    %v5797 = vsub.f32 %v43, %v5796
    %v5798 = vand.u32 %v5797, 4294901760
    %5799 = vmatpush1.msra.mxu0 %v5798
    %5800 = vmatprep.subr.mxu0 0.0
    %v5801 = vand.u32 %v44, 4294901760
    %v5802 = vsub.f32 %v44, %v5801
    %v5803 = vand.u32 %v5802, 4294901760
    %5804 = vmatpush1.msra.mxu0 %v5803
    %5805 = vmatprep.subr.mxu0 0.0
    %v5806 = vand.u32 %v45, 4294901760
    %v5807 = vsub.f32 %v45, %v5806
    %v5808 = vand.u32 %v5807, 4294901760
    %5809 = vmatpush1.msra.mxu0 %v5808
    %5810 = vmatprep.subr.mxu0 0.0
    %v5811 = vand.u32 %v46, 4294901760
    %v5812 = vsub.f32 %v46, %v5811
    %v5813 = vand.u32 %v5812, 4294901760
    %5814 = vmatpush1.msra.mxu0 %v5813
    %5815 = vmatprep.subr.mxu0 0.0
    %v5816 = vand.u32 %v5409, 4294901760
    %v5817 = vsub.f32 %v5409, %v5816
    %v5818 = vand.u32 %v5817, 4294901760
    %5819 = vmatpush1.msra.mxu0 %v5818
    %5820 = vmatprep.subr.mxu0 0.0
    %v5821 = vand.u32 %v5410, 4294901760
    %v5822 = vsub.f32 %v5410, %v5821
    %v5823 = vand.u32 %v5822, 4294901760
    %5824 = vmatpush1.msra.mxu0 %v5823
    %5825 = vmatprep.subr.mxu0 0.0
    %5826 = vmatpush1.msra.mxu0 0.0
    %5827 = vmatprep.subr.mxu0 0.0
    %5828 = vmatpush1.msra.mxu0 0.0
    %5829 = vmatprep.subr.mxu0 0.0
    %5830 = vmatpush1.msra.mxu0 0.0
    %5831 = vmatprep.subr.mxu0 0.0
    %5832 = vmatpush1.msra.mxu0 0.0
    %5833 = vmatprep.subr.mxu0 0.0
    %5834 = vmatpush1.msra.mxu0 0.0
    %5835 = vmatprep.subr.mxu0 0.0
    %5836 = vmatpush1.msra.mxu0 0.0
    %5837 = vmatprep.subr.mxu0 0.0
    %5838 = vmatpush1.msra.mxu0 0.0
    %5839 = vmatprep.subr.mxu0 0.0
    %5840 = vmatpush1.msra.mxu0 0.0
    %5841 = vmatprep.subr.mxu0 0.0
    %5842 = vmatpush1.msra.mxu0 0.0
    %5843 = vmatprep.subr.mxu0 0.0
    %5844 = vmatpush1.msra.mxu0 0.0
    %5845 = vmatprep.subr.mxu0 0.0
    %5846 = vmatpush1.msra.mxu0 0.0
    %5847 = vmatprep.subr.mxu0 0.0
    %5848 = vmatpush1.msra.mxu0 0.0
    %5849 = vmatprep.subr.mxu0 0.0
    %5850 = vmatpush1.msra.mxu0 0.0
    %5851 = vmatprep.subr.mxu0 0.0
    %5852 = vmatpush1.msra.mxu0 0.0
    %5853 = vmatprep.subr.mxu0 0.0
    %5854 = vmatpush1.msra.mxu0 0.0
    %5855 = vmatprep.subr.mxu0 0.0
    %5856 = vmatpush1.msra.mxu0 0.0
    %5857 = vmatprep.subr.mxu0 0.0
    %5858 = vmatpush1.msra.mxu0 0.0
    %5859 = vmatprep.subr.mxu0 0.0
    %5860 = vmatpush1.msra.mxu0 0.0
    %5861 = vmatprep.subr.mxu0 0.0
    %5862 = vmatpush1.msra.mxu0 0.0
    %5863 = vmatprep.subr.mxu0 0.0
    %5864 = vmatpush1.msra.mxu0 0.0
    %5865 = vmatprep.subr.mxu0 0.0
    %5866 = vmatpush1.msra.mxu0 0.0
    %5867 = vmatprep.subr.mxu0 0.0
    %5868 = vmatpush1.msra.mxu0 0.0
    %5869 = vmatprep.subr.mxu0 0.0
    %5870 = vmatpush1.msra.mxu0 0.0
    %5871 = vmatprep.subr.mxu0 0.0
    %5872 = vmatpush1.msra.mxu0 0.0
    %5873 = vmatprep.subr.mxu0 0.0
    %5874 = vmatpush1.msra.mxu0 0.0
    %5875 = vmatprep.subr.mxu0 0.0
    %5876 = vmatpush1.msra.mxu0 0.0
    %5877 = vmatprep.mubr.f32.mxu0 0.0
    %v5878 = vand.u32 %v5414, 4294901760
    %5879 = vmatmul.mubr.f32.gmra.mrb[0].mxu0 %v5878
    %v5880 = vpop.f32.mrb[0].mxu0
    %v5881 = vadd.f32 %v5784, %v5880
    %v5882 = vpop.f32.mrb[0].mxu0
    %5883 = vmatprep.mubr.f32.mxu0 0.0
    %v5884 = vand.u32 %v5417, 4294901760
    %5885 = vmatmul.mubr.f32.gmra.mrb[0].mxu0 %v5884
    %v5886 = vpop.f32.mrb[0].mxu0
    %v5887 = vadd.f32 %v5792, %v5886
    %v5888 = vpop.f32.mrb[0].mxu0
    %5889 = vdwg.mxu0
    %5890 = vmatprep.subr.mxu0 0.0
    %v5891 = vand.u32 %v43, 4294901760
    %5892 = vmatpush1.msra.mxu0 %v5891
    %5893 = vmatprep.subr.mxu0 0.0
    %v5894 = vand.u32 %v44, 4294901760
    %5895 = vmatpush1.msra.mxu0 %v5894
    %5896 = vmatprep.subr.mxu0 0.0
    %v5897 = vand.u32 %v45, 4294901760
    %5898 = vmatpush1.msra.mxu0 %v5897
    %5899 = vmatprep.subr.mxu0 0.0
    %v5900 = vand.u32 %v46, 4294901760
    %5901 = vmatpush1.msra.mxu0 %v5900
    %5902 = vmatprep.subr.mxu0 0.0
    %v5903 = vand.u32 %v5409, 4294901760
    %5904 = vmatpush1.msra.mxu0 %v5903
    %5905 = vmatprep.subr.mxu0 0.0
    %v5906 = vand.u32 %v5410, 4294901760
    %5907 = vmatpush1.msra.mxu0 %v5906
    %5908 = vmatprep.subr.mxu0 0.0
    %5909 = vmatpush1.msra.mxu0 0.0
    %5910 = vmatprep.subr.mxu0 0.0
    %5911 = vmatpush1.msra.mxu0 0.0
    %5912 = vmatprep.subr.mxu0 0.0
    %5913 = vmatpush1.msra.mxu0 0.0
    %5914 = vmatprep.subr.mxu0 0.0
    %5915 = vmatpush1.msra.mxu0 0.0
    %5916 = vmatprep.subr.mxu0 0.0
    %5917 = vmatpush1.msra.mxu0 0.0
    %5918 = vmatprep.subr.mxu0 0.0
    %5919 = vmatpush1.msra.mxu0 0.0
    %5920 = vmatprep.subr.mxu0 0.0
    %5921 = vmatpush1.msra.mxu0 0.0
    %5922 = vmatprep.subr.mxu0 0.0
    %5923 = vmatpush1.msra.mxu0 0.0
    %5924 = vmatprep.subr.mxu0 0.0
    %5925 = vmatpush1.msra.mxu0 0.0
    %5926 = vmatprep.subr.mxu0 0.0
    %5927 = vmatpush1.msra.mxu0 0.0
    %5928 = vmatprep.subr.mxu0 0.0
    %5929 = vmatpush1.msra.mxu0 0.0
    %5930 = vmatprep.subr.mxu0 0.0
    %5931 = vmatpush1.msra.mxu0 0.0
    %5932 = vmatprep.subr.mxu0 0.0
    %5933 = vmatpush1.msra.mxu0 0.0
    %5934 = vmatprep.subr.mxu0 0.0
    %5935 = vmatpush1.msra.mxu0 0.0
    %5936 = vmatprep.subr.mxu0 0.0
    %5937 = vmatpush1.msra.mxu0 0.0
    %5938 = vmatprep.subr.mxu0 0.0
    %5939 = vmatpush1.msra.mxu0 0.0
    %5940 = vmatprep.subr.mxu0 0.0
    %5941 = vmatpush1.msra.mxu0 0.0
    %5942 = vmatprep.subr.mxu0 0.0
    %5943 = vmatpush1.msra.mxu0 0.0
    %5944 = vmatprep.subr.mxu0 0.0
    %5945 = vmatpush1.msra.mxu0 0.0
    %5946 = vmatprep.subr.mxu0 0.0
    %5947 = vmatpush1.msra.mxu0 0.0
    %5948 = vmatprep.subr.mxu0 0.0
    %5949 = vmatpush1.msra.mxu0 0.0
    %5950 = vmatprep.subr.mxu0 0.0
    %5951 = vmatpush1.msra.mxu0 0.0
    %5952 = vmatprep.subr.mxu0 0.0
    %5953 = vmatpush1.msra.mxu0 0.0
    %5954 = vmatprep.subr.mxu0 0.0
    %5955 = vmatpush1.msra.mxu0 0.0
    %5956 = vmatprep.subr.mxu0 0.0
    %5957 = vmatpush1.msra.mxu0 0.0
    %5958 = vmatprep.subr.mxu0 0.0
    %5959 = vmatpush1.msra.mxu0 0.0
    %5960 = vmatprep.mubr.f32.mxu0 0.0
    %v5961 = vand.u32 %v5414, 4294901760
    %5962 = vmatmul.mubr.f32.gmra.mrb[0].mxu0 %v5961
    %v5963 = vpop.f32.mrb[0].mxu0
    %v5964 = vadd.f32 %v5881, %v5963
    %v5965 = vpop.f32.mrb[0].mxu0
    %5966 = vmatprep.mubr.f32.mxu0 0.0
    %v5967 = vand.u32 %v5417, 4294901760
    %5968 = vmatmul.mubr.f32.gmra.mrb[0].mxu0 %v5967
    %v5969 = vpop.f32.mrb[0].mxu0
    %v5970 = vadd.f32 %v5887, %v5969
    %v5971 = vpop.f32.mrb[0].mxu0
    %5972 = vdwg.mxu0
    %v5973 = vmul.f32 %v5409, %v5964
    %v5974 = vmul.f32 %v5410, %v5970
    %v5975 = vsel %vm61, %v5973, 0.0
    %5976 = vadd.xlane.f32.xlu0 %v5975
    %v5977 = vpop.xlane.xlu0 %5976
    %v5978 = vsel %vm61, %v5974, 0.0
    %5979 = vadd.xlane.f32.xlu0 %v5978
    %v5980 = vpop.xlane.xlu0 %5979
    %v5981 = vmul.f32 %v5977, %v5409
    %v5982 = vmul.f32 %v5980, %v5410
    %v5983 = vsub.f32 %v5964, %v5981
    %v5984 = vsub.f32 %v5970, %v5982
    %v5985 = vmul.f32 %v58, %v5983
    %v5986 = vmul.f32 %v58, %v5984
    %v5987 = vadd.f32 %v5409, %v5985
    %v5988 = vadd.f32 %v5410, %v5986
    %v5989 = vmul.f32 %v5987, %v5987
    %v5990 = vmul.f32 %v5988, %v5988
    %v5991 = vsel %vm61, %v5989, 0.0
    %5992 = vadd.xlane.f32.xlu0 %v5991
    %v5993 = vpop.xlane.xlu0 %5992
    %v5994 = vsel %vm61, %v5990, 0.0
    %5995 = vadd.xlane.f32.xlu0 %v5994
    %v5996 = vpop.xlane.xlu0 %5995
    %v5997 = vmax.f32 %v5993, 1e-24
    %v5998 = vmax.f32 %v5996, 1e-24
    %v5999 = vrsqrt.pop %v5997
    %v6000 = vrsqrt.pop %v5998
    %v6001 = vmul.f32 %v5987, %v5999
    %v6002 = vmul.f32 %v5988, %v6000
    %6003 = vst.msk [vmem:[#allocation6] sm:$0xff] %vm61, %v6001
    %6004 = vst.msk [vmem:[#allocation6 + $0x8] sm:$0xff] %vm61, %v6002
    %v6006 = vlaneseq
    %v6007 = vshrl.u32 %v6006, 7
    %v6008 = vsub.s32 0, %v6007
    %v6009 = vrot.slane %v48, %v6008
    %v6011 = vmul.f32 %v6001, %v6009
    %v6012 = vmul.f32 %v6002, %v6009
    %v6013 = vsel %vm61, %v6011, 0.0
    %6014 = vadd.xlane.f32.xlu0 %v6013
    %v6015 = vpop.xlane.xlu0 %6014
    %v6016 = vsel %vm61, %v6012, 0.0
    %6017 = vadd.xlane.f32.xlu0 %v6016
    %v6018 = vpop.xlane.xlu0 %6017
    %vm6019 = vcmask 7168
    %v6020 = vsel %vm6019, %v6015, %v6018
    %vm6021 = vcmask 15360
    %v6022 = vsel %vm6021, %v6020, 0.0
    %v6023 = vrot.slane %v6022, 4
    %v6024 = vadd.f32 %v6022, %v6023
    %v6025 = vrot.slane %v6024, 2
    %v6026 = vadd.f32 %v6024, %v6025
    %v6027 = vrot.slane %v6026, 1
    %v6028 = vadd.f32 %v6026, %v6027
    %v6029 = vmul.f32 %v6028, 0.125
    %v6030 = vstv %s50
    %v6031 = vadd.f32 %v6029, %v6030
    %vm6032 = vcmask 8192
    %6033 = vst.msk [vmem:[#allocation5] sm:$0x1] %vm6032, %v6031
    // Predicated region
    $region30: #{akorn_forward.1} parent=1 // pred_check
      _
    $region31: #{akorn_forward.1} parent=1 // pred_check_branch
      %6035 = sbr.rel (0) target = $region33
    $region32: #{akorn_forward.1} parent=1 // pred_region
      %s6037 = ssub.s32 16, 16
      %6038 = vsyncadd [#allocation3], %s6037
      %s6040 = sshll.u32 [#allocation5], 4
      %s6041 = int_to_ptr.vmem [resolvable:$true] %s6040
      %6043 = dma.vmem_to_hbm [thread:$0]  %s6041, 16, %s6, [#allocation3]
    $region33: #{akorn_forward.1} parent=1 // pred_fallthru
      _
    // Predicated region
    $region34: #{akorn_forward.1} parent=1 // pred_check
      _
    $region35: #{akorn_forward.1} parent=1 // pred_check_branch
      %6045 = sbr.rel (0) target = $region37
    $region36: #{akorn_forward.1} parent=1 // pred_region
      %s6047 = ssub.s32 256, 256
      %6048 = vsyncadd [#allocation7], %s6047
      %s6049 = sshll.u32 [#allocation6], 4
      %s6050 = int_to_ptr.vmem [resolvable:$true] %s6049
      %6055 = dma.vmem_to_hbm [thread:$0]  %s6050, 256, %s7, [#allocation7], 128, 128, 8
    $region37: #{akorn_forward.1} parent=1 // pred_fallthru
      _
    // Predicated region
    $region38: #{akorn_forward.1} parent=1 // pred_check
      _
    $region39: #{akorn_forward.1} parent=1 // pred_check_branch
      %6057 = sbr.rel (0) target = $region41
    $region40: #{akorn_forward.1} parent=1 // pred_region
      %6058 = dma.done [#allocation3], 16
    $region41: #{akorn_forward.1} parent=1 // pred_fallthru
      _
    // Predicated region
    $region42: #{akorn_forward.1} parent=1 // pred_check
      _
    $region43: #{akorn_forward.1} parent=1 // pred_check_branch
      %6060 = sbr.rel (0) target = $region45
    $region44: #{akorn_forward.1} parent=1 // pred_region
      %6061 = dma.done [#allocation7], 256
    $region45: #{akorn_forward.1} parent=1 // pred_fallthru
      _
    %6062 = vsyncpa [#allocation3], 1
    %6063 = vsyncpa [#allocation7], 1
    %6064 = vsyncpa [#allocation4], 1

</llo_original>
